<compile_context>
chip_gen: v5e
topology: v5e:2x2
jax: 0.10.0
libtpu: 0.0.40
codegen_flags: <defaults>
</compile_context>

<pallas_src>
import functools

import jax
import jax.numpy as jnp
from jax.experimental import pallas as pl
from jax.experimental.pallas import tpu as pltpu

NEG_BIG = -1e30


def _sigmoid(x):
    return 1.0 / (1.0 + jnp.exp(-x))


def _round_up(x, m):
    return ((x + m - 1) // m) * m


def decoder_kernel(num_tiles,
                   # scalar prefetch
                   t_ref,
                   # inputs
                   x_ref, h_ref, c_ref, enc_ref, dec_ref, etsum_ref,
                   mask_ref, extvoc_ref,
                   wlstm_ref, blstm_ref, wbe_ref, wbd_ref,
                   wproj_ref, bproj_ref, wcopy_ref, bcopy_ref,
                   # outputs
                   py_ref, hn_ref, cn_ref, etsumo_ref, deco_ref,
                   # scratch
                   final_scr, part2_scr, pu_scr, m_scr, l_scr,
                   mtile_scr, scat_scr):
    f32 = jnp.float32
    j = pl.program_id(0)
    tile_v = wproj_ref.shape[1]
    Bp = py_ref.shape[0]
    S = mask_ref.shape[1]
    Tmax = dec_ref.shape[1]
    H2 = h_ref.shape[1]

    # ------------- prologue (j == 0): LSTM, attentions, copy gate ------------
    @pl.when(j == 0)
    def _prologue():
        t = t_ref[0]
        x = x_ref[...]
        h = h_ref[...]
        c = c_ref[...]

        # fused LSTMCell: one matmul over [x, h] (PyTorch gate order i, f, g, o)
        xin = jnp.concatenate([x, h], axis=1)
        gates = (jnp.dot(xin, wlstm_ref[...], preferred_element_type=f32)
                 + blstm_ref[...])
        i_g = _sigmoid(gates[:, 0 * H2:1 * H2])
        f_g = _sigmoid(gates[:, 1 * H2:2 * H2])
        g_g = jnp.tanh(gates[:, 2 * H2:3 * H2])
        o_g = _sigmoid(gates[:, 3 * H2:4 * H2])
        c_next = f_g * c + i_g * g_g
        h_next = o_g * jnp.tanh(c_next)
        hn_ref[...] = h_next
        cn_ref[...] = c_next

        # encoder attention (bilinear identity: project h_next, not enc)
        enc = enc_ref[...]
        q_e = jnp.dot(h_next, wbe_ref[...], preferred_element_type=f32)[:, None, :]
        et = jnp.einsum('bqh,bsh->bqs', q_e, enc,
                        preferred_element_type=f32)[:, 0, :]          # (B,S)
        et_exp = jnp.exp(et)
        is0 = t == 0
        etsum_in = etsum_ref[...]
        et_prime = et_exp / jnp.where(is0, 1.0, etsum_in)
        etsumo_ref[...] = jnp.where(is0, et_exp, etsum_in + et_exp)
        et_prime = et_prime * mask_ref[...]
        alpha_et = et_prime / jnp.sum(et_prime, axis=1, keepdims=True)
        c_et = jnp.einsum('bqs,bsh->bqh', alpha_et[:, None, :], enc,
                          preferred_element_type=f32)[:, 0, :]        # (B,H2)

        # decoder (intra) attention over history slots [0, t)
        dec_old = dec_ref[...]
        q_d = jnp.dot(h_next, wbd_ref[...], preferred_element_type=f32)[:, None, :]
        e_dt = jnp.einsum('bqh,bth->bqt', q_d, dec_old,
                          preferred_element_type=f32)[:, 0, :]        # (B,Tmax)
        pos = jax.lax.broadcasted_iota(jnp.int32, (Bp, Tmax), 1)
        valid = pos < t
        e_dt = jnp.where(valid, e_dt, NEG_BIG)
        m_d = jnp.max(e_dt, axis=1, keepdims=True)
        p_d = jnp.exp(e_dt - m_d) * valid.astype(f32)
        s_d = jnp.sum(p_d, axis=1, keepdims=True)
        alpha_dt = p_d / jnp.where(s_d > 0.0, s_d, 1.0)               # zeros at t==0
        c_dt = jnp.einsum('bqt,bth->bqh', alpha_dt[:, None, :], dec_old,
                          preferred_element_type=f32)[:, 0, :]        # (B,H2)

        # decoder-history append: copy buffer, then dynamic-slice store at slot t
        deco_ref[...] = dec_old
        deco_ref[:, pl.ds(t, 1), :] = h_next[:, None, :]

        # copy gate: single VPU dot-reduction over 3*H2 lanes
        final_f32 = jnp.concatenate([h_next, c_et, c_dt], axis=1)     # (B,3H2)
        copy_logit = (jnp.sum(final_f32 * wcopy_ref[...], axis=1, keepdims=True)
                      + bcopy_ref[...])
        p_u = _sigmoid(copy_logit)
        pu_scr[...] = p_u
        part2_scr[...] = alpha_et * p_u                               # (B,S)
        final_scr[...] = final_f32.astype(final_scr.dtype)            # bf16 once

        # init the online softmax accumulators over vocab tiles
        m_scr[...] = jnp.full_like(m_scr, NEG_BIG)
        l_scr[...] = jnp.zeros_like(l_scr)

    # ---- per-vocab-tile: fused projection matmul + tile-local softmax -------
    logits = (jnp.dot(final_scr[...], wproj_ref[...],
                      preferred_element_type=f32)
              + bproj_ref[...])                                       # (B,tile_v)
    m_tile = jnp.max(logits, axis=1, keepdims=True)
    p_tile = jnp.exp(logits - m_tile)

    m_old = m_scr[...]
    m_new = jnp.maximum(m_old, m_tile)
    l_scr[...] = (l_scr[...] * jnp.exp(m_old - m_new)
                  + jnp.sum(p_tile, axis=1, keepdims=True) * jnp.exp(m_tile - m_new))
    m_scr[...] = m_new
    mtile_scr[j] = m_tile

    # lane-dense store of the uncorrected tile straight into the resident output
    lo = pl.multiple_of(j * tile_v, tile_v)
    py_ref[:, pl.ds(lo, tile_v)] = p_tile

    # extended-vocab scatter contribution for this tile's column range
    # (register-resident acc; hides under the projection weight DMA).
    col = jax.lax.broadcasted_iota(jnp.int32, (Bp, tile_v), 1) + j * tile_v
    acc = jnp.zeros((Bp, tile_v), f32)
    for s in range(S):                                   # static unroll over S
        ids = extvoc_ref[:, s:s + 1]                     # (B,1) i32
        vals = part2_scr[:, s:s + 1]                     # (B,1) f32
        acc = acc + jnp.where(col == ids, vals, 0.0)
    scat_scr[j] = acc

    # ------------- epilogue: single correction pass over the slabs -----------
    @pl.when(j == num_tiles - 1)
    def _epilogue():
        m_fin = m_scr[...]
        scale = (1.0 - pu_scr[...]) / l_scr[...]          # exact reciprocal
        for jj in range(num_tiles):                       # static unroll
            corr = jnp.exp(mtile_scr[jj] - m_fin) * scale
            sl = slice(jj * tile_v, (jj + 1) * tile_v)
            py_ref[:, sl] = py_ref[:, sl] * corr + scat_scr[jj]


def build_decoder_step(params, *, batch, emb_dim, hidden2, vocab, seq_len, n_ext,
                       t_max, tile_v=512, mxu_dtype=jnp.bfloat16,
                       vmem_limit_bytes=None):
    """Returns a jitted step(t, h, c, enc, dec_buf, et_sum, mask, extvoc, inputs).

    Single compile for every timestep (t is a runtime scalar, decoder history is
    a fixed-size (B, t_max, H2) buffer).  All parameter transposes / padding /
    bf16 casts are done once here, outside the decode loop.
    """
    f32 = jnp.float32
    H2, V, S, E = hidden2, vocab, seq_len, emb_dim
    Vext = V + n_ext
    tile_v = max(128, _round_up(tile_v, 128))
    Vext_p = _round_up(max(Vext, 1), tile_v)             # tiles cover full ext vocab
    num_tiles = Vext_p // tile_v
    Bp = max(8, _round_up(batch, 8))
    Tmax = t_max

    # ---- one-time parameter preparation (hoisted out of the decode loop) ----
    wp = jnp.asarray(params["w_proj"], f32)              # (V, 3*H2)
    # fused projection weight slab (3*H2, Vext_p); padded columns get zero
    # weight and a huge negative bias so exp underflows to 0.
    w_proj_t = jnp.pad(wp.T, ((0, 0), (0, Vext_p - V))).astype(mxu_dtype)
    b_proj = jnp.pad(jnp.asarray(params["b_proj"], f32), (0, Vext_p - V),
                     constant_values=NEG_BIG).reshape(1, Vext_p)
    w_lstm = jnp.concatenate([jnp.asarray(params["w_ih"], f32).T,
                              jnp.asarray(params["w_hh"], f32).T], axis=0)
    b_lstm = (jnp.asarray(params["b_ih"], f32)
              + jnp.asarray(params["b_hh"], f32)).reshape(1, 4 * H2)
    prep = dict(
        w_lstm=w_lstm, b_lstm=b_lstm,
        wbe=jnp.asarray(params["w_benc"], f32),
        wbd=jnp.asarray(params["w_bdec"], f32),
        w_proj=w_proj_t, b_proj=b_proj,
        w_copy=jnp.asarray(params["w_copy"], f32).reshape(1, 3 * H2),
        b_copy=jnp.asarray(params["b_copy"], f32).reshape(1, 1),
    )

    def _full(shape):
        nd = len(shape)
        return pl.BlockSpec(shape, lambda j, t, _nd=nd: (0,) * _nd)

    wtile = pl.BlockSpec((3 * H2, tile_v), lambda j, t: (0, j))
    btile = pl.BlockSpec((1, tile_v), lambda j, t: (0, j))

    in_specs = [
        _full((Bp, E)), _full((Bp, H2)), _full((Bp, H2)),
        _full((Bp, S, H2)), _full((Bp, Tmax, H2)),
        _full((Bp, S)), _full((Bp, S)), _full((Bp, S)),
        _full((E + H2, 4 * H2)), _full((1, 4 * H2)),
        _full((H2, H2)), _full((H2, H2)),
        wtile, btile,
        _full((1, 3 * H2)), _full((1, 1)),
    ]
    out_shape = (
        jax.ShapeDtypeStruct((Bp, Vext_p), f32),          # p_y (padded, resident)
        jax.ShapeDtypeStruct((Bp, H2), f32),              # h_next
        jax.ShapeDtypeStruct((Bp, H2), f32),              # c_next
        jax.ShapeDtypeStruct((Bp, S), f32),               # et_sum
        jax.ShapeDtypeStruct((Bp, Tmax, H2), f32),        # dec history buffer
    )
    out_specs = tuple(_full(s.shape) for s in out_shape)
    scratch_shapes = [
        pltpu.VMEM((Bp, 3 * H2), mxu_dtype),              # final = [h,c_et,c_dt]
        pltpu.VMEM((Bp, S), f32),                         # alpha_et * p_u
        pltpu.VMEM((Bp, 1), f32),                         # p_u_one
        pltpu.VMEM((Bp, 1), f32),                         # running max
        pltpu.VMEM((Bp, 1), f32),                         # running sum
        pltpu.VMEM((num_tiles, Bp, 1), f32),              # per-tile max
        pltpu.VMEM((num_tiles, Bp, tile_v), f32),         # per-tile scatter acc
    ]
    grid_spec = pltpu.PrefetchScalarGridSpec(
        num_scalar_prefetch=1,                            # t (SMEM scalar)
        grid=(num_tiles,),
        in_specs=in_specs,
        out_specs=out_specs,
        scratch_shapes=scratch_shapes,
    )
    pallas_fn = pl.pallas_call(
        functools.partial(decoder_kernel, num_tiles),
        out_shape=out_shape,
        grid_spec=grid_spec,
        compiler_params=pltpu.CompilerParams(
            # output blocks are revisited across vocab tiles -> "arbitrary".
            dimension_semantics=("arbitrary",),
            vmem_limit_bytes=vmem_limit_bytes,
        ),
    )

    @jax.jit
    def step(t, h_t, c_t, enc_out, dec_buf, et_sum, mask, extvoc, inputs):
        def pad_b(x, value):
            cfg = [(0, Bp - batch)] + [(0, 0)] * (x.ndim - 1)
            return jnp.pad(x, cfg, constant_values=value)

        t_arr = jnp.asarray(t, jnp.int32).reshape(1)
        args = (
            t_arr,
            pad_b(inputs.astype(f32), 0.0),
            pad_b(h_t.astype(f32), 0.0),
            pad_b(c_t.astype(f32), 0.0),
            pad_b(enc_out.astype(f32), 0.0),
            pad_b(dec_buf.astype(f32), 0.0),
            pad_b(et_sum.astype(f32), 1.0),               # 1.0: padded rows stay finite
            pad_b(mask.astype(f32), 1.0),                 # ones: padded rows never 0/0
            pad_b(extvoc.astype(jnp.int32), 0),
            prep["w_lstm"], prep["b_lstm"],
            prep["wbe"], prep["wbd"],
            prep["w_proj"], prep["b_proj"],
            prep["w_copy"], prep["b_copy"],
        )
        p_y, h_n, c_n, etsum_n, dec_n = pallas_fn(*args)
        return (p_y[:batch, :Vext], h_n[:batch], c_n[:batch],
                etsum_n[:batch], dec_n[:batch])

    return step


# ------------------------------ pure-JAX reference --------------------------
def decoder_step_ref(t, h_t, c_t, enc_out, dec_out, et_sum, mask, extvoc,
                     max_zeros, inputs, p):
    H2 = h_t.shape[1]
    gates = inputs @ p["w_ih"].T + p["b_ih"] + h_t @ p["w_hh"].T + p["b_hh"]
    i = jax.nn.sigmoid(gates[:, :H2])
    f = jax.nn.sigmoid(gates[:, H2:2 * H2])
    g = jnp.tanh(gates[:, 2 * H2:3 * H2])
    o = jax.nn.sigmoid(gates[:, 3 * H2:])
    c_next = f * c_t + i * g
    h_next = o * jnp.tanh(c_next)
    enc_proj = jnp.einsum("bsh,oh->bso", enc_out, p["w_benc"])
    et = jnp.einsum("bo,bso->bs", h_next, enc_proj)
    et_exp = jnp.exp(et)
    if t == 0:
        et_prime, et_sum_new = et_exp, et_exp
    else:
        et_prime, et_sum_new = et_exp / et_sum, et_sum + et_exp
    et_prime = et_prime * mask
    alpha_et = et_prime / jnp.sum(et_prime, axis=1, keepdims=True)
    c_et = jnp.einsum("bs,bsh->bh", alpha_et, enc_out)
    if t == 0:
        c_dt = jnp.zeros_like(h_next)
        dec_out_new = h_next[:, None, :]
    else:
        dec_proj = jnp.einsum("bth,oh->bto", dec_out, p["w_bdec"])
        e_dt = jnp.einsum("bo,bto->bt", h_next, dec_proj)
        alpha_dt = jax.nn.softmax(e_dt, axis=1)
        c_dt = jnp.einsum("bt,bth->bh", alpha_dt, dec_out)
        dec_out_new = jnp.concatenate([dec_out, h_next[:, None, :]], axis=1)
    final = jnp.concatenate([h_next, c_et, c_dt], axis=1)
    p_y_u_zero = jax.nn.softmax(final @ p["w_proj"].T + p["b_proj"], axis=1)
    p_u_one = jax.nn.sigmoid(final @ p["w_copy"].T + p["b_copy"])
    p_y_part1 = p_y_u_zero * (1 - p_u_one)
    p_y_part2 = alpha_et * p_u_one
    p_y_part1 = jnp.concatenate([p_y_part1, max_zeros], axis=1)
    B = h_t.shape[0]
    p_y = p_y_part1.at[jnp.arange(B)[:, None], extvoc].add(p_y_part2)
    return p_y, h_next, c_next, et_sum_new, dec_out_new


if __name__ == "__main__":
    key = jax.random.PRNGKey(0)
    # V=200 + tile_v=128 -> 2 vocab tiles: exercises the online max/sum,
    # the per-tile scatter and the epilogue correction across tiles.
    B, E, H, V, S, NEXT, T_MAX = 2, 8, 16, 200, 8, 4, 4    # hidden H=16 -> H2=32
    H2 = 2 * H
    ks = jax.random.split(key, 16)
    sc = 0.1
    params = {
        "w_ih": sc * jax.random.normal(ks[0], (4 * H2, E), jnp.float32),
        "w_hh": sc * jax.random.normal(ks[1], (4 * H2, H2), jnp.float32),
        "b_ih": sc * jax.random.normal(ks[2], (4 * H2,), jnp.float32),
        "b_hh": sc * jax.random.normal(ks[3], (4 * H2,), jnp.float32),
        "w_benc": sc * jax.random.normal(ks[4], (H2, H2), jnp.float32),
        "w_bdec": sc * jax.random.normal(ks[5], (H2, H2), jnp.float32),
        "w_proj": sc * jax.random.normal(ks[6], (V, 3 * H2), jnp.float32),
        "b_proj": sc * jax.random.normal(ks[7], (V,), jnp.float32),
        "w_copy": sc * jax.random.normal(ks[8], (1, 3 * H2), jnp.float32),
        "b_copy": sc * jax.random.normal(ks[9], (1,), jnp.float32),
    }
    inputs0 = jax.random.normal(ks[10], (B, E), jnp.float32)
    inputs1 = jax.random.normal(ks[11], (B, E), jnp.float32)
    h_t = jnp.zeros((B, H2), jnp.float32)
    c_t = jnp.zeros((B, H2), jnp.float32)
    enc_out = 0.5 * jax.random.normal(ks[12], (B, S, H2), jnp.float32)
    mask = jnp.concatenate(
        [jnp.ones((B, S - 2), jnp.float32), jnp.zeros((B, 2), jnp.float32)], axis=1)
    extvoc = jax.random.randint(ks[13], (B, S), 0, V + NEXT, jnp.int32)
    max_zeros = jnp.zeros((B, NEXT), jnp.float32)

    step = build_decoder_step(params, batch=B, emb_dim=E, hidden2=H2, vocab=V,
                              seq_len=S, n_ext=NEXT, t_max=T_MAX, tile_v=128)

    dec_buf0 = jnp.zeros((B, T_MAX, H2), jnp.float32)
    etsum0 = jnp.zeros((B, S), jnp.float32)

    # t = 0 step, then t = 1 feeding kernel outputs back (both branches with a
    # SINGLE compiled kernel — t is a runtime scalar).
    p_y0, h1, c1, etsum1, dec1 = step(jnp.int32(0), h_t, c_t, enc_out, dec_buf0,
                                      etsum0, mask, extvoc, inputs0)
    p_y1, h2, c2, etsum2, dec2 = step(jnp.int32(1), h1, c1, enc_out, dec1,
                                      etsum1, mask, extvoc, inputs1)
    jax.block_until_ready((p_y0, p_y1, h2, c2, etsum2, dec2))

    # Reference chain (growing decoder history, full f32)
    rp_y0, rh1, rc1, retsum1, rdec1 = decoder_step_ref(
        0, h_t, c_t, enc_out, None, None, mask, extvoc, max_zeros, inputs0, params)
    rp_y1, rh2, rc2, retsum2, rdec2 = decoder_step_ref(
        1, rh1, rc1, enc_out, rdec1, retsum1, mask, extvoc, max_zeros, inputs1, params)

    ok = True
    for a, b in [(p_y0, rp_y0), (p_y1, rp_y1), (h2, rh2), (c2, rc2),
                 (etsum2, retsum2), (dec2[:, :2, :], rdec2)]:
        ok = ok and bool(jnp.allclose(a, b, rtol=2e-2, atol=2e-3))
    assert ok, "Pallas kernel output mismatch vs JAX reference"
    print("KERNEL_OK")
</pallas_src>

<mosaic_0001>
module attributes {stable_mosaic.version = 11 : i64} {
  func.func @decoder_kernel(%arg0: i32, %arg1: memref<1xi32, #tpu.memory_space<smem>>, %arg2: memref<8x8xf32, #tpu.memory_space<vmem>>, %arg3: memref<8x32xf32, #tpu.memory_space<vmem>>, %arg4: memref<8x32xf32, #tpu.memory_space<vmem>>, %arg5: memref<8x8x32xf32, #tpu.memory_space<vmem>>, %arg6: memref<8x4x32xf32, #tpu.memory_space<vmem>>, %arg7: memref<8x8xf32, #tpu.memory_space<vmem>>, %arg8: memref<8x8xf32, #tpu.memory_space<vmem>>, %arg9: memref<8x8xi32, #tpu.memory_space<vmem>>, %arg10: memref<40x128xf32, #tpu.memory_space<vmem>>, %arg11: memref<1x128xf32, #tpu.memory_space<vmem>>, %arg12: memref<32x32xf32, #tpu.memory_space<vmem>>, %arg13: memref<32x32xf32, #tpu.memory_space<vmem>>, %arg14: memref<96x128xbf16, #tpu.memory_space<vmem>>, %arg15: memref<1x128xf32, #tpu.memory_space<vmem>>, %arg16: memref<1x96xf32, #tpu.memory_space<vmem>>, %arg17: memref<1x1xf32, #tpu.memory_space<vmem>>, %arg18: memref<8x256xf32, #tpu.memory_space<vmem>>, %arg19: memref<8x32xf32, #tpu.memory_space<vmem>>, %arg20: memref<8x32xf32, #tpu.memory_space<vmem>>, %arg21: memref<8x8xf32, #tpu.memory_space<vmem>>, %arg22: memref<8x4x32xf32, #tpu.memory_space<vmem>>, %arg23: memref<8x96xbf16, #tpu.memory_space<vmem>>, %arg24: memref<8x8xf32, #tpu.memory_space<vmem>>, %arg25: memref<8x1xf32, #tpu.memory_space<vmem>>, %arg26: memref<8x1xf32, #tpu.memory_space<vmem>>, %arg27: memref<8x1xf32, #tpu.memory_space<vmem>>, %arg28: memref<2x8x1xf32, #tpu.memory_space<vmem>>, %arg29: memref<2x8x128xf32, #tpu.memory_space<vmem>>) attributes {dimension_semantics = [#tpu.dimension_semantics<arbitrary>], iteration_bounds = array<i64: 2>, scalar_prefetch = 1 : i64, scratch_operands = 7 : i64, tpu.core_type = #tpu.core_type<tc>, window_params = [{pipeline_mode = #tpu.pipeline_mode<synchronous>, transform_indices = @transform_0, window_bounds = array<i64: 8, 8>}, {pipeline_mode = #tpu.pipeline_mode<synchronous>, transform_indices = @transform_1, window_bounds = array<i64: 8, 32>}, {pipeline_mode = #tpu.pipeline_mode<synchronous>, transform_indices = @transform_2, window_bounds = array<i64: 8, 32>}, {pipeline_mode = #tpu.pipeline_mode<synchronous>, transform_indices = @transform_3, window_bounds = array<i64: 8, 8, 32>}, {pipeline_mode = #tpu.pipeline_mode<synchronous>, transform_indices = @transform_4, window_bounds = array<i64: 8, 4, 32>}, {pipeline_mode = #tpu.pipeline_mode<synchronous>, transform_indices = @transform_5, window_bounds = array<i64: 8, 8>}, {pipeline_mode = #tpu.pipeline_mode<synchronous>, transform_indices = @transform_6, window_bounds = array<i64: 8, 8>}, {pipeline_mode = #tpu.pipeline_mode<synchronous>, transform_indices = @transform_7, window_bounds = array<i64: 8, 8>}, {pipeline_mode = #tpu.pipeline_mode<synchronous>, transform_indices = @transform_8, window_bounds = array<i64: 40, 128>}, {pipeline_mode = #tpu.pipeline_mode<synchronous>, transform_indices = @transform_9, window_bounds = array<i64: 1, 128>}, {pipeline_mode = #tpu.pipeline_mode<synchronous>, transform_indices = @transform_10, window_bounds = array<i64: 32, 32>}, {pipeline_mode = #tpu.pipeline_mode<synchronous>, transform_indices = @transform_11, window_bounds = array<i64: 32, 32>}, {transform_indices = @transform_12, window_bounds = array<i64: 96, 128>}, {transform_indices = @transform_13, window_bounds = array<i64: 1, 128>}, {pipeline_mode = #tpu.pipeline_mode<synchronous>, transform_indices = @transform_14, window_bounds = array<i64: 1, 96>}, {pipeline_mode = #tpu.pipeline_mode<synchronous>, transform_indices = @transform_15, window_bounds = array<i64: 1, 1>}, {pipeline_mode = #tpu.pipeline_mode<synchronous>, transform_indices = @transform_16, window_bounds = array<i64: 8, 256>}, {pipeline_mode = #tpu.pipeline_mode<synchronous>, transform_indices = @transform_17, window_bounds = array<i64: 8, 32>}, {pipeline_mode = #tpu.pipeline_mode<synchronous>, transform_indices = @transform_18, window_bounds = array<i64: 8, 32>}, {pipeline_mode = #tpu.pipeline_mode<synchronous>, transform_indices = @transform_19, window_bounds = array<i64: 8, 8>}, {pipeline_mode = #tpu.pipeline_mode<synchronous>, transform_indices = @transform_20, window_bounds = array<i64: 8, 4, 32>}]} {
    %c0_i32 = arith.constant 0 : i32
    %0 = arith.cmpi eq, %arg0, %c0_i32 : i32
    %1 = arith.extui %0 : i1 to i32
    %c0_i32_0 = arith.constant 0 : i32
    %2 = arith.cmpi ne, %1, %c0_i32_0 : i32
    scf.if %2 {
      %c0_57 = arith.constant 0 : index
      %120 = memref.load %arg1[%c0_57] : memref<1xi32, #tpu.memory_space<smem>>
      %c0_58 = arith.constant 0 : index
      %c0_59 = arith.constant 0 : index
      %121 = vector.load %arg2[%c0_58, %c0_59] : memref<8x8xf32, #tpu.memory_space<vmem>>, vector<8x8xf32>
      %c0_60 = arith.constant 0 : index
      %c0_61 = arith.constant 0 : index
      %122 = vector.load %arg3[%c0_60, %c0_61] : memref<8x32xf32, #tpu.memory_space<vmem>>, vector<8x32xf32>
      %c0_62 = arith.constant 0 : index
      %c0_63 = arith.constant 0 : index
      %123 = vector.load %arg4[%c0_62, %c0_63] : memref<8x32xf32, #tpu.memory_space<vmem>>, vector<8x32xf32>
      %124 = tpu.concatenate %121, %122 in 1 : vector<8x8xf32>, vector<8x32xf32> -> vector<8x40xf32>
      %c0_64 = arith.constant 0 : index
      %c0_65 = arith.constant 0 : index
      %125 = vector.load %arg10[%c0_64, %c0_65] : memref<40x128xf32, #tpu.memory_space<vmem>>, vector<40x128xf32>
      %cst_66 = arith.constant dense<0.000000e+00> : vector<8x128xf32>
      %126 = tpu.matmul %124, %125, %cst_66 {dimension_numbers = #tpu.dot_dimension_numbers<[1], [0], [0], [1], [0, 0, 1, 1], [], []>} : vector<8x40xf32>, vector<40x128xf32>, vector<8x128xf32> -> vector<8x128xf32>
      %c0_67 = arith.constant 0 : index
      %c0_68 = arith.constant 0 : index
      %127 = vector.load %arg11[%c0_67, %c0_68] : memref<1x128xf32, #tpu.memory_space<vmem>>, vector<1x128xf32>
      %128 = vector.broadcast %127 : vector<1x128xf32> to vector<8x128xf32>
      %129 = arith.addf %126, %128 : vector<8x128xf32>
      %130 = vector.extract_strided_slice %129 {offsets = [0, 0], sizes = [8, 32], strides = [1, 1]} : vector<8x128xf32> to vector<8x32xf32>
      %cst_69 = arith.constant 0.000000e+00 : f32
      %131 = vector.broadcast %cst_69 : f32 to vector<8x32xf32>
      %132 = arith.subf %131, %130 : vector<8x32xf32>
      %133 = math.exp %132 : vector<8x32xf32>
      %cst_70 = arith.constant 1.000000e+00 : f32
      %134 = vector.broadcast %cst_70 : f32 to vector<8x32xf32>
      %135 = arith.addf %134, %133 : vector<8x32xf32>
      %cst_71 = arith.constant 1.000000e+00 : f32
      %136 = vector.broadcast %cst_71 : f32 to vector<8x32xf32>
      %137 = arith.divf %136, %135 : vector<8x32xf32>
      %138 = vector.extract_strided_slice %129 {offsets = [0, 32], sizes = [8, 32], strides = [1, 1]} : vector<8x128xf32> to vector<8x32xf32>
      %cst_72 = arith.constant 0.000000e+00 : f32
      %139 = vector.broadcast %cst_72 : f32 to vector<8x32xf32>
      %140 = arith.subf %139, %138 : vector<8x32xf32>
      %141 = math.exp %140 : vector<8x32xf32>
      %cst_73 = arith.constant 1.000000e+00 : f32
      %142 = vector.broadcast %cst_73 : f32 to vector<8x32xf32>
      %143 = arith.addf %142, %141 : vector<8x32xf32>
      %cst_74 = arith.constant 1.000000e+00 : f32
      %144 = vector.broadcast %cst_74 : f32 to vector<8x32xf32>
      %145 = arith.divf %144, %143 : vector<8x32xf32>
      %146 = vector.extract_strided_slice %129 {offsets = [0, 64], sizes = [8, 32], strides = [1, 1]} : vector<8x128xf32> to vector<8x32xf32>
      %147 = math.tanh %146 : vector<8x32xf32>
      %148 = vector.extract_strided_slice %129 {offsets = [0, 96], sizes = [8, 32], strides = [1, 1]} : vector<8x128xf32> to vector<8x32xf32>
      %cst_75 = arith.constant 0.000000e+00 : f32
      %149 = vector.broadcast %cst_75 : f32 to vector<8x32xf32>
      %150 = arith.subf %149, %148 : vector<8x32xf32>
      %151 = math.exp %150 : vector<8x32xf32>
      %cst_76 = arith.constant 1.000000e+00 : f32
      %152 = vector.broadcast %cst_76 : f32 to vector<8x32xf32>
      %153 = arith.addf %152, %151 : vector<8x32xf32>
      %cst_77 = arith.constant 1.000000e+00 : f32
      %154 = vector.broadcast %cst_77 : f32 to vector<8x32xf32>
      %155 = arith.divf %154, %153 : vector<8x32xf32>
      %156 = arith.mulf %145, %123 : vector<8x32xf32>
      %157 = arith.mulf %137, %147 : vector<8x32xf32>
      %158 = arith.addf %156, %157 : vector<8x32xf32>
      %159 = math.tanh %158 : vector<8x32xf32>
      %160 = arith.mulf %155, %159 : vector<8x32xf32>
      %c0_78 = arith.constant 0 : index
      %c0_79 = arith.constant 0 : index
      %161 = vector.load %arg19[%c0_78, %c0_79] : memref<8x32xf32, #tpu.memory_space<vmem>>, vector<8x32xf32>
      tpu.vector_store %arg19[%c0_78, %c0_79], %160 {strides = array<i32>} : memref<8x32xf32, #tpu.memory_space<vmem>>, vector<8x32xf32>,
      %c0_80 = arith.constant 0 : index
      %c0_81 = arith.constant 0 : index
      %162 = vector.load %arg20[%c0_80, %c0_81] : memref<8x32xf32, #tpu.memory_space<vmem>>, vector<8x32xf32>
      tpu.vector_store %arg20[%c0_80, %c0_81], %158 {strides = array<i32>} : memref<8x32xf32, #tpu.memory_space<vmem>>, vector<8x32xf32>,
      %c0_82 = arith.constant 0 : index
      %c0_83 = arith.constant 0 : index
      %c0_84 = arith.constant 0 : index
      %163 = vector.load %arg5[%c0_82, %c0_83, %c0_84] : memref<8x8x32xf32, #tpu.memory_space<vmem>>, vector<8x8x32xf32>
      %c0_85 = arith.constant 0 : index
      %c0_86 = arith.constant 0 : index
      %164 = vector.load %arg12[%c0_85, %c0_86] : memref<32x32xf32, #tpu.memory_space<vmem>>, vector<32x32xf32>
      %cst_87 = arith.constant dense<0.000000e+00> : vector<8x32xf32>
      %165 = tpu.matmul %160, %164, %cst_87 {dimension_numbers = #tpu.dot_dimension_numbers<[1], [0], [0], [1], [0, 0, 1, 1], [], []>} : vector<8x32xf32>, vector<32x32xf32>, vector<8x32xf32> -> vector<8x32xf32>
      %166 = vector.shape_cast %165 : vector<8x32xf32> to vector<8x1x32xf32>
      "tpu.trace_start"() <{level = 10 : i32, message = "bqh,bsh->bqs"}> : () -> ()
      %cst_88 = arith.constant dense<0.000000e+00> : vector<8x1x8xf32>
      %167 = tpu.matmul %166, %163, %cst_88 {dimension_numbers = #tpu.dot_dimension_numbers<[2], [2], [1], [1], [0, 0, 0, 1, 1, 1], [0], [0]>} : vector<8x1x32xf32>, vector<8x8x32xf32>, vector<8x1x8xf32> -> vector<8x1x8xf32>
      "tpu.trace_stop"() : () -> ()
      %168 = vector.shape_cast %167 : vector<8x1x8xf32> to vector<8x8xf32>
      %169 = math.exp %168 : vector<8x8xf32>
      %c0_i32_89 = arith.constant 0 : i32
      %170 = arith.cmpi eq, %120, %c0_i32_89 : i32
      %c0_90 = arith.constant 0 : index
      %c0_91 = arith.constant 0 : index
      %171 = vector.load %arg7[%c0_90, %c0_91] : memref<8x8xf32, #tpu.memory_space<vmem>>, vector<8x8xf32>
      %cst_92 = arith.constant 1.000000e+00 : f32
      %172 = vector.broadcast %cst_92 : f32 to vector<8x8xf32>
      %173 = arith.select %170, %172, %171 : vector<8x8xf32>
      %174 = arith.divf %169, %173 : vector<8x8xf32>
      %175 = arith.addf %171, %169 : vector<8x8xf32>
      %176 = arith.select %170, %169, %175 : vector<8x8xf32>
      %c0_93 = arith.constant 0 : index
      %c0_94 = arith.constant 0 : index
      %177 = vector.load %arg21[%c0_93, %c0_94] : memref<8x8xf32, #tpu.memory_space<vmem>>, vector<8x8xf32>
      tpu.vector_store %arg21[%c0_93, %c0_94], %176 {strides = array<i32>} : memref<8x8xf32, #tpu.memory_space<vmem>>, vector<8x8xf32>,
      %c0_95 = arith.constant 0 : index
      %c0_96 = arith.constant 0 : index
      %178 = vector.load %arg8[%c0_95, %c0_96] : memref<8x8xf32, #tpu.memory_space<vmem>>, vector<8x8xf32>
      %179 = arith.mulf %174, %178 : vector<8x8xf32>
      %cst_97 = arith.constant dense<0.000000e+00> : vector<8xf32>
      %180 = vector.multi_reduction <add>, %179, %cst_97 [1] : vector<8x8xf32> to vector<8xf32>
      %181 = vector.shape_cast %180 : vector<8xf32> to vector<8x1xf32>
      %182 = vector.broadcast %181 : vector<8x1xf32> to vector<8x8xf32>
      %183 = arith.divf %179, %182 : vector<8x8xf32>
      %184 = vector.shape_cast %183 : vector<8x8xf32> to vector<8x1x8xf32>
      "tpu.trace_start"() <{level = 10 : i32, message = "bqs,bsh->bqh"}> : () -> ()
      %cst_98 = arith.constant dense<0.000000e+00> : vector<8x1x32xf32>
      %185 = tpu.matmul %184, %163, %cst_98 {dimension_numbers = #tpu.dot_dimension_numbers<[2], [1], [1], [2], [0, 0, 0, 1, 1, 2], [0], [0]>} : vector<8x1x8xf32>, vector<8x8x32xf32>, vector<8x1x32xf32> -> vector<8x1x32xf32>
      "tpu.trace_stop"() : () -> ()
      %186 = vector.shape_cast %185 : vector<8x1x32xf32> to vector<8x32xf32>
      %c0_99 = arith.constant 0 : index
      %c0_100 = arith.constant 0 : index
      %c0_101 = arith.constant 0 : index
      %187 = vector.load %arg6[%c0_99, %c0_100, %c0_101] : memref<8x4x32xf32, #tpu.memory_space<vmem>>, vector<8x4x32xf32>
      %c0_102 = arith.constant 0 : index
      %c0_103 = arith.constant 0 : index
      %188 = vector.load %arg13[%c0_102, %c0_103] : memref<32x32xf32, #tpu.memory_space<vmem>>, vector<32x32xf32>
      %cst_104 = arith.constant dense<0.000000e+00> : vector<8x32xf32>
      %189 = tpu.matmul %160, %188, %cst_104 {dimension_numbers = #tpu.dot_dimension_numbers<[1], [0], [0], [1], [0, 0, 1, 1], [], []>} : vector<8x32xf32>, vector<32x32xf32>, vector<8x32xf32> -> vector<8x32xf32>
      %190 = vector.shape_cast %189 : vector<8x32xf32> to vector<8x1x32xf32>
      "tpu.trace_start"() <{level = 10 : i32, message = "bqh,bth->bqt"}> : () -> ()
      %cst_105 = arith.constant dense<0.000000e+00> : vector<8x1x4xf32>
      %191 = tpu.matmul %190, %187, %cst_105 {dimension_numbers = #tpu.dot_dimension_numbers<[2], [2], [1], [1], [0, 0, 0, 1, 1, 1], [0], [0]>} : vector<8x1x32xf32>, vector<8x4x32xf32>, vector<8x1x4xf32> -> vector<8x1x4xf32>
      "tpu.trace_stop"() : () -> ()
      %192 = vector.shape_cast %191 : vector<8x1x4xf32> to vector<8x4xf32>
      %193 = tpu.iota {dimensions = array<i32: 1>} : vector<8x4xi32>
      %194 = vector.broadcast %120 : i32 to vector<8x4xi32>
      %195 = arith.cmpi slt, %193, %194 : vector<8x4xi32>
      %cst_106 = arith.constant -1.000000e+30 : f32
      %196 = vector.broadcast %cst_106 : f32 to vector<8x4xf32>
      %197 = arith.select %195, %192, %196 : vector<8x4xi1>, vector<8x4xf32>
      %cst_107 = arith.constant dense<0xFF800000> : vector<8xf32>
      %198 = vector.multi_reduction <maximumf>, %197, %cst_107 [1] : vector<8x4xf32> to vector<8xf32>
      %199 = vector.shape_cast %198 : vector<8xf32> to vector<8x1xf32>
      %200 = vector.broadcast %199 : vector<8x1xf32> to vector<8x4xf32>
      %201 = arith.subf %197, %200 : vector<8x4xf32>
      %202 = math.exp %201 : vector<8x4xf32>
      %203 = arith.extui %195 : vector<8x4xi1> to vector<8x4xi32>
      %204 = arith.sitofp %203 : vector<8x4xi32> to vector<8x4xf32>
      %205 = arith.mulf %202, %204 : vector<8x4xf32>
      %cst_108 = arith.constant dense<0.000000e+00> : vector<8xf32>
      %206 = vector.multi_reduction <add>, %205, %cst_108 [1] : vector<8x4xf32> to vector<8xf32>
      %207 = vector.shape_cast %206 : vector<8xf32> to vector<8x1xf32>
      %cst_109 = arith.constant 0.000000e+00 : f32
      %208 = vector.broadcast %cst_109 : f32 to vector<8x1xf32>
      %209 = arith.cmpf ogt, %207, %208 : vector<8x1xf32>
      %cst_110 = arith.constant 1.000000e+00 : f32
      %210 = vector.broadcast %cst_110 : f32 to vector<8x1xf32>
      %211 = arith.select %209, %207, %210 : vector<8x1xi1>, vector<8x1xf32>
      %212 = vector.broadcast %211 : vector<8x1xf32> to vector<8x4xf32>
      %213 = arith.divf %205, %212 : vector<8x4xf32>
      %214 = vector.shape_cast %213 : vector<8x4xf32> to vector<8x1x4xf32>
      "tpu.trace_start"() <{level = 10 : i32, message = "bqt,bth->bqh"}> : () -> ()
      %cst_111 = arith.constant dense<0.000000e+00> : vector<8x1x32xf32>
      %215 = tpu.matmul %214, %187, %cst_111 {dimension_numbers = #tpu.dot_dimension_numbers<[2], [1], [1], [2], [0, 0, 0, 1, 1, 2], [0], [0]>} : vector<8x1x4xf32>, vector<8x4x32xf32>, vector<8x1x32xf32> -> vector<8x1x32xf32>
      "tpu.trace_stop"() : () -> ()
      %216 = vector.shape_cast %215 : vector<8x1x32xf32> to vector<8x32xf32>
      %c0_112 = arith.constant 0 : index
      %c0_113 = arith.constant 0 : index
      %c0_114 = arith.constant 0 : index
      %217 = vector.load %arg22[%c0_112, %c0_113, %c0_114] : memref<8x4x32xf32, #tpu.memory_space<vmem>>, vector<8x4x32xf32>
      tpu.vector_store %arg22[%c0_112, %c0_113, %c0_114], %187 {strides = array<i32>} : memref<8x4x32xf32, #tpu.memory_space<vmem>>, vector<8x4x32xf32>,
      %218 = vector.shape_cast %160 : vector<8x32xf32> to vector<8x1x32xf32>
      %c0_115 = arith.constant 0 : index
      %219 = arith.index_cast %120 : i32 to index
      %c0_116 = arith.constant 0 : index
      %220 = vector.load %arg22[%c0_115, %219, %c0_116] : memref<8x4x32xf32, #tpu.memory_space<vmem>>, vector<8x1x32xf32>
      tpu.vector_store %arg22[%c0_115, %219, %c0_116], %218 {strides = array<i32>} : memref<8x4x32xf32, #tpu.memory_space<vmem>>, vector<8x1x32xf32>,
      %221 = tpu.concatenate %160, %186, %216 in 1 : vector<8x32xf32>, vector<8x32xf32>, vector<8x32xf32> -> vector<8x96xf32>
      %c0_117 = arith.constant 0 : index
      %c0_118 = arith.constant 0 : index
      %222 = vector.load %arg16[%c0_117, %c0_118] : memref<1x96xf32, #tpu.memory_space<vmem>>, vector<1x96xf32>
      %223 = vector.broadcast %222 : vector<1x96xf32> to vector<8x96xf32>
      %224 = arith.mulf %221, %223 : vector<8x96xf32>
      %cst_119 = arith.constant dense<0.000000e+00> : vector<8xf32>
      %225 = vector.multi_reduction <add>, %224, %cst_119 [1] : vector<8x96xf32> to vector<8xf32>
      %226 = vector.shape_cast %225 : vector<8xf32> to vector<8x1xf32>
      %c0_120 = arith.constant 0 : index
      %c0_121 = arith.constant 0 : index
      %227 = vector.load %arg17[%c0_120, %c0_121] : memref<1x1xf32, #tpu.memory_space<vmem>>, vector<1x1xf32>
      %228 = vector.broadcast %227 : vector<1x1xf32> to vector<8x1xf32>
      %229 = arith.addf %226, %228 : vector<8x1xf32>
      %cst_122 = arith.constant 0.000000e+00 : f32
      %230 = vector.broadcast %cst_122 : f32 to vector<8x1xf32>
      %231 = arith.subf %230, %229 : vector<8x1xf32>
      %232 = math.exp %231 : vector<8x1xf32>
      %cst_123 = arith.constant 1.000000e+00 : f32
      %233 = vector.broadcast %cst_123 : f32 to vector<8x1xf32>
      %234 = arith.addf %233, %232 : vector<8x1xf32>
      %cst_124 = arith.constant 1.000000e+00 : f32
      %235 = vector.broadcast %cst_124 : f32 to vector<8x1xf32>
      %236 = arith.divf %235, %234 : vector<8x1xf32>
      %c0_125 = arith.constant 0 : index
      %c0_126 = arith.constant 0 : index
      %237 = vector.load %arg25[%c0_125, %c0_126] : memref<8x1xf32, #tpu.memory_space<vmem>>, vector<8x1xf32>
      tpu.vector_store %arg25[%c0_125, %c0_126], %236 {strides = array<i32>} : memref<8x1xf32, #tpu.memory_space<vmem>>, vector<8x1xf32>,
      %238 = vector.broadcast %236 : vector<8x1xf32> to vector<8x8xf32>
      %239 = arith.mulf %183, %238 : vector<8x8xf32>
      %c0_127 = arith.constant 0 : index
      %c0_128 = arith.constant 0 : index
      %240 = vector.load %arg24[%c0_127, %c0_128] : memref<8x8xf32, #tpu.memory_space<vmem>>, vector<8x8xf32>
      tpu.vector_store %arg24[%c0_127, %c0_128], %239 {strides = array<i32>} : memref<8x8xf32, #tpu.memory_space<vmem>>, vector<8x8xf32>,
      %241 = arith.truncf %221 : vector<8x96xf32> to vector<8x96xbf16>
      %c0_129 = arith.constant 0 : index
      %c0_130 = arith.constant 0 : index
      %242 = vector.load %arg23[%c0_129, %c0_130] : memref<8x96xbf16, #tpu.memory_space<vmem>>, vector<8x96xbf16>
      tpu.vector_store %arg23[%c0_129, %c0_130], %241 {strides = array<i32>} : memref<8x96xbf16, #tpu.memory_space<vmem>>, vector<8x96xbf16>,
      %cst_131 = arith.constant -1.000000e+30 : f32
      %243 = vector.broadcast %cst_131 : f32 to vector<8x1xf32>
      %c0_132 = arith.constant 0 : index
      %c0_133 = arith.constant 0 : index
      %244 = vector.load %arg26[%c0_132, %c0_133] : memref<8x1xf32, #tpu.memory_space<vmem>>, vector<8x1xf32>
      tpu.vector_store %arg26[%c0_132, %c0_133], %243 {strides = array<i32>} : memref<8x1xf32, #tpu.memory_space<vmem>>, vector<8x1xf32>,
      %cst_134 = arith.constant 0.000000e+00 : f32
      %245 = vector.broadcast %cst_134 : f32 to vector<8x1xf32>
      %c0_135 = arith.constant 0 : index
      %c0_136 = arith.constant 0 : index
      %246 = vector.load %arg27[%c0_135, %c0_136] : memref<8x1xf32, #tpu.memory_space<vmem>>, vector<8x1xf32>
      tpu.vector_store %arg27[%c0_135, %c0_136], %245 {strides = array<i32>} : memref<8x1xf32, #tpu.memory_space<vmem>>, vector<8x1xf32>,
    } else {
    }
    %c0 = arith.constant 0 : index
    %c0_1 = arith.constant 0 : index
    %3 = vector.load %arg23[%c0, %c0_1] : memref<8x96xbf16, #tpu.memory_space<vmem>>, vector<8x96xbf16>
    %c0_2 = arith.constant 0 : index
    %c0_3 = arith.constant 0 : index
    %4 = vector.load %arg14[%c0_2, %c0_3] : memref<96x128xbf16, #tpu.memory_space<vmem>>, vector<96x128xbf16>
    %cst = arith.constant dense<0.000000e+00> : vector<8x128xf32>
    %5 = tpu.matmul %3, %4, %cst {dimension_numbers = #tpu.dot_dimension_numbers<[1], [0], [0], [1], [0, 0, 1, 1], [], []>} : vector<8x96xbf16>, vector<96x128xbf16>, vector<8x128xf32> -> vector<8x128xf32>
    %c0_4 = arith.constant 0 : index
    %c0_5 = arith.constant 0 : index
    %6 = vector.load %arg15[%c0_4, %c0_5] : memref<1x128xf32, #tpu.memory_space<vmem>>, vector<1x128xf32>
    %7 = vector.broadcast %6 : vector<1x128xf32> to vector<8x128xf32>
    %8 = arith.addf %5, %7 : vector<8x128xf32>
    %cst_6 = arith.constant dense<0xFF800000> : vector<8xf32>
    %9 = vector.multi_reduction <maximumf>, %8, %cst_6 [1] : vector<8x128xf32> to vector<8xf32>
    %10 = vector.shape_cast %9 : vector<8xf32> to vector<8x1xf32>
    %11 = vector.broadcast %10 : vector<8x1xf32> to vector<8x128xf32>
    %12 = arith.subf %8, %11 : vector<8x128xf32>
    %13 = math.exp %12 : vector<8x128xf32>
    %c0_7 = arith.constant 0 : index
    %c0_8 = arith.constant 0 : index
    %14 = vector.load %arg26[%c0_7, %c0_8] : memref<8x1xf32, #tpu.memory_space<vmem>>, vector<8x1xf32>
    %15 = arith.maximumf %14, %10 : vector<8x1xf32>
    %c0_9 = arith.constant 0 : index
    %c0_10 = arith.constant 0 : index
    %16 = vector.load %arg27[%c0_9, %c0_10] : memref<8x1xf32, #tpu.memory_space<vmem>>, vector<8x1xf32>
    %17 = arith.subf %14, %15 : vector<8x1xf32>
    %18 = math.exp %17 : vector<8x1xf32>
    %19 = arith.mulf %16, %18 : vector<8x1xf32>
    %cst_11 = arith.constant dense<0.000000e+00> : vector<8xf32>
    %20 = vector.multi_reduction <add>, %13, %cst_11 [1] : vector<8x128xf32> to vector<8xf32>
    %21 = vector.shape_cast %20 : vector<8xf32> to vector<8x1xf32>
    %22 = arith.subf %10, %15 : vector<8x1xf32>
    %23 = math.exp %22 : vector<8x1xf32>
    %24 = arith.mulf %21, %23 : vector<8x1xf32>
    %25 = arith.addf %19, %24 : vector<8x1xf32>
    %c0_12 = arith.constant 0 : index
    %c0_13 = arith.constant 0 : index
    %26 = vector.load %arg27[%c0_12, %c0_13] : memref<8x1xf32, #tpu.memory_space<vmem>>, vector<8x1xf32>
    tpu.vector_store %arg27[%c0_12, %c0_13], %25 {strides = array<i32>} : memref<8x1xf32, #tpu.memory_space<vmem>>, vector<8x1xf32>,
    %c0_14 = arith.constant 0 : index
    %c0_15 = arith.constant 0 : index
    %27 = vector.load %arg26[%c0_14, %c0_15] : memref<8x1xf32, #tpu.memory_space<vmem>>, vector<8x1xf32>
    tpu.vector_store %arg26[%c0_14, %c0_15], %15 {strides = array<i32>} : memref<8x1xf32, #tpu.memory_space<vmem>>, vector<8x1xf32>,
    %28 = arith.index_cast %arg0 : i32 to index
    %c0_16 = arith.constant 0 : index
    %c0_17 = arith.constant 0 : index
    %29 = vector.load %arg28[%28, %c0_16, %c0_17] : memref<2x8x1xf32, #tpu.memory_space<vmem>>, vector<1x8x1xf32>
    %30 = vector.shape_cast %29 : vector<1x8x1xf32> to vector<8x1xf32>
    %31 = vector.shape_cast %10 : vector<8x1xf32> to vector<1x8x1xf32>
    tpu.vector_store %arg28[%28, %c0_16, %c0_17], %31 {strides = array<i32>} : memref<2x8x1xf32, #tpu.memory_space<vmem>>, vector<1x8x1xf32>,
    %c128_i32 = arith.constant 128 : i32
    %32 = arith.muli %arg0, %c128_i32 : i32
    %33 = tpu.assume_multiple %32, 128 : i32
    %c0_18 = arith.constant 0 : index
    %34 = arith.index_cast %33 : i32 to index
    %35 = vector.load %arg18[%c0_18, %34] : memref<8x256xf32, #tpu.memory_space<vmem>>, vector<8x128xf32>
    tpu.vector_store %arg18[%c0_18, %34], %13 {strides = array<i32>} : memref<8x256xf32, #tpu.memory_space<vmem>>, vector<8x128xf32>,
    %36 = tpu.iota {dimensions = array<i32: 1>} : vector<8x128xi32>
    %c128_i32_19 = arith.constant 128 : i32
    %37 = arith.muli %arg0, %c128_i32_19 : i32
    %38 = vector.broadcast %37 : i32 to vector<8x128xi32>
    %39 = arith.addi %36, %38 : vector<8x128xi32>
    %cst_20 = arith.constant 0.000000e+00 : f32
    %40 = vector.broadcast %cst_20 : f32 to vector<8x128xf32>
    %c0_21 = arith.constant 0 : index
    %c0_22 = arith.constant 0 : index
    %41 = vector.load %arg9[%c0_21, %c0_22] : memref<8x8xi32, #tpu.memory_space<vmem>>, vector<8x1xi32>
    %c0_23 = arith.constant 0 : index
    %c0_24 = arith.constant 0 : index
    %42 = vector.load %arg24[%c0_23, %c0_24] : memref<8x8xf32, #tpu.memory_space<vmem>>, vector<8x1xf32>
    %43 = vector.broadcast %41 : vector<8x1xi32> to vector<8x128xi32>
    %44 = arith.cmpi eq, %39, %43 : vector<8x128xi32>
    %cst_25 = arith.constant 0.000000e+00 : f32
    %45 = vector.shape_cast %42 : vector<8x1xf32> to vector<8x1xf32>
    %46 = vector.broadcast %45 : vector<8x1xf32> to vector<8x128xf32>
    %47 = vector.broadcast %cst_25 : f32 to vector<8x128xf32>
    %48 = arith.select %44, %46, %47 : vector<8x128xi1>, vector<8x128xf32>
    %49 = arith.addf %40, %48 : vector<8x128xf32>
    %c0_26 = arith.constant 0 : index
    %c1 = arith.constant 1 : index
    %50 = vector.load %arg9[%c0_26, %c1] : memref<8x8xi32, #tpu.memory_space<vmem>>, vector<8x1xi32>
    %c0_27 = arith.constant 0 : index
    %c1_28 = arith.constant 1 : index
    %51 = vector.load %arg24[%c0_27, %c1_28] : memref<8x8xf32, #tpu.memory_space<vmem>>, vector<8x1xf32>
    %52 = vector.broadcast %50 : vector<8x1xi32> to vector<8x128xi32>
    %53 = arith.cmpi eq, %39, %52 : vector<8x128xi32>
    %cst_29 = arith.constant 0.000000e+00 : f32
    %54 = vector.shape_cast %51 : vector<8x1xf32> to vector<8x1xf32>
    %55 = vector.broadcast %54 : vector<8x1xf32> to vector<8x128xf32>
    %56 = vector.broadcast %cst_29 : f32 to vector<8x128xf32>
    %57 = arith.select %53, %55, %56 : vector<8x128xi1>, vector<8x128xf32>
    %58 = arith.addf %49, %57 : vector<8x128xf32>
    %c0_30 = arith.constant 0 : index
    %c2 = arith.constant 2 : index
    %59 = vector.load %arg9[%c0_30, %c2] : memref<8x8xi32, #tpu.memory_space<vmem>>, vector<8x1xi32>
    %c0_31 = arith.constant 0 : index
    %c2_32 = arith.constant 2 : index
    %60 = vector.load %arg24[%c0_31, %c2_32] : memref<8x8xf32, #tpu.memory_space<vmem>>, vector<8x1xf32>
    %61 = vector.broadcast %59 : vector<8x1xi32> to vector<8x128xi32>
    %62 = arith.cmpi eq, %39, %61 : vector<8x128xi32>
    %cst_33 = arith.constant 0.000000e+00 : f32
    %63 = vector.shape_cast %60 : vector<8x1xf32> to vector<8x1xf32>
    %64 = vector.broadcast %63 : vector<8x1xf32> to vector<8x128xf32>
    %65 = vector.broadcast %cst_33 : f32 to vector<8x128xf32>
    %66 = arith.select %62, %64, %65 : vector<8x128xi1>, vector<8x128xf32>
    %67 = arith.addf %58, %66 : vector<8x128xf32>
    %c0_34 = arith.constant 0 : index
    %c3 = arith.constant 3 : index
    %68 = vector.load %arg9[%c0_34, %c3] : memref<8x8xi32, #tpu.memory_space<vmem>>, vector<8x1xi32>
    %c0_35 = arith.constant 0 : index
    %c3_36 = arith.constant 3 : index
    %69 = vector.load %arg24[%c0_35, %c3_36] : memref<8x8xf32, #tpu.memory_space<vmem>>, vector<8x1xf32>
    %70 = vector.broadcast %68 : vector<8x1xi32> to vector<8x128xi32>
    %71 = arith.cmpi eq, %39, %70 : vector<8x128xi32>
    %cst_37 = arith.constant 0.000000e+00 : f32
    %72 = vector.shape_cast %69 : vector<8x1xf32> to vector<8x1xf32>
    %73 = vector.broadcast %72 : vector<8x1xf32> to vector<8x128xf32>
    %74 = vector.broadcast %cst_37 : f32 to vector<8x128xf32>
    %75 = arith.select %71, %73, %74 : vector<8x128xi1>, vector<8x128xf32>
    %76 = arith.addf %67, %75 : vector<8x128xf32>
    %c0_38 = arith.constant 0 : index
    %c4 = arith.constant 4 : index
    %77 = vector.load %arg9[%c0_38, %c4] : memref<8x8xi32, #tpu.memory_space<vmem>>, vector<8x1xi32>
    %c0_39 = arith.constant 0 : index
    %c4_40 = arith.constant 4 : index
    %78 = vector.load %arg24[%c0_39, %c4_40] : memref<8x8xf32, #tpu.memory_space<vmem>>, vector<8x1xf32>
    %79 = vector.broadcast %77 : vector<8x1xi32> to vector<8x128xi32>
    %80 = arith.cmpi eq, %39, %79 : vector<8x128xi32>
    %cst_41 = arith.constant 0.000000e+00 : f32
    %81 = vector.shape_cast %78 : vector<8x1xf32> to vector<8x1xf32>
    %82 = vector.broadcast %81 : vector<8x1xf32> to vector<8x128xf32>
    %83 = vector.broadcast %cst_41 : f32 to vector<8x128xf32>
    %84 = arith.select %80, %82, %83 : vector<8x128xi1>, vector<8x128xf32>
    %85 = arith.addf %76, %84 : vector<8x128xf32>
    %c0_42 = arith.constant 0 : index
    %c5 = arith.constant 5 : index
    %86 = vector.load %arg9[%c0_42, %c5] : memref<8x8xi32, #tpu.memory_space<vmem>>, vector<8x1xi32>
    %c0_43 = arith.constant 0 : index
    %c5_44 = arith.constant 5 : index
    %87 = vector.load %arg24[%c0_43, %c5_44] : memref<8x8xf32, #tpu.memory_space<vmem>>, vector<8x1xf32>
    %88 = vector.broadcast %86 : vector<8x1xi32> to vector<8x128xi32>
    %89 = arith.cmpi eq, %39, %88 : vector<8x128xi32>
    %cst_45 = arith.constant 0.000000e+00 : f32
    %90 = vector.shape_cast %87 : vector<8x1xf32> to vector<8x1xf32>
    %91 = vector.broadcast %90 : vector<8x1xf32> to vector<8x128xf32>
    %92 = vector.broadcast %cst_45 : f32 to vector<8x128xf32>
    %93 = arith.select %89, %91, %92 : vector<8x128xi1>, vector<8x128xf32>
    %94 = arith.addf %85, %93 : vector<8x128xf32>
    %c0_46 = arith.constant 0 : index
    %c6 = arith.constant 6 : index
    %95 = vector.load %arg9[%c0_46, %c6] : memref<8x8xi32, #tpu.memory_space<vmem>>, vector<8x1xi32>
    %c0_47 = arith.constant 0 : index
    %c6_48 = arith.constant 6 : index
    %96 = vector.load %arg24[%c0_47, %c6_48] : memref<8x8xf32, #tpu.memory_space<vmem>>, vector<8x1xf32>
    %97 = vector.broadcast %95 : vector<8x1xi32> to vector<8x128xi32>
    %98 = arith.cmpi eq, %39, %97 : vector<8x128xi32>
    %cst_49 = arith.constant 0.000000e+00 : f32
    %99 = vector.shape_cast %96 : vector<8x1xf32> to vector<8x1xf32>
    %100 = vector.broadcast %99 : vector<8x1xf32> to vector<8x128xf32>
    %101 = vector.broadcast %cst_49 : f32 to vector<8x128xf32>
    %102 = arith.select %98, %100, %101 : vector<8x128xi1>, vector<8x128xf32>
    %103 = arith.addf %94, %102 : vector<8x128xf32>
    %c0_50 = arith.constant 0 : index
    %c7 = arith.constant 7 : index
    %104 = vector.load %arg9[%c0_50, %c7] : memref<8x8xi32, #tpu.memory_space<vmem>>, vector<8x1xi32>
    %c0_51 = arith.constant 0 : index
    %c7_52 = arith.constant 7 : index
    %105 = vector.load %arg24[%c0_51, %c7_52] : memref<8x8xf32, #tpu.memory_space<vmem>>, vector<8x1xf32>
    %106 = vector.broadcast %104 : vector<8x1xi32> to vector<8x128xi32>
    %107 = arith.cmpi eq, %39, %106 : vector<8x128xi32>
    %cst_53 = arith.constant 0.000000e+00 : f32
    %108 = vector.shape_cast %105 : vector<8x1xf32> to vector<8x1xf32>
    %109 = vector.broadcast %108 : vector<8x1xf32> to vector<8x128xf32>
    %110 = vector.broadcast %cst_53 : f32 to vector<8x128xf32>
    %111 = arith.select %107, %109, %110 : vector<8x128xi1>, vector<8x128xf32>
    %112 = arith.addf %103, %111 : vector<8x128xf32>
    %113 = arith.index_cast %arg0 : i32 to index
    %c0_54 = arith.constant 0 : index
    %c0_55 = arith.constant 0 : index
    %114 = vector.load %arg29[%113, %c0_54, %c0_55] : memref<2x8x128xf32, #tpu.memory_space<vmem>>, vector<1x8x128xf32>
    %115 = vector.shape_cast %114 : vector<1x8x128xf32> to vector<8x128xf32>
    %116 = vector.shape_cast %112 : vector<8x128xf32> to vector<1x8x128xf32>
    tpu.vector_store %arg29[%113, %c0_54, %c0_55], %116 {strides = array<i32>} : memref<2x8x128xf32, #tpu.memory_space<vmem>>, vector<1x8x128xf32>,
    %c1_i32 = arith.constant 1 : i32
    %117 = arith.cmpi eq, %arg0, %c1_i32 : i32
    %118 = arith.extui %117 : i1 to i32
    %c0_i32_56 = arith.constant 0 : i32
    %119 = arith.cmpi ne, %118, %c0_i32_56 : i32
    scf.if %119 {
      %c0_57 = arith.constant 0 : index
      %c0_58 = arith.constant 0 : index
      %120 = vector.load %arg26[%c0_57, %c0_58] : memref<8x1xf32, #tpu.memory_space<vmem>>, vector<8x1xf32>
      %c0_59 = arith.constant 0 : index
      %c0_60 = arith.constant 0 : index
      %121 = vector.load %arg25[%c0_59, %c0_60] : memref<8x1xf32, #tpu.memory_space<vmem>>, vector<8x1xf32>
      %cst_61 = arith.constant 1.000000e+00 : f32
      %122 = vector.broadcast %cst_61 : f32 to vector<8x1xf32>
      %123 = arith.subf %122, %121 : vector<8x1xf32>
      %c0_62 = arith.constant 0 : index
      %c0_63 = arith.constant 0 : index
      %124 = vector.load %arg27[%c0_62, %c0_63] : memref<8x1xf32, #tpu.memory_space<vmem>>, vector<8x1xf32>
      %125 = arith.divf %123, %124 : vector<8x1xf32>
      %c0_64 = arith.constant 0 : index
      %c0_65 = arith.constant 0 : index
      %c0_66 = arith.constant 0 : index
      %126 = vector.load %arg28[%c0_64, %c0_65, %c0_66] : memref<2x8x1xf32, #tpu.memory_space<vmem>>, vector<1x8x1xf32>
      %127 = vector.shape_cast %126 : vector<1x8x1xf32> to vector<8x1xf32>
      %128 = arith.subf %127, %120 : vector<8x1xf32>
      %129 = math.exp %128 : vector<8x1xf32>
      %130 = arith.mulf %129, %125 : vector<8x1xf32>
      %c0_67 = arith.constant 0 : index
      %c0_68 = arith.constant 0 : index
      %131 = vector.load %arg18[%c0_67, %c0_68] : memref<8x256xf32, #tpu.memory_space<vmem>>, vector<8x128xf32>
      %132 = vector.broadcast %130 : vector<8x1xf32> to vector<8x128xf32>
      %133 = arith.mulf %131, %132 : vector<8x128xf32>
      %c0_69 = arith.constant 0 : index
      %c0_70 = arith.constant 0 : index
      %c0_71 = arith.constant 0 : index
      %134 = vector.load %arg29[%c0_69, %c0_70, %c0_71] : memref<2x8x128xf32, #tpu.memory_space<vmem>>, vector<1x8x128xf32>
      %135 = vector.shape_cast %134 : vector<1x8x128xf32> to vector<8x128xf32>
      %136 = arith.addf %133, %135 : vector<8x128xf32>
      %c0_72 = arith.constant 0 : index
      %c0_73 = arith.constant 0 : index
      %137 = vector.load %arg18[%c0_72, %c0_73] : memref<8x256xf32, #tpu.memory_space<vmem>>, vector<8x128xf32>
      tpu.vector_store %arg18[%c0_72, %c0_73], %136 {strides = array<i32>} : memref<8x256xf32, #tpu.memory_space<vmem>>, vector<8x128xf32>,
      %c1_74 = arith.constant 1 : index
      %c0_75 = arith.constant 0 : index
      %c0_76 = arith.constant 0 : index
      %138 = vector.load %arg28[%c1_74, %c0_75, %c0_76] : memref<2x8x1xf32, #tpu.memory_space<vmem>>, vector<1x8x1xf32>
      %139 = vector.shape_cast %138 : vector<1x8x1xf32> to vector<8x1xf32>
      %140 = arith.subf %139, %120 : vector<8x1xf32>
      %141 = math.exp %140 : vector<8x1xf32>
      %142 = arith.mulf %141, %125 : vector<8x1xf32>
      %c0_77 = arith.constant 0 : index
      %c128 = arith.constant 128 : index
      %143 = vector.load %arg18[%c0_77, %c128] : memref<8x256xf32, #tpu.memory_space<vmem>>, vector<8x128xf32>
      %144 = vector.broadcast %142 : vector<8x1xf32> to vector<8x128xf32>
      %145 = arith.mulf %143, %144 : vector<8x128xf32>
      %c1_78 = arith.constant 1 : index
      %c0_79 = arith.constant 0 : index
      %c0_80 = arith.constant 0 : index
      %146 = vector.load %arg29[%c1_78, %c0_79, %c0_80] : memref<2x8x128xf32, #tpu.memory_space<vmem>>, vector<1x8x128xf32>
      %147 = vector.shape_cast %146 : vector<1x8x128xf32> to vector<8x128xf32>
      %148 = arith.addf %145, %147 : vector<8x128xf32>
      %c0_81 = arith.constant 0 : index
      %c128_82 = arith.constant 128 : index
      %149 = vector.load %arg18[%c0_81, %c128_82] : memref<8x256xf32, #tpu.memory_space<vmem>>, vector<8x128xf32>
      tpu.vector_store %arg18[%c0_81, %c128_82], %148 {strides = array<i32>} : memref<8x256xf32, #tpu.memory_space<vmem>>, vector<8x128xf32>,
    } else {
    }
    return
  }
  func.func @transform_0(%arg0: i32, %arg1: memref<1xi32, #tpu.memory_space<smem>>) -> (i32, i32) {
    %c0_i32 = arith.constant 0 : i32
    %c0_i32_0 = arith.constant 0 : i32
    %c0_i32_1 = arith.constant 0 : i32
    return %c0_i32, %c0_i32_0 : i32, i32
  }
  func.func @transform_1(%arg0: i32, %arg1: memref<1xi32, #tpu.memory_space<smem>>) -> (i32, i32) {
    %c0_i32 = arith.constant 0 : i32
    %c0_i32_0 = arith.constant 0 : i32
    %c0_i32_1 = arith.constant 0 : i32
    return %c0_i32, %c0_i32_0 : i32, i32
  }
  func.func @transform_2(%arg0: i32, %arg1: memref<1xi32, #tpu.memory_space<smem>>) -> (i32, i32) {
    %c0_i32 = arith.constant 0 : i32
    %c0_i32_0 = arith.constant 0 : i32
    %c0_i32_1 = arith.constant 0 : i32
    return %c0_i32, %c0_i32_0 : i32, i32
  }
  func.func @transform_3(%arg0: i32, %arg1: memref<1xi32, #tpu.memory_space<smem>>) -> (i32, i32, i32) {
    %c0_i32 = arith.constant 0 : i32
    %c0_i32_0 = arith.constant 0 : i32
    %c0_i32_1 = arith.constant 0 : i32
    %c0_i32_2 = arith.constant 0 : i32
    return %c0_i32, %c0_i32_0, %c0_i32_1 : i32, i32, i32
  }
  func.func @transform_4(%arg0: i32, %arg1: memref<1xi32, #tpu.memory_space<smem>>) -> (i32, i32, i32) {
    %c0_i32 = arith.constant 0 : i32
    %c0_i32_0 = arith.constant 0 : i32
    %c0_i32_1 = arith.constant 0 : i32
    %c0_i32_2 = arith.constant 0 : i32
    return %c0_i32, %c0_i32_0, %c0_i32_1 : i32, i32, i32
  }
  func.func @transform_5(%arg0: i32, %arg1: memref<1xi32, #tpu.memory_space<smem>>) -> (i32, i32) {
    %c0_i32 = arith.constant 0 : i32
    %c0_i32_0 = arith.constant 0 : i32
    %c0_i32_1 = arith.constant 0 : i32
    return %c0_i32, %c0_i32_0 : i32, i32
  }
  func.func @transform_6(%arg0: i32, %arg1: memref<1xi32, #tpu.memory_space<smem>>) -> (i32, i32) {
    %c0_i32 = arith.constant 0 : i32
    %c0_i32_0 = arith.constant 0 : i32
    %c0_i32_1 = arith.constant 0 : i32
    return %c0_i32, %c0_i32_0 : i32, i32
  }
  func.func @transform_7(%arg0: i32, %arg1: memref<1xi32, #tpu.memory_space<smem>>) -> (i32, i32) {
    %c0_i32 = arith.constant 0 : i32
    %c0_i32_0 = arith.constant 0 : i32
    %c0_i32_1 = arith.constant 0 : i32
    return %c0_i32, %c0_i32_0 : i32, i32
  }
  func.func @transform_8(%arg0: i32, %arg1: memref<1xi32, #tpu.memory_space<smem>>) -> (i32, i32) {
    %c0_i32 = arith.constant 0 : i32
    %c0_i32_0 = arith.constant 0 : i32
    %c0_i32_1 = arith.constant 0 : i32
    return %c0_i32, %c0_i32_0 : i32, i32
  }
  func.func @transform_9(%arg0: i32, %arg1: memref<1xi32, #tpu.memory_space<smem>>) -> (i32, i32) {
    %c0_i32 = arith.constant 0 : i32
    %c0_i32_0 = arith.constant 0 : i32
    %c0_i32_1 = arith.constant 0 : i32
    return %c0_i32, %c0_i32_0 : i32, i32
  }
  func.func @transform_10(%arg0: i32, %arg1: memref<1xi32, #tpu.memory_space<smem>>) -> (i32, i32) {
    %c0_i32 = arith.constant 0 : i32
    %c0_i32_0 = arith.constant 0 : i32
    %c0_i32_1 = arith.constant 0 : i32
    return %c0_i32, %c0_i32_0 : i32, i32
  }
  func.func @transform_11(%arg0: i32, %arg1: memref<1xi32, #tpu.memory_space<smem>>) -> (i32, i32) {
    %c0_i32 = arith.constant 0 : i32
    %c0_i32_0 = arith.constant 0 : i32
    %c0_i32_1 = arith.constant 0 : i32
    return %c0_i32, %c0_i32_0 : i32, i32
  }
  func.func @transform_12(%arg0: i32, %arg1: memref<1xi32, #tpu.memory_space<smem>>) -> (i32, i32) {
    %c0_i32 = arith.constant 0 : i32
    %c0_i32_0 = arith.constant 0 : i32
    return %c0_i32, %arg0 : i32, i32
  }
  func.func @transform_13(%arg0: i32, %arg1: memref<1xi32, #tpu.memory_space<smem>>) -> (i32, i32) {
    %c0_i32 = arith.constant 0 : i32
    %c0_i32_0 = arith.constant 0 : i32
    return %c0_i32, %arg0 : i32, i32
  }
  func.func @transform_14(%arg0: i32, %arg1: memref<1xi32, #tpu.memory_space<smem>>) -> (i32, i32) {
    %c0_i32 = arith.constant 0 : i32
    %c0_i32_0 = arith.constant 0 : i32
    %c0_i32_1 = arith.constant 0 : i32
    return %c0_i32, %c0_i32_0 : i32, i32
  }
  func.func @transform_15(%arg0: i32, %arg1: memref<1xi32, #tpu.memory_space<smem>>) -> (i32, i32) {
    %c0_i32 = arith.constant 0 : i32
    %c0_i32_0 = arith.constant 0 : i32
    %c0_i32_1 = arith.constant 0 : i32
    return %c0_i32, %c0_i32_0 : i32, i32
  }
  func.func @transform_16(%arg0: i32, %arg1: memref<1xi32, #tpu.memory_space<smem>>) -> (i32, i32) {
    %c0_i32 = arith.constant 0 : i32
    %c0_i32_0 = arith.constant 0 : i32
    %c0_i32_1 = arith.constant 0 : i32
    return %c0_i32, %c0_i32_0 : i32, i32
  }
  func.func @transform_17(%arg0: i32, %arg1: memref<1xi32, #tpu.memory_space<smem>>) -> (i32, i32) {
    %c0_i32 = arith.constant 0 : i32
    %c0_i32_0 = arith.constant 0 : i32
    %c0_i32_1 = arith.constant 0 : i32
    return %c0_i32, %c0_i32_0 : i32, i32
  }
  func.func @transform_18(%arg0: i32, %arg1: memref<1xi32, #tpu.memory_space<smem>>) -> (i32, i32) {
    %c0_i32 = arith.constant 0 : i32
    %c0_i32_0 = arith.constant 0 : i32
    %c0_i32_1 = arith.constant 0 : i32
    return %c0_i32, %c0_i32_0 : i32, i32
  }
  func.func @transform_19(%arg0: i32, %arg1: memref<1xi32, #tpu.memory_space<smem>>) -> (i32, i32) {
    %c0_i32 = arith.constant 0 : i32
    %c0_i32_0 = arith.constant 0 : i32
    %c0_i32_1 = arith.constant 0 : i32
    return %c0_i32, %c0_i32_0 : i32, i32
  }
  func.func @transform_20(%arg0: i32, %arg1: memref<1xi32, #tpu.memory_space<smem>>) -> (i32, i32, i32) {
    %c0_i32 = arith.constant 0 : i32
    %c0_i32_0 = arith.constant 0 : i32
    %c0_i32_1 = arith.constant 0 : i32
    %c0_i32_2 = arith.constant 0 : i32
    return %c0_i32, %c0_i32_0, %c0_i32_1 : i32, i32, i32
  }
}

</mosaic_0001>

<llo_original>
// kernel: step.1
$region0: #{step.1}
  #allocation0 [shape = 'u32[]', space=smem, size = 0x4, offset = 0x4, fixed_abs, tag = 'smem constant byte address 0x4 - core index']
  #allocation1 [shape = 'u32[72,128]{1,0:T(1,128)}', space=vmem, size = 0x9000, scoped, tag = 'internal scratch']
  #allocation2 [shape = 'bf16[8,96]{1,0:T(8,128)(2,1)}', space=vmem, size = 0x800, scoped, tag = 'scratch operand']
  #allocation3 [shape = 'f32[8,8]{1,0:T(8,128)}', space=vmem, size = 0x1000, scoped, tag = 'scratch operand']
  #allocation4 [shape = 'f32[8,1]{1,0:T(8,128)}', space=vmem, size = 0x1000, scoped, tag = 'scratch operand']
  #allocation5 [shape = 'f32[8,1]{1,0:T(8,128)}', space=vmem, size = 0x1000, scoped, tag = 'scratch operand']
  #allocation6 [shape = 'f32[8,1]{1,0:T(8,128)}', space=vmem, size = 0x1000, scoped, tag = 'scratch operand']
  #allocation7 [shape = 'f32[2,8,1]{2,1,0:T(8,128)}', space=vmem, size = 0x2000, scoped, tag = 'scratch operand']
  #allocation8 [shape = 'f32[2,8,128]{2,1,0:T(8,128)}', space=vmem, size = 0x2000, scoped, tag = 'scratch operand']
  #allocation9 [shape = 's32[1]{0}', space=sflag, size = 0x4, scoped, tag = 'scoped memory for step.1']
  #allocation10 [shape = 's32[1]{0:T(128)S(6)}', space=smem, size = 0x200, scoped, tag = 'prefetched SMEM operand 0']
  #allocation11 [shape = 'f32[1,1]{1,0:T(1,128)S(1)}', space=vmem, size = 0x200, scoped, tag = 'scoped memory for step.1']
  %s0 = inlined_call_operand.<no memory space> [shape: s32[1], index: 0, kind: input, shape index: {}]
  %s1 = inlined_call_operand.vmem [shape: f32[8,8], index: 1, kind: input, shape index: {}]
  %s2 = inlined_call_operand.vmem [shape: f32[8,32], index: 2, kind: input, shape index: {}]
  %s3 = inlined_call_operand.vmem [shape: f32[8,32], index: 3, kind: input, shape index: {}]
  %s4 = inlined_call_operand.vmem [shape: f32[8,8,32], index: 4, kind: input, shape index: {}]
  %s5 = inlined_call_operand.vmem [shape: f32[8,4,32], index: 5, kind: input, shape index: {}]
  %s6 = inlined_call_operand.vmem [shape: f32[8,8], index: 6, kind: input, shape index: {}]
  %s7 = inlined_call_operand.vmem [shape: f32[8,8], index: 7, kind: input, shape index: {}]
  %s8 = inlined_call_operand.vmem [shape: s32[8,8], index: 8, kind: input, shape index: {}]
  %s9 = inlined_call_operand.hbm [shape: f32[40,128], index: 9, kind: input, shape index: {}]
  %s10 = inlined_call_operand.vmem [shape: f32[1,128], index: 10, kind: input, shape index: {}]
  %s11 = inlined_call_operand.hbm [shape: f32[32,32], index: 11, kind: input, shape index: {}]
  %s12 = inlined_call_operand.hbm [shape: f32[32,32], index: 12, kind: input, shape index: {}]
  %s13 = inlined_call_operand.vmem [shape: bf16[96,256], index: 13, kind: input, shape index: {}]
  %s14 = inlined_call_operand.vmem [shape: f32[1,256], index: 14, kind: input, shape index: {}]
  %s15 = inlined_call_operand.vmem [shape: f32[1,96], index: 15, kind: input, shape index: {}]
  %s16 = inlined_call_operand.<no memory space> [shape: f32[1,1], index: 16, kind: input, shape index: {}]
  %s17 = inlined_call_operand.vmem [shape: f32[8,256], index: 17, kind: output, shape index: {0}]
  %s18 = inlined_call_operand.vmem [shape: f32[8,32], index: 18, kind: output, shape index: {1}]
  %s19 = inlined_call_operand.vmem [shape: f32[8,32], index: 19, kind: output, shape index: {2}]
  %s20 = inlined_call_operand.vmem [shape: f32[8,8], index: 20, kind: output, shape index: {3}]
  %s21 = inlined_call_operand.vmem [shape: f32[8,4,32], index: 21, kind: output, shape index: {4}]
  %22 = xla_tuple %s17, %s18, %s19, %s20, %s21
  %s23 = sld [smem:[#allocation0]]
  $region190: #{step.1} parent=0
    _
  %s25 = ssub.s32 1, %s23
  %s26 = scalar_select 0, %s25, %s23
  %27 = sst [smem:[#allocation10]] %s0
  %v28 = vstv %s16
  %29 = vst [vmem:[#allocation11] sm:$0x1] %v28
  $region1: #{step.1} parent=0
    #allocation12 [shape = 'u8[20480]{0}', space=vmem, size = 0x5000, scoped, tag = 'input window, operand 9, single buffered']
    #allocation13 [shape = 's32[2]{0}', space=sflag, size = 0x8, scoped, tag = 'scoped memory for step.1']
    #allocation14 [shape = 'u8[16384]{0}', space=vmem, size = 0x4000, scoped, tag = 'input window, operand 11, single buffered']
    #allocation15 [shape = 's32[1]{0}', space=sflag, size = 0x4, scoped, tag = 'scoped memory for step.1']
    #allocation16 [shape = 'u8[16384]{0}', space=vmem, size = 0x4000, scoped, tag = 'input window, operand 12, single buffered']
    #allocation17 [shape = 'u8[49152]{0}', space=vmem, size = 0xc000, scoped, tag = 'input window, operand 13']
    %30 = vsyncpa [#allocation13], 0
    %31 = vsyncpa [#allocation15], 0
    loop: start=0, step=1, limit=4
    $region2: #{step.1} parent=1 // loop_pre_header
      _
    $region3: #{step.1} parent=1 // loop_header
      %s33 = sphi 0, %s37
      %p34 = scmp.ge.s32.totalorder %s33, 4
      %s41 = sphi 0, %s41
      %s43 = sphi 0, %s41
      %s44 = sphi 0, %s43
      %s58 = sphi 0, %s44
      %s62 = sphi 0, %s62
      %s64 = sphi 0, %s62
      %s65 = sphi 0, %s64
      %s79 = sphi 0, %s65
      %s83 = sphi 0, %s83
      %s85 = sphi 0, %s83
      %s86 = sphi 0, %s85
      %s100 = sphi 0, %s86
      %s104 = sphi 0, %s104
      %s106 = sphi 0, %s104
      %s107 = sphi 0, %s106
      %s121 = sphi 0, %s107
      %s125 = sphi 0, %s125
      %s127 = sphi 0, %s125
      %s128 = sphi 0, %s127
      %s142 = sphi 0, %s128
      %s146 = sphi 0, %s146
      %s148 = sphi 0, %s146
      %s149 = sphi 0, %s148
      %s163 = sphi 0, %s149
      %s167 = sphi 0, %s167
      %s169 = sphi 0, %s167
      %s170 = sphi 0, %s169
      %s184 = sphi 0, %s170
      %s188 = sphi 0, %s188
      %s190 = sphi 0, %s188
      %s191 = sphi 0, %s190
      %s205 = sphi 0, %s191
      %s209 = sphi 0, %s209
      %s211 = sphi 0, %s209
      %s212 = sphi 0, %s211
      %s226 = sphi 0, %s212
      %s230 = sphi 0, %s230
      %s232 = sphi 0, %s230
      %s233 = sphi 0, %s232
      %s247 = sphi 0, %s233
      %s251 = sphi 0, %s251
      %s253 = sphi 0, %s251
      %s254 = sphi 0, %s253
      %s268 = sphi 0, %s254
      %s272 = sphi 0, %s272
      %s274 = sphi 0, %s272
      %s275 = sphi 0, %s274
      %s289 = sphi 0, %s275
      %s295 = sphi 0, %s297
      %s298 = sphi 0, %s295
      %s299 = sphi 0, %s298
      %s315 = sphi 0, %s299
      %s321 = sphi 0, %s323
      %s324 = sphi 0, %s321
      %s325 = sphi 0, %s324
      %s341 = sphi 0, %s325
      %s345 = sphi 0, %s345
      %s347 = sphi 0, %s345
      %s348 = sphi 0, %s347
      %s362 = sphi 0, %s348
      %s366 = sphi 0, %s366
      %s368 = sphi 0, %s366
      %s369 = sphi 0, %s368
      %s383 = sphi 0, %s369
      %s387 = sphi 0, %s387
      %s389 = sphi 0, %s387
      %s390 = sphi 0, %s389
      %s404 = sphi 0, %s390
      %s408 = sphi 0, %s408
      %s410 = sphi 0, %s408
      %s411 = sphi 0, %s410
      %s425 = sphi 0, %s411
      %s429 = sphi 0, %s429
      %s431 = sphi 0, %s429
      %s432 = sphi 0, %s431
      %s446 = sphi 0, %s432
      %s450 = sphi 0, %s450
      %s452 = sphi 0, %s450
      %s453 = sphi 0, %s452
      %s467 = sphi 0, %s453
      %s471 = sphi 0, %s471
      %s473 = sphi 0, %s471
      %s474 = sphi 0, %s473
      %s488 = sphi 0, %s474
    $region4: #{step.1} parent=1 // loop_header_branch
      %36 = sbr.rel (%p34) target = $region8
    $region5: #{step.1} parent=1 // loop_body
      %s38 = ssub.s32 %s33, 1
      %s39 = ssub.s32 %s33, 2
      %s40 = sadd.s32 %s33, 1
      %s42 = sadd.s32 %s41, 1
      %p45 = scmp.eq.s32.totalorder %s33, 1
      %p46 = scmp.ne.s32.totalorder %s41, %s43
      %p47 = scmp.eq.s32.totalorder %s33, 0
      %p48 = por %p46, %p47
      %p49 = scmp.ne.s32.totalorder %s41, %s43
      %p50 = scmp.eq.s32.totalorder %s38, 1
      %p51 = por %p49, %p50
      %p52 = scmp.ne.s32.totalorder %s43, %s44
      %p53 = scmp.eq.s32.totalorder %s38, 0
      %p54 = por %p52, %p53
      %p55 = scmp.ne.s32.totalorder %s43, %s44
      %p56 = scmp.eq.s32.totalorder %s39, 1
      %p57 = por %p55, %p56
      %p59 = scmp.ne.s32.totalorder %s44, %s58
      %p60 = scmp.eq.s32.totalorder %s39, 0
      %p61 = por %p59, %p60
      %s63 = sadd.s32 %s62, 1
      %p66 = scmp.eq.s32.totalorder %s33, 1
      %p67 = scmp.ne.s32.totalorder %s62, %s64
      %p68 = scmp.eq.s32.totalorder %s33, 0
      %p69 = por %p67, %p68
      %p70 = scmp.ne.s32.totalorder %s62, %s64
      %p71 = scmp.eq.s32.totalorder %s38, 1
      %p72 = por %p70, %p71
      %p73 = scmp.ne.s32.totalorder %s64, %s65
      %p74 = scmp.eq.s32.totalorder %s38, 0
      %p75 = por %p73, %p74
      %p76 = scmp.ne.s32.totalorder %s64, %s65
      %p77 = scmp.eq.s32.totalorder %s39, 1
      %p78 = por %p76, %p77
      %p80 = scmp.ne.s32.totalorder %s65, %s79
      %p81 = scmp.eq.s32.totalorder %s39, 0
      %p82 = por %p80, %p81
      %s84 = sadd.s32 %s83, 1
      %p87 = scmp.eq.s32.totalorder %s33, 1
      %p88 = scmp.ne.s32.totalorder %s83, %s85
      %p89 = scmp.eq.s32.totalorder %s33, 0
      %p90 = por %p88, %p89
      %p91 = scmp.ne.s32.totalorder %s83, %s85
      %p92 = scmp.eq.s32.totalorder %s38, 1
      %p93 = por %p91, %p92
      %p94 = scmp.ne.s32.totalorder %s85, %s86
      %p95 = scmp.eq.s32.totalorder %s38, 0
      %p96 = por %p94, %p95
      %p97 = scmp.ne.s32.totalorder %s85, %s86
      %p98 = scmp.eq.s32.totalorder %s39, 1
      %p99 = por %p97, %p98
      %p101 = scmp.ne.s32.totalorder %s86, %s100
      %p102 = scmp.eq.s32.totalorder %s39, 0
      %p103 = por %p101, %p102
      %s105 = sadd.s32 %s104, 1
      %p108 = scmp.eq.s32.totalorder %s33, 1
      %p109 = scmp.ne.s32.totalorder %s104, %s106
      %p110 = scmp.eq.s32.totalorder %s33, 0
      %p111 = por %p109, %p110
      %p112 = scmp.ne.s32.totalorder %s104, %s106
      %p113 = scmp.eq.s32.totalorder %s38, 1
      %p114 = por %p112, %p113
      %p115 = scmp.ne.s32.totalorder %s106, %s107
      %p116 = scmp.eq.s32.totalorder %s38, 0
      %p117 = por %p115, %p116
      %p118 = scmp.ne.s32.totalorder %s106, %s107
      %p119 = scmp.eq.s32.totalorder %s39, 1
      %p120 = por %p118, %p119
      %p122 = scmp.ne.s32.totalorder %s107, %s121
      %p123 = scmp.eq.s32.totalorder %s39, 0
      %p124 = por %p122, %p123
      %s126 = sadd.s32 %s125, 1
      %p129 = scmp.eq.s32.totalorder %s33, 1
      %p130 = scmp.ne.s32.totalorder %s125, %s127
      %p131 = scmp.eq.s32.totalorder %s33, 0
      %p132 = por %p130, %p131
      %p133 = scmp.ne.s32.totalorder %s125, %s127
      %p134 = scmp.eq.s32.totalorder %s38, 1
      %p135 = por %p133, %p134
      %p136 = scmp.ne.s32.totalorder %s127, %s128
      %p137 = scmp.eq.s32.totalorder %s38, 0
      %p138 = por %p136, %p137
      %p139 = scmp.ne.s32.totalorder %s127, %s128
      %p140 = scmp.eq.s32.totalorder %s39, 1
      %p141 = por %p139, %p140
      %p143 = scmp.ne.s32.totalorder %s128, %s142
      %p144 = scmp.eq.s32.totalorder %s39, 0
      %p145 = por %p143, %p144
      %s147 = sadd.s32 %s146, 1
      %p150 = scmp.eq.s32.totalorder %s33, 1
      %p151 = scmp.ne.s32.totalorder %s146, %s148
      %p152 = scmp.eq.s32.totalorder %s33, 0
      %p153 = por %p151, %p152
      %p154 = scmp.ne.s32.totalorder %s146, %s148
      %p155 = scmp.eq.s32.totalorder %s38, 1
      %p156 = por %p154, %p155
      %p157 = scmp.ne.s32.totalorder %s148, %s149
      %p158 = scmp.eq.s32.totalorder %s38, 0
      %p159 = por %p157, %p158
      %p160 = scmp.ne.s32.totalorder %s148, %s149
      %p161 = scmp.eq.s32.totalorder %s39, 1
      %p162 = por %p160, %p161
      %p164 = scmp.ne.s32.totalorder %s149, %s163
      %p165 = scmp.eq.s32.totalorder %s39, 0
      %p166 = por %p164, %p165
      %s168 = sadd.s32 %s167, 1
      %p171 = scmp.eq.s32.totalorder %s33, 1
      %p172 = scmp.ne.s32.totalorder %s167, %s169
      %p173 = scmp.eq.s32.totalorder %s33, 0
      %p174 = por %p172, %p173
      %p175 = scmp.ne.s32.totalorder %s167, %s169
      %p176 = scmp.eq.s32.totalorder %s38, 1
      %p177 = por %p175, %p176
      %p178 = scmp.ne.s32.totalorder %s169, %s170
      %p179 = scmp.eq.s32.totalorder %s38, 0
      %p180 = por %p178, %p179
      %p181 = scmp.ne.s32.totalorder %s169, %s170
      %p182 = scmp.eq.s32.totalorder %s39, 1
      %p183 = por %p181, %p182
      %p185 = scmp.ne.s32.totalorder %s170, %s184
      %p186 = scmp.eq.s32.totalorder %s39, 0
      %p187 = por %p185, %p186
      %s189 = sadd.s32 %s188, 1
      %p192 = scmp.eq.s32.totalorder %s33, 1
      %p193 = scmp.ne.s32.totalorder %s188, %s190
      %p194 = scmp.eq.s32.totalorder %s33, 0
      %p195 = por %p193, %p194
      %p196 = scmp.ne.s32.totalorder %s188, %s190
      %p197 = scmp.eq.s32.totalorder %s38, 1
      %p198 = por %p196, %p197
      %p199 = scmp.ne.s32.totalorder %s190, %s191
      %p200 = scmp.eq.s32.totalorder %s38, 0
      %p201 = por %p199, %p200
      %p202 = scmp.ne.s32.totalorder %s190, %s191
      %p203 = scmp.eq.s32.totalorder %s39, 1
      %p204 = por %p202, %p203
      %p206 = scmp.ne.s32.totalorder %s191, %s205
      %p207 = scmp.eq.s32.totalorder %s39, 0
      %p208 = por %p206, %p207
      %s210 = sadd.s32 %s209, 1
      %p213 = scmp.eq.s32.totalorder %s33, 1
      %p214 = scmp.ne.s32.totalorder %s209, %s211
      %p215 = scmp.eq.s32.totalorder %s33, 0
      %p216 = por %p214, %p215
      %p217 = scmp.ne.s32.totalorder %s209, %s211
      %p218 = scmp.eq.s32.totalorder %s38, 1
      %p219 = por %p217, %p218
      %p220 = scmp.ne.s32.totalorder %s211, %s212
      %p221 = scmp.eq.s32.totalorder %s38, 0
      %p222 = por %p220, %p221
      %p223 = scmp.ne.s32.totalorder %s211, %s212
      %p224 = scmp.eq.s32.totalorder %s39, 1
      %p225 = por %p223, %p224
      %p227 = scmp.ne.s32.totalorder %s212, %s226
      %p228 = scmp.eq.s32.totalorder %s39, 0
      %p229 = por %p227, %p228
      %s231 = sadd.s32 %s230, 1
      %p234 = scmp.eq.s32.totalorder %s33, 1
      %p235 = scmp.ne.s32.totalorder %s230, %s232
      %p236 = scmp.eq.s32.totalorder %s33, 0
      %p237 = por %p235, %p236
      %p238 = scmp.ne.s32.totalorder %s230, %s232
      %p239 = scmp.eq.s32.totalorder %s38, 1
      %p240 = por %p238, %p239
      %p241 = scmp.ne.s32.totalorder %s232, %s233
      %p242 = scmp.eq.s32.totalorder %s38, 0
      %p243 = por %p241, %p242
      %p244 = scmp.ne.s32.totalorder %s232, %s233
      %p245 = scmp.eq.s32.totalorder %s39, 1
      %p246 = por %p244, %p245
      %p248 = scmp.ne.s32.totalorder %s233, %s247
      %p249 = scmp.eq.s32.totalorder %s39, 0
      %p250 = por %p248, %p249
      %s252 = sadd.s32 %s251, 1
      %p255 = scmp.eq.s32.totalorder %s33, 1
      %p256 = scmp.ne.s32.totalorder %s251, %s253
      %p257 = scmp.eq.s32.totalorder %s33, 0
      %p258 = por %p256, %p257
      %p259 = scmp.ne.s32.totalorder %s251, %s253
      %p260 = scmp.eq.s32.totalorder %s38, 1
      %p261 = por %p259, %p260
      %p262 = scmp.ne.s32.totalorder %s253, %s254
      %p263 = scmp.eq.s32.totalorder %s38, 0
      %p264 = por %p262, %p263
      %p265 = scmp.ne.s32.totalorder %s253, %s254
      %p266 = scmp.eq.s32.totalorder %s39, 1
      %p267 = por %p265, %p266
      %p269 = scmp.ne.s32.totalorder %s254, %s268
      %p270 = scmp.eq.s32.totalorder %s39, 0
      %p271 = por %p269, %p270
      %s273 = sadd.s32 %s272, 1
      %p276 = scmp.eq.s32.totalorder %s33, 1
      %p277 = scmp.ne.s32.totalorder %s272, %s274
      %p278 = scmp.eq.s32.totalorder %s33, 0
      %p279 = por %p277, %p278
      %p280 = scmp.ne.s32.totalorder %s272, %s274
      %p281 = scmp.eq.s32.totalorder %s38, 1
      %p282 = por %p280, %p281
      %p283 = scmp.ne.s32.totalorder %s274, %s275
      %p284 = scmp.eq.s32.totalorder %s38, 0
      %p285 = por %p283, %p284
      %p286 = scmp.ne.s32.totalorder %s274, %s275
      %p287 = scmp.eq.s32.totalorder %s39, 1
      %p288 = por %p286, %p287
      %p290 = scmp.ne.s32.totalorder %s275, %s289
      %p291 = scmp.eq.s32.totalorder %s39, 0
      %p292 = por %p290, %p291
      %s293 = ssub.s32 %s33, %s40
      %p294 = scmp.eq.s32.totalorder %s293, 0
      %s296 = sadd.s32 %s295, 1
      %s297 = scalar_select %p294, %s295, %s296
      %p300 = pneg %p294
      %p301 = scmp.eq.s32.totalorder %s33, 1
      %p302 = por %p300, %p301
      %p303 = scmp.ne.s32.totalorder %s295, %s298
      %p304 = scmp.eq.s32.totalorder %s33, 0
      %p305 = por %p303, %p304
      %p306 = scmp.ne.s32.totalorder %s295, %s298
      %p307 = scmp.eq.s32.totalorder %s38, 1
      %p308 = por %p306, %p307
      %p309 = scmp.ne.s32.totalorder %s298, %s299
      %p310 = scmp.eq.s32.totalorder %s38, 0
      %p311 = por %p309, %p310
      %p312 = scmp.ne.s32.totalorder %s298, %s299
      %p313 = scmp.eq.s32.totalorder %s39, 1
      %p314 = por %p312, %p313
      %p316 = scmp.ne.s32.totalorder %s299, %s315
      %p317 = scmp.eq.s32.totalorder %s39, 0
      %p318 = por %p316, %p317
      %s319 = ssub.s32 %s33, %s40
      %p320 = scmp.eq.s32.totalorder %s319, 0
      %s322 = sadd.s32 %s321, 1
      %s323 = scalar_select %p320, %s321, %s322
      %p326 = pneg %p320
      %p327 = scmp.eq.s32.totalorder %s33, 1
      %p328 = por %p326, %p327
      %p329 = scmp.ne.s32.totalorder %s321, %s324
      %p330 = scmp.eq.s32.totalorder %s33, 0
      %p331 = por %p329, %p330
      %p332 = scmp.ne.s32.totalorder %s321, %s324
      %p333 = scmp.eq.s32.totalorder %s38, 1
      %p334 = por %p332, %p333
      %p335 = scmp.ne.s32.totalorder %s324, %s325
      %p336 = scmp.eq.s32.totalorder %s38, 0
      %p337 = por %p335, %p336
      %p338 = scmp.ne.s32.totalorder %s324, %s325
      %p339 = scmp.eq.s32.totalorder %s39, 1
      %p340 = por %p338, %p339
      %p342 = scmp.ne.s32.totalorder %s325, %s341
      %p343 = scmp.eq.s32.totalorder %s39, 0
      %p344 = por %p342, %p343
      %s346 = sadd.s32 %s345, 1
      %p349 = scmp.eq.s32.totalorder %s33, 1
      %p350 = scmp.ne.s32.totalorder %s345, %s347
      %p351 = scmp.eq.s32.totalorder %s33, 0
      %p352 = por %p350, %p351
      %p353 = scmp.ne.s32.totalorder %s345, %s347
      %p354 = scmp.eq.s32.totalorder %s38, 1
      %p355 = por %p353, %p354
      %p356 = scmp.ne.s32.totalorder %s347, %s348
      %p357 = scmp.eq.s32.totalorder %s38, 0
      %p358 = por %p356, %p357
      %p359 = scmp.ne.s32.totalorder %s347, %s348
      %p360 = scmp.eq.s32.totalorder %s39, 1
      %p361 = por %p359, %p360
      %p363 = scmp.ne.s32.totalorder %s348, %s362
      %p364 = scmp.eq.s32.totalorder %s39, 0
      %p365 = por %p363, %p364
      %s367 = sadd.s32 %s366, 1
      %p370 = scmp.eq.s32.totalorder %s33, 1
      %p371 = scmp.ne.s32.totalorder %s366, %s368
      %p372 = scmp.eq.s32.totalorder %s33, 0
      %p373 = por %p371, %p372
      %p374 = scmp.ne.s32.totalorder %s366, %s368
      %p375 = scmp.eq.s32.totalorder %s38, 1
      %p376 = por %p374, %p375
      %p377 = scmp.ne.s32.totalorder %s368, %s369
      %p378 = scmp.eq.s32.totalorder %s38, 0
      %p379 = por %p377, %p378
      %p380 = scmp.ne.s32.totalorder %s368, %s369
      %p381 = scmp.eq.s32.totalorder %s39, 1
      %p382 = por %p380, %p381
      %p384 = scmp.ne.s32.totalorder %s369, %s383
      %p385 = scmp.eq.s32.totalorder %s39, 0
      %p386 = por %p384, %p385
      %s388 = sadd.s32 %s387, 1
      %p391 = scmp.eq.s32.totalorder %s33, 1
      %p392 = scmp.ne.s32.totalorder %s387, %s389
      %p393 = scmp.eq.s32.totalorder %s33, 0
      %p394 = por %p392, %p393
      %p395 = scmp.ne.s32.totalorder %s387, %s389
      %p396 = scmp.eq.s32.totalorder %s38, 1
      %p397 = por %p395, %p396
      %p398 = scmp.ne.s32.totalorder %s389, %s390
      %p399 = scmp.eq.s32.totalorder %s38, 0
      %p400 = por %p398, %p399
      %p401 = scmp.ne.s32.totalorder %s389, %s390
      %p402 = scmp.eq.s32.totalorder %s39, 1
      %p403 = por %p401, %p402
      %p405 = scmp.ne.s32.totalorder %s390, %s404
      %p406 = scmp.eq.s32.totalorder %s39, 0
      %p407 = por %p405, %p406
      %s409 = sadd.s32 %s408, 1
      %p412 = scmp.eq.s32.totalorder %s33, 1
      %p413 = scmp.ne.s32.totalorder %s408, %s410
      %p414 = scmp.eq.s32.totalorder %s33, 0
      %p415 = por %p413, %p414
      %p416 = scmp.ne.s32.totalorder %s408, %s410
      %p417 = scmp.eq.s32.totalorder %s38, 1
      %p418 = por %p416, %p417
      %p419 = scmp.ne.s32.totalorder %s410, %s411
      %p420 = scmp.eq.s32.totalorder %s38, 0
      %p421 = por %p419, %p420
      %p422 = scmp.ne.s32.totalorder %s410, %s411
      %p423 = scmp.eq.s32.totalorder %s39, 1
      %p424 = por %p422, %p423
      %p426 = scmp.ne.s32.totalorder %s411, %s425
      %p427 = scmp.eq.s32.totalorder %s39, 0
      %p428 = por %p426, %p427
      %s430 = sadd.s32 %s429, 1
      %p433 = scmp.eq.s32.totalorder %s33, 1
      %p434 = scmp.ne.s32.totalorder %s429, %s431
      %p435 = scmp.eq.s32.totalorder %s33, 0
      %p436 = por %p434, %p435
      %p437 = scmp.ne.s32.totalorder %s429, %s431
      %p438 = scmp.eq.s32.totalorder %s38, 1
      %p439 = por %p437, %p438
      %p440 = scmp.ne.s32.totalorder %s431, %s432
      %p441 = scmp.eq.s32.totalorder %s38, 0
      %p442 = por %p440, %p441
      %p443 = scmp.ne.s32.totalorder %s431, %s432
      %p444 = scmp.eq.s32.totalorder %s39, 1
      %p445 = por %p443, %p444
      %p447 = scmp.ne.s32.totalorder %s432, %s446
      %p448 = scmp.eq.s32.totalorder %s39, 0
      %p449 = por %p447, %p448
      %s451 = sadd.s32 %s450, 1
      %p454 = scmp.eq.s32.totalorder %s33, 1
      %p455 = scmp.ne.s32.totalorder %s450, %s452
      %p456 = scmp.eq.s32.totalorder %s33, 0
      %p457 = por %p455, %p456
      %p458 = scmp.ne.s32.totalorder %s450, %s452
      %p459 = scmp.eq.s32.totalorder %s38, 1
      %p460 = por %p458, %p459
      %p461 = scmp.ne.s32.totalorder %s452, %s453
      %p462 = scmp.eq.s32.totalorder %s38, 0
      %p463 = por %p461, %p462
      %p464 = scmp.ne.s32.totalorder %s452, %s453
      %p465 = scmp.eq.s32.totalorder %s39, 1
      %p466 = por %p464, %p465
      %p468 = scmp.ne.s32.totalorder %s453, %s467
      %p469 = scmp.eq.s32.totalorder %s39, 0
      %p470 = por %p468, %p469
      %s472 = sadd.s32 %s471, 1
      %p475 = scmp.eq.s32.totalorder %s33, 1
      %p476 = scmp.ne.s32.totalorder %s471, %s473
      %p477 = scmp.eq.s32.totalorder %s33, 0
      %p478 = por %p476, %p477
      %p479 = scmp.ne.s32.totalorder %s471, %s473
      %p480 = scmp.eq.s32.totalorder %s38, 1
      %p481 = por %p479, %p480
      %p482 = scmp.ne.s32.totalorder %s473, %s474
      %p483 = scmp.eq.s32.totalorder %s38, 0
      %p484 = por %p482, %p483
      %p485 = scmp.ne.s32.totalorder %s473, %s474
      %p486 = scmp.eq.s32.totalorder %s39, 1
      %p487 = por %p485, %p486
      %p489 = scmp.ne.s32.totalorder %s474, %s488
      %p490 = scmp.eq.s32.totalorder %s39, 0
      %p491 = por %p489, %p490
      %p492 = scmp.le.s32.totalorder 1, %s33
      %p493 = scmp.lt.s32.totalorder %s33, 3
      %p494 = pnand %p492, %p493
      %p495 = pneg %p494
      // Predicated region
      $region9: #{step.1} parent=5 // pred_check
        _
      $region10: #{step.1} parent=5 // pred_check_branch
        %497 = sbr.rel (%p494) target = $region12
      $region11: #{step.1} parent=5 // pred_region
        %s498 = ssub.s32 %s33, 1
        // Predicated region
        $region13: #{step.1} parent=11 // pred_check
          %p499 = pneg %p54
        $region14: #{step.1} parent=11 // pred_check_branch
          %501 = sbr.rel (%p499) target = $region16
        $region15: #{step.1} parent=11 // pred_region
          _
        $region16: #{step.1} parent=11 // pred_fallthru
          _
        // Predicated region
        $region17: #{step.1} parent=11 // pred_check
          %p502 = pneg %p75
        $region18: #{step.1} parent=11 // pred_check_branch
          %504 = sbr.rel (%p502) target = $region20
        $region19: #{step.1} parent=11 // pred_region
          _
        $region20: #{step.1} parent=11 // pred_fallthru
          _
        // Predicated region
        $region21: #{step.1} parent=11 // pred_check
          %p505 = pneg %p96
        $region22: #{step.1} parent=11 // pred_check_branch
          %507 = sbr.rel (%p505) target = $region24
        $region23: #{step.1} parent=11 // pred_region
          _
        $region24: #{step.1} parent=11 // pred_fallthru
          _
        // Predicated region
        $region25: #{step.1} parent=11 // pred_check
          %p508 = pneg %p117
        $region26: #{step.1} parent=11 // pred_check_branch
          %510 = sbr.rel (%p508) target = $region28
        $region27: #{step.1} parent=11 // pred_region
          _
        $region28: #{step.1} parent=11 // pred_fallthru
          _
        // Predicated region
        $region29: #{step.1} parent=11 // pred_check
          %p511 = pneg %p138
        $region30: #{step.1} parent=11 // pred_check_branch
          %513 = sbr.rel (%p511) target = $region32
        $region31: #{step.1} parent=11 // pred_region
          _
        $region32: #{step.1} parent=11 // pred_fallthru
          _
        // Predicated region
        $region33: #{step.1} parent=11 // pred_check
          %p514 = pneg %p159
        $region34: #{step.1} parent=11 // pred_check_branch
          %516 = sbr.rel (%p514) target = $region36
        $region35: #{step.1} parent=11 // pred_region
          _
        $region36: #{step.1} parent=11 // pred_fallthru
          _
        // Predicated region
        $region37: #{step.1} parent=11 // pred_check
          %p517 = pneg %p180
        $region38: #{step.1} parent=11 // pred_check_branch
          %519 = sbr.rel (%p517) target = $region40
        $region39: #{step.1} parent=11 // pred_region
          _
        $region40: #{step.1} parent=11 // pred_fallthru
          _
        // Predicated region
        $region41: #{step.1} parent=11 // pred_check
          %p520 = pneg %p201
        $region42: #{step.1} parent=11 // pred_check_branch
          %522 = sbr.rel (%p520) target = $region44
        $region43: #{step.1} parent=11 // pred_region
          _
        $region44: #{step.1} parent=11 // pred_fallthru
          _
        // Predicated region
        $region45: #{step.1} parent=11 // pred_check
          %p523 = pneg %p222
        $region46: #{step.1} parent=11 // pred_check_branch
          %525 = sbr.rel (%p523) target = $region48
        $region47: #{step.1} parent=11 // pred_region
          %527 = vsyncadd [#allocation13], 0
          %s528 = sshll.u32 %s9, 4
          %s529 = int_to_ptr.hbm [resolvable:$true] %s528
          %s530 = sshll.u32 [#allocation12], 4
          %s531 = int_to_ptr.vmem [resolvable:$true] %s530
          %536 = dma.hbm_to_vmem [thread:$0]  %s529, 640, %s531, [#allocation13], 128, 128, 8
        $region48: #{step.1} parent=11 // pred_fallthru
          _
        // Predicated region
        $region49: #{step.1} parent=11 // pred_check
          %p537 = pneg %p243
        $region50: #{step.1} parent=11 // pred_check_branch
          %539 = sbr.rel (%p537) target = $region52
        $region51: #{step.1} parent=11 // pred_region
          _
        $region52: #{step.1} parent=11 // pred_fallthru
          _
        // Predicated region
        $region53: #{step.1} parent=11 // pred_check
          %p540 = pneg %p264
        $region54: #{step.1} parent=11 // pred_check_branch
          %542 = sbr.rel (%p540) target = $region56
        $region55: #{step.1} parent=11 // pred_region
          %544 = vsyncadd [#allocation15], 0
          %s545 = sshll.u32 %s11, 4
          %s546 = int_to_ptr.hbm [resolvable:$true] %s545
          %s547 = sshll.u32 [#allocation14], 4
          %s548 = int_to_ptr.vmem [resolvable:$true] %s547
          %553 = dma.hbm_to_vmem [thread:$0]  %s546, 512, %s548, [#allocation15], 128, 128, 8
        $region56: #{step.1} parent=11 // pred_fallthru
          _
        // Predicated region
        $region57: #{step.1} parent=11 // pred_check
          %p554 = pneg %p285
        $region58: #{step.1} parent=11 // pred_check_branch
          %556 = sbr.rel (%p554) target = $region60
        $region59: #{step.1} parent=11 // pred_region
          %558 = vsyncadd [#allocation15], 0
          %s559 = sshll.u32 %s12, 4
          %s560 = int_to_ptr.hbm [resolvable:$true] %s559
          %s561 = sshll.u32 [#allocation16], 4
          %s562 = int_to_ptr.vmem [resolvable:$true] %s561
          %567 = dma.hbm_to_vmem [thread:$0]  %s560, 512, %s562, [#allocation15], 128, 128, 8
        $region60: #{step.1} parent=11 // pred_fallthru
          _
        // Predicated region
        $region61: #{step.1} parent=11 // pred_check
          %p568 = pneg %p358
        $region62: #{step.1} parent=11 // pred_check_branch
          %570 = sbr.rel (%p568) target = $region64
        $region63: #{step.1} parent=11 // pred_region
          _
        $region64: #{step.1} parent=11 // pred_fallthru
          _
        // Predicated region
        $region65: #{step.1} parent=11 // pred_check
          %p571 = pneg %p379
        $region66: #{step.1} parent=11 // pred_check_branch
          %573 = sbr.rel (%p571) target = $region68
        $region67: #{step.1} parent=11 // pred_region
          _
        $region68: #{step.1} parent=11 // pred_fallthru
          _
      $region12: #{step.1} parent=5 // pred_fallthru
        _
      %p574 = scmp.lt.s32.totalorder %s33, 2
      // Predicated region
      $region69: #{step.1} parent=5 // pred_check
        %p575 = pneg %p574
      $region70: #{step.1} parent=5 // pred_check_branch
        %577 = sbr.rel (%p575) target = $region72
      $region71: #{step.1} parent=5 // pred_region
        // Predicated region
        $region73: #{step.1} parent=71 // pred_check
          %p578 = pneg %p305
        $region74: #{step.1} parent=71 // pred_check_branch
          %580 = sbr.rel (%p578) target = $region76
        $region75: #{step.1} parent=71 // pred_region
          %s581 = sand.u32 %s295, 1
          %s582 = sand.u32 %s295, 1
          %s583 = smul.addr %s582, 48
          %s584 = scalar_lea.vmem [#allocation17], %s583
          %s585 = smul.addr %s33, 4
          %s586 = scalar_lea.vmem %s13, %s585
          // Predicated region
          $region77: #{step.1} parent=75 // pred_check
            _
          $region78: #{step.1} parent=75 // pred_check_branch
            %588 = sbr.rel (0) target = $region80
          $region79: #{step.1} parent=75 // pred_region
            // Predicated region
            $region81: #{step.1} parent=79 // pred_check
              _
            $region82: #{step.1} parent=79 // pred_check_branch
              %590 = sbr.rel target = $region84
            $region83: #{step.1} parent=79 // pred_region
              // Predicated region
              $region96: #{step.1} parent=83 // pred_check
                _
              $region97: #{step.1} parent=83 // pred_check_branch
                %628 = sbr.rel (0) target = $region99
              $region98: #{step.1} parent=83 // pred_region
                loop: start=0, step=1, limit=1
                $region100: #{step.1} parent=98 // loop_pre_header
                  _
                $region101: #{step.1} parent=98 // loop_header
                  %s630 = sphi 0, %s634
                  %p631 = scmp.ge.s32.totalorder %s630, 1
                  %s635 = sphi %s586, %s586
                  %s636 = sphi %s584, %s584
                $region102: #{step.1} parent=98 // loop_header_branch
                  %633 = sbr.rel (%p631) target = $region106
                $region103: #{step.1} parent=98 // loop_body
                  _
                $region104: #{step.1} parent=98 // loop_footer
                  %s634 = sadd.s32 1, %s630
                $region105: #{step.1} parent=98 // loop_footer_branch
                  %629 = sbr.rel target = $region101
                $region106: #{step.1} parent=98 // loop_exit
                  _
                %s638 = ssub.s32 16, 1
                loop: start=0, step=1, limit=1
                $region107: #{step.1} parent=98 // loop_pre_header
                  _
                $region108: #{step.1} parent=98 // loop_header
                  %s640 = sphi 0, %s644
                  %p641 = scmp.ge.s32.totalorder %s640, 1
                  %s645 = sphi %s586, %s586
                  %s646 = sphi %s584, %s584
                $region109: #{step.1} parent=98 // loop_header_branch
                  %643 = sbr.rel (%p641) target = $region113
                $region110: #{step.1} parent=98 // loop_body
                  %v647 = vld [vmem:[%s645] sm:%s638]
                  %648 = vst [vmem:[%s646] sm:%s638] %v647
                  %v649 = vld [vmem:[%s645 + $0x8] sm:%s638]
                  %650 = vst [vmem:[%s646 + $0x4] sm:%s638] %v649
                  %v651 = vld [vmem:[%s645 + $0x10] sm:%s638]
                  %652 = vst [vmem:[%s646 + $0x8] sm:%s638] %v651
                  %v653 = vld [vmem:[%s645 + $0x18] sm:%s638]
                  %654 = vst [vmem:[%s646 + $0xc] sm:%s638] %v653
                  %v655 = vld [vmem:[%s645 + $0x20] sm:%s638]
                  %656 = vst [vmem:[%s646 + $0x10] sm:%s638] %v655
                  %v657 = vld [vmem:[%s645 + $0x28] sm:%s638]
                  %658 = vst [vmem:[%s646 + $0x14] sm:%s638] %v657
                  %v659 = vld [vmem:[%s645 + $0x30] sm:%s638]
                  %660 = vst [vmem:[%s646 + $0x18] sm:%s638] %v659
                  %v661 = vld [vmem:[%s645 + $0x38] sm:%s638]
                  %662 = vst [vmem:[%s646 + $0x1c] sm:%s638] %v661
                  %v663 = vld [vmem:[%s645 + $0x40] sm:%s638]
                  %664 = vst [vmem:[%s646 + $0x20] sm:%s638] %v663
                  %v665 = vld [vmem:[%s645 + $0x48] sm:%s638]
                  %666 = vst [vmem:[%s646 + $0x24] sm:%s638] %v665
                  %v667 = vld [vmem:[%s645 + $0x50] sm:%s638]
                  %668 = vst [vmem:[%s646 + $0x28] sm:%s638] %v667
                  %v669 = vld [vmem:[%s645 + $0x58] sm:%s638]
                  %670 = vst [vmem:[%s646 + $0x2c] sm:%s638] %v669
                $region111: #{step.1} parent=98 // loop_footer
                  %s644 = sadd.s32 1, %s640
                $region112: #{step.1} parent=98 // loop_footer_branch
                  %639 = sbr.rel target = $region108
                $region113: #{step.1} parent=98 // loop_exit
                  _
              $region99: #{step.1} parent=83 // pred_fallthru
                _
            $region84: #{step.1} parent=79 // pred_fallthru
              _
            // Predicated region
            $region85: #{step.1} parent=79 // pred_check
              _
            $region86: #{step.1} parent=79 // pred_check_branch
              %592 = sbr.rel (0) target = $region88
            $region87: #{step.1} parent=79 // pred_region
              %s594 = ssub.s32 16, 1
              loop: start=0, step=1, limit=1
              $region89: #{step.1} parent=87 // loop_pre_header
                _
              $region90: #{step.1} parent=87 // loop_header
                %s596 = sphi 0, %s600
                %p597 = scmp.ge.s32.totalorder %s596, 1
                %s601 = sphi %s586, %s586
                %s602 = sphi %s584, %s584
              $region91: #{step.1} parent=87 // loop_header_branch
                %599 = sbr.rel (%p597) target = $region95
              $region92: #{step.1} parent=87 // loop_body
                %v603 = vld [vmem:[%s601] sm:%s594]
                %604 = vst [vmem:[%s602] sm:%s594] %v603
                %v605 = vld [vmem:[%s601 + $0x8] sm:%s594]
                %606 = vst [vmem:[%s602 + $0x4] sm:%s594] %v605
                %v607 = vld [vmem:[%s601 + $0x10] sm:%s594]
                %608 = vst [vmem:[%s602 + $0x8] sm:%s594] %v607
                %v609 = vld [vmem:[%s601 + $0x18] sm:%s594]
                %610 = vst [vmem:[%s602 + $0xc] sm:%s594] %v609
                %v611 = vld [vmem:[%s601 + $0x20] sm:%s594]
                %612 = vst [vmem:[%s602 + $0x10] sm:%s594] %v611
                %v613 = vld [vmem:[%s601 + $0x28] sm:%s594]
                %614 = vst [vmem:[%s602 + $0x14] sm:%s594] %v613
                %v615 = vld [vmem:[%s601 + $0x30] sm:%s594]
                %616 = vst [vmem:[%s602 + $0x18] sm:%s594] %v615
                %v617 = vld [vmem:[%s601 + $0x38] sm:%s594]
                %618 = vst [vmem:[%s602 + $0x1c] sm:%s594] %v617
                %v619 = vld [vmem:[%s601 + $0x40] sm:%s594]
                %620 = vst [vmem:[%s602 + $0x20] sm:%s594] %v619
                %v621 = vld [vmem:[%s601 + $0x48] sm:%s594]
                %622 = vst [vmem:[%s602 + $0x24] sm:%s594] %v621
                %v623 = vld [vmem:[%s601 + $0x50] sm:%s594]
                %624 = vst [vmem:[%s602 + $0x28] sm:%s594] %v623
                %v625 = vld [vmem:[%s601 + $0x58] sm:%s594]
                %626 = vst [vmem:[%s602 + $0x2c] sm:%s594] %v625
              $region93: #{step.1} parent=87 // loop_footer
                %s600 = sadd.s32 1, %s596
              $region94: #{step.1} parent=87 // loop_footer_branch
                %595 = sbr.rel target = $region90
              $region95: #{step.1} parent=87 // loop_exit
                _
            $region88: #{step.1} parent=79 // pred_fallthru
              _
          $region80: #{step.1} parent=75 // pred_fallthru
            _
          %671 = vnop
        $region76: #{step.1} parent=71 // pred_fallthru
          _
        // Predicated region
        $region114: #{step.1} parent=71 // pred_check
          %p672 = pneg %p331
        $region115: #{step.1} parent=71 // pred_check_branch
          %674 = sbr.rel (%p672) target = $region117
        $region116: #{step.1} parent=71 // pred_region
          %p675 = scmp.lt.s32.totalorder %s33, 1
          %s676 = scalar_select %p675, %s33, 1
          %s677 = scalar_lea.vmem %s14, %s676
        $region117: #{step.1} parent=71 // pred_fallthru
          _
      $region72: #{step.1} parent=5 // pred_fallthru
        _
      %p678 = scmp.le.s32.totalorder 1, %s33
      %p679 = scmp.lt.s32.totalorder %s33, 3
      %p680 = pnand %p678, %p679
      %p681 = pneg %p680
      // Predicated region
      $region118: #{step.1} parent=5 // pred_check
        _
      $region119: #{step.1} parent=5 // pred_check_branch
        %683 = sbr.rel (%p680) target = $region121
      $region120: #{step.1} parent=5 // pred_region
        %s684 = ssub.s32 %s33, 1
        // Predicated region
        $region122: #{step.1} parent=120 // pred_check
          %p685 = pneg %p222
        $region123: #{step.1} parent=120 // pred_check_branch
          %687 = sbr.rel (%p685) target = $region125
        $region124: #{step.1} parent=120 // pred_region
          %689 = dma.done [#allocation13], 640
        $region125: #{step.1} parent=120 // pred_fallthru
          _
        // Predicated region
        $region126: #{step.1} parent=120 // pred_check
          %p690 = pneg %p264
        $region127: #{step.1} parent=120 // pred_check_branch
          %692 = sbr.rel (%p690) target = $region129
        $region128: #{step.1} parent=120 // pred_region
          %694 = dma.done [#allocation15], 512
        $region129: #{step.1} parent=120 // pred_fallthru
          _
        // Predicated region
        $region130: #{step.1} parent=120 // pred_check
          %p695 = pneg %p285
        $region131: #{step.1} parent=120 // pred_check_branch
          %697 = sbr.rel (%p695) target = $region133
        $region132: #{step.1} parent=120 // pred_region
          %699 = dma.done [#allocation15], 512
        $region133: #{step.1} parent=120 // pred_fallthru
          _
        %s700 = sand.u32 %s298, 1
        %s701 = sand.u32 %s298, 1
        %s702 = smul.addr %s701, 48
        %s703 = scalar_lea.vmem [#allocation17], %s702
        // Predicated region
        $region134: #{step.1} parent=120 // pred_check
          %p704 = pneg %p311
        $region135: #{step.1} parent=120 // pred_check_branch
          %706 = sbr.rel (%p704) target = $region137
        $region136: #{step.1} parent=120 // pred_region
          _
        $region137: #{step.1} parent=120 // pred_fallthru
          _
        %p707 = pneg %p54
        %p708 = pneg %p51
        %p709 = pneg %p75
        %p710 = pneg %p72
        %p711 = pneg %p96
        %p712 = pneg %p93
        %p713 = pneg %p117
        %p714 = pneg %p114
        %p715 = pneg %p138
        %p716 = pneg %p135
        %p717 = pneg %p159
        %p718 = pneg %p156
        %p719 = pneg %p180
        %p720 = pneg %p177
        %p721 = pneg %p201
        %p722 = pneg %p198
        %p723 = pneg %p222
        %p724 = pneg %p219
        %p725 = pneg %p243
        %p726 = pneg %p240
        %p727 = pneg %p264
        %p728 = pneg %p261
        %p729 = pneg %p285
        %p730 = pneg %p282
        %s731 = sand.u32 %s298, 1
        %s732 = sand.u32 %s298, 1
        %s733 = smul.addr %s732, 48
        %s734 = scalar_lea.vmem [#allocation17], %s733
        %p735 = pneg %p311
        %p736 = pneg %p308
        %p737 = scmp.lt.s32.totalorder %s38, 1
        %s738 = scalar_select %p737, %s38, 1
        %s739 = scalar_lea.vmem %s14, %s738
        %p740 = pneg %p337
        %p741 = pneg %p334
        %p742 = pneg %p358
        %p743 = pneg %p355
        %p744 = pneg %p379
        %p745 = pneg %p376
        %p746 = pneg %p400
        %p747 = pneg %p397
        %p748 = pneg %p421
        %p749 = pneg %p418
        %p750 = pneg %p442
        %p751 = pneg %p439
        %p752 = pneg %p463
        %p753 = pneg %p460
        %p754 = pneg %p484
        %p755 = pneg %p481
        %p756 = scmp.lt.s32.totalorder %s38, 1
        %s757 = scalar_select %p756, %s38, 1
        %s758 = scalar_lea.vmem %s14, %s757
        %p760 = scmp.eq.s32.totalorder %s38, 0
        // Predicated region
        $region138: #{step.1} parent=120 // pred_check
          %p761 = pneg %p760
        $region139: #{step.1} parent=120 // pred_check_branch
          %763 = sbr.rel (%p761) target = $region141
        $region140: #{step.1} parent=120 // pred_region
          %s764 = sld [smem:[#allocation10]]
          %v765 = vld [vmem:[%s1] sm:$0xff]
          %v766 = vld [vmem:[%s2] sm:$0xff]
          %v767 = vld [vmem:[%s3] sm:$0xff]
          %769 = vrot.lane.b32.xlu0 %v766, 8
          %v770 = vpop.permute.xlu0 %769
          %vm772 = vcmask 64512
          %v773 = vsel %vm772, %v765, %v770
          %v774 = vld [vmem:[#allocation12] sm:$0xff]
          %v775 = vld [vmem:[#allocation12 + $0x8] sm:$0xff]
          %v776 = vld [vmem:[#allocation12 + $0x10] sm:$0xff]
          %v777 = vld [vmem:[#allocation12 + $0x18] sm:$0xff]
          %v778 = vld [vmem:[#allocation12 + $0x20] sm:$0xff]
          %v779 = vld [vmem:[%s10] sm:$0x1]
          %v781 = vperm.slane %v779, 0
          %vm783 = vcmask 326656
          %v785 = vsel %vm783, %v773, 0
          %787 = vmatpush.msra.mxu0 0.0
          %788 = vmatpush.msra.mxu0 0.0
          %789 = vmatpush.msra.mxu0 0.0
          %790 = vmatpush.msra.mxu0 0.0
          %791 = vmatpush.msra.mxu0 0.0
          %792 = vmatpush.msra.mxu0 0.0
          %793 = vmatpush.msra.mxu0 0.0
          %794 = vmatpush.msra.mxu0 0.0
          %795 = vmatpush.msra.mxu0 0.0
          %796 = vmatpush.msra.mxu0 0.0
          %797 = vmatpush.msra.mxu0 0.0
          %798 = vmatpush.msra.mxu0 %v778
          %799 = vmatpush.msra.mxu0 %v777
          %800 = vmatpush.msra.mxu0 %v776
          %801 = vmatpush.msra.mxu0 %v775
          %802 = vmatpush.msra.mxu0 %v774
          %803 = vmatmul.f32.gmra.mxu0 %v785
          %v804 = vpop.f32.mrf.mxu0
          %v805 = vadd.f32 %v781, %v804
          %806 = vdwg.mxu0
          %v807 = vsub.f32 0.0, %v805
          %v808 = vmul.f32 %v807, 1.442695
          %v809 = vpow.pop %v808
          %v810 = vadd.f32 %v809, 1.0
          %v811 = vrcp.pop %v810
          %v812 = vmul.f32 %v810, %v811
          %v813 = vsub.f32 1.0, %v812
          %v814 = vmul.f32 %v811, %v813
          %v815 = vadd.f32 %v811, %v814
          %vm816 = vweird.f32 %v810
          %vm817 = vweird.f32 %v811
          %vm818 = vmor %vm816, %vm817
          %v819 = vsel %vm818, %v811, %v815
          %v820 = vand.u32 2147483647, %v810
          %vm821 = vcmp.eq.f32.partialorder %v820, 8.507059e+37
          %v822 = vand.u32 %v810, 2147483648
          %v823 = vor.u32 1.1754944e-38, %v822
          %v824 = vsel %vm821, %v823, %v819
          %v825 = vmul.f32 1.0, %v824
          %v826 = vtanh.pop %v805
          %828 = vrot.lane.b32.xlu0 %v767, 32
          %v829 = vpop.permute.xlu0 %828
          %v831 = vmul.f32 %v825, %v829
          %833 = vrot.lane.b32.xlu0 %v826, 64
          %v834 = vpop.permute.xlu0 %833
          %v836 = vmul.f32 %v825, %v834
          %838 = vrot.lane.b32.xlu0 %v836, 32
          %v839 = vpop.permute.xlu0 %838
          %v841 = vadd.f32 %v831, %v839
          %v842 = vtanh.pop %v841
          %844 = vrot.lane.b32.xlu0 %v842, 64
          %v845 = vpop.permute.xlu0 %844
          %v847 = vmul.f32 %v825, %v845
          %849 = vrot.lane.b32.xlu0 %v847, 32
          %v850 = vpop.permute.xlu0 %849
          %vm852 = vcmask 261120
          %853 = vst.msk [vmem:[%s18] sm:$0xff] %vm852, %v850
          %855 = vrot.lane.b32.xlu0 %v841, 96
          %v856 = vpop.permute.xlu0 %855
          %858 = vst.msk [vmem:[%s19] sm:$0xff] %vm852, %v856
          %v859 = vld [vmem:[%s4] sm:$0xff]
          %v860 = vld [vmem:[%s4 + $0x8] sm:$0xff]
          %v861 = vld [vmem:[%s4 + $0x10] sm:$0xff]
          %v862 = vld [vmem:[%s4 + $0x18] sm:$0xff]
          %v863 = vld [vmem:[%s4 + $0x20] sm:$0xff]
          %v864 = vld [vmem:[%s4 + $0x28] sm:$0xff]
          %v865 = vld [vmem:[%s4 + $0x30] sm:$0xff]
          %v866 = vld [vmem:[%s4 + $0x38] sm:$0xff]
          %v867 = vld [vmem:[#allocation14] sm:$0xff]
          %v868 = vld [vmem:[#allocation14 + $0x8] sm:$0xff]
          %v869 = vld [vmem:[#allocation14 + $0x10] sm:$0xff]
          %v870 = vld [vmem:[#allocation14 + $0x18] sm:$0xff]
          %v871 = vsel %vm852, %v850, 0
          %873 = vmatpush.msra.mxu0 0.0
          %874 = vmatpush.msra.mxu0 0.0
          %875 = vmatpush.msra.mxu0 0.0
          %876 = vmatpush.msra.mxu0 0.0
          %877 = vmatpush.msra.mxu0 0.0
          %878 = vmatpush.msra.mxu0 0.0
          %879 = vmatpush.msra.mxu0 0.0
          %880 = vmatpush.msra.mxu0 0.0
          %881 = vmatpush.msra.mxu0 0.0
          %882 = vmatpush.msra.mxu0 0.0
          %883 = vmatpush.msra.mxu0 0.0
          %884 = vmatpush.msra.mxu0 0.0
          %885 = vmatpush.msra.mxu0 %v870
          %886 = vmatpush.msra.mxu0 %v869
          %887 = vmatpush.msra.mxu0 %v868
          %888 = vmatpush.msra.mxu0 %v867
          %889 = vmatmul.f32.gmra.mxu0 %v871
          %v890 = vpop.f32.mrf.mxu0
          %v891 = vadd.f32 0.0, %v890
          %892 = vdwg.mxu0
          %v894 = vrot.slane %v891, 1
          %v895 = vrot.slane %v891, 2
          %v896 = vrot.slane %v891, 3
          %v897 = vrot.slane %v891, 4
          %v898 = vrot.slane %v891, 5
          %v899 = vrot.slane %v891, 6
          %v900 = vrot.slane %v891, 7
          %v901 = vsel %vm852, %v891, 0
          %v904 = vsel %vm852, %v859, 0
          %906 = vmatpush.xpose.msra.mxu0 0.0
          %907 = vmatpush.xpose.msra.mxu0 0.0
          %908 = vmatpush.xpose.msra.mxu0 0.0
          %909 = vmatpush.xpose.msra.mxu0 0.0
          %910 = vmatpush.xpose.msra.mxu0 0.0
          %911 = vmatpush.xpose.msra.mxu0 0.0
          %912 = vmatpush.xpose.msra.mxu0 0.0
          %913 = vmatpush.xpose.msra.mxu0 0.0
          %914 = vmatpush.xpose.msra.mxu0 0.0
          %915 = vmatpush.xpose.msra.mxu0 0.0
          %916 = vmatpush.xpose.msra.mxu0 0.0
          %917 = vmatpush.xpose.msra.mxu0 0.0
          %918 = vmatpush.xpose.msra.mxu0 0.0
          %919 = vmatpush.xpose.msra.mxu0 0.0
          %920 = vmatpush.xpose.msra.mxu0 0.0
          %921 = vmatpush.xpose.msra.mxu0 %v904
          %922 = vmatmul.f32.gmra.mxu0 %v901
          %v923 = vpop.f32.mrf.mxu0
          %v924 = vadd.f32 0.0, %v923
          %925 = vdwg.mxu0
          %v926 = vsel %vm852, %v894, 0
          %v929 = vsel %vm852, %v860, 0
          %931 = vmatpush.xpose.msra.mxu0 0.0
          %932 = vmatpush.xpose.msra.mxu0 0.0
          %933 = vmatpush.xpose.msra.mxu0 0.0
          %934 = vmatpush.xpose.msra.mxu0 0.0
          %935 = vmatpush.xpose.msra.mxu0 0.0
          %936 = vmatpush.xpose.msra.mxu0 0.0
          %937 = vmatpush.xpose.msra.mxu0 0.0
          %938 = vmatpush.xpose.msra.mxu0 0.0
          %939 = vmatpush.xpose.msra.mxu0 0.0
          %940 = vmatpush.xpose.msra.mxu0 0.0
          %941 = vmatpush.xpose.msra.mxu0 0.0
          %942 = vmatpush.xpose.msra.mxu0 0.0
          %943 = vmatpush.xpose.msra.mxu0 0.0
          %944 = vmatpush.xpose.msra.mxu0 0.0
          %945 = vmatpush.xpose.msra.mxu0 0.0
          %946 = vmatpush.xpose.msra.mxu0 %v929
          %947 = vmatmul.f32.gmra.mxu0 %v926
          %v948 = vpop.f32.mrf.mxu0
          %v949 = vadd.f32 0.0, %v948
          %950 = vdwg.mxu0
          %v951 = vsel %vm852, %v895, 0
          %v954 = vsel %vm852, %v861, 0
          %956 = vmatpush.xpose.msra.mxu0 0.0
          %957 = vmatpush.xpose.msra.mxu0 0.0
          %958 = vmatpush.xpose.msra.mxu0 0.0
          %959 = vmatpush.xpose.msra.mxu0 0.0
          %960 = vmatpush.xpose.msra.mxu0 0.0
          %961 = vmatpush.xpose.msra.mxu0 0.0
          %962 = vmatpush.xpose.msra.mxu0 0.0
          %963 = vmatpush.xpose.msra.mxu0 0.0
          %964 = vmatpush.xpose.msra.mxu0 0.0
          %965 = vmatpush.xpose.msra.mxu0 0.0
          %966 = vmatpush.xpose.msra.mxu0 0.0
          %967 = vmatpush.xpose.msra.mxu0 0.0
          %968 = vmatpush.xpose.msra.mxu0 0.0
          %969 = vmatpush.xpose.msra.mxu0 0.0
          %970 = vmatpush.xpose.msra.mxu0 0.0
          %971 = vmatpush.xpose.msra.mxu0 %v954
          %972 = vmatmul.f32.gmra.mxu0 %v951
          %v973 = vpop.f32.mrf.mxu0
          %v974 = vadd.f32 0.0, %v973
          %975 = vdwg.mxu0
          %v976 = vsel %vm852, %v896, 0
          %v979 = vsel %vm852, %v862, 0
          %981 = vmatpush.xpose.msra.mxu0 0.0
          %982 = vmatpush.xpose.msra.mxu0 0.0
          %983 = vmatpush.xpose.msra.mxu0 0.0
          %984 = vmatpush.xpose.msra.mxu0 0.0
          %985 = vmatpush.xpose.msra.mxu0 0.0
          %986 = vmatpush.xpose.msra.mxu0 0.0
          %987 = vmatpush.xpose.msra.mxu0 0.0
          %988 = vmatpush.xpose.msra.mxu0 0.0
          %989 = vmatpush.xpose.msra.mxu0 0.0
          %990 = vmatpush.xpose.msra.mxu0 0.0
          %991 = vmatpush.xpose.msra.mxu0 0.0
          %992 = vmatpush.xpose.msra.mxu0 0.0
          %993 = vmatpush.xpose.msra.mxu0 0.0
          %994 = vmatpush.xpose.msra.mxu0 0.0
          %995 = vmatpush.xpose.msra.mxu0 0.0
          %996 = vmatpush.xpose.msra.mxu0 %v979
          %997 = vmatmul.f32.gmra.mxu0 %v976
          %v998 = vpop.f32.mrf.mxu0
          %v999 = vadd.f32 0.0, %v998
          %1000 = vdwg.mxu0
          %v1001 = vsel %vm852, %v897, 0
          %v1004 = vsel %vm852, %v863, 0
          %1006 = vmatpush.xpose.msra.mxu0 0.0
          %1007 = vmatpush.xpose.msra.mxu0 0.0
          %1008 = vmatpush.xpose.msra.mxu0 0.0
          %1009 = vmatpush.xpose.msra.mxu0 0.0
          %1010 = vmatpush.xpose.msra.mxu0 0.0
          %1011 = vmatpush.xpose.msra.mxu0 0.0
          %1012 = vmatpush.xpose.msra.mxu0 0.0
          %1013 = vmatpush.xpose.msra.mxu0 0.0
          %1014 = vmatpush.xpose.msra.mxu0 0.0
          %1015 = vmatpush.xpose.msra.mxu0 0.0
          %1016 = vmatpush.xpose.msra.mxu0 0.0
          %1017 = vmatpush.xpose.msra.mxu0 0.0
          %1018 = vmatpush.xpose.msra.mxu0 0.0
          %1019 = vmatpush.xpose.msra.mxu0 0.0
          %1020 = vmatpush.xpose.msra.mxu0 0.0
          %1021 = vmatpush.xpose.msra.mxu0 %v1004
          %1022 = vmatmul.f32.gmra.mxu0 %v1001
          %v1023 = vpop.f32.mrf.mxu0
          %v1024 = vadd.f32 0.0, %v1023
          %1025 = vdwg.mxu0
          %v1026 = vsel %vm852, %v898, 0
          %v1029 = vsel %vm852, %v864, 0
          %1031 = vmatpush.xpose.msra.mxu0 0.0
          %1032 = vmatpush.xpose.msra.mxu0 0.0
          %1033 = vmatpush.xpose.msra.mxu0 0.0
          %1034 = vmatpush.xpose.msra.mxu0 0.0
          %1035 = vmatpush.xpose.msra.mxu0 0.0
          %1036 = vmatpush.xpose.msra.mxu0 0.0
          %1037 = vmatpush.xpose.msra.mxu0 0.0
          %1038 = vmatpush.xpose.msra.mxu0 0.0
          %1039 = vmatpush.xpose.msra.mxu0 0.0
          %1040 = vmatpush.xpose.msra.mxu0 0.0
          %1041 = vmatpush.xpose.msra.mxu0 0.0
          %1042 = vmatpush.xpose.msra.mxu0 0.0
          %1043 = vmatpush.xpose.msra.mxu0 0.0
          %1044 = vmatpush.xpose.msra.mxu0 0.0
          %1045 = vmatpush.xpose.msra.mxu0 0.0
          %1046 = vmatpush.xpose.msra.mxu0 %v1029
          %1047 = vmatmul.f32.gmra.mxu0 %v1026
          %v1048 = vpop.f32.mrf.mxu0
          %v1049 = vadd.f32 0.0, %v1048
          %1050 = vdwg.mxu0
          %v1051 = vsel %vm852, %v899, 0
          %v1054 = vsel %vm852, %v865, 0
          %1056 = vmatpush.xpose.msra.mxu0 0.0
          %1057 = vmatpush.xpose.msra.mxu0 0.0
          %1058 = vmatpush.xpose.msra.mxu0 0.0
          %1059 = vmatpush.xpose.msra.mxu0 0.0
          %1060 = vmatpush.xpose.msra.mxu0 0.0
          %1061 = vmatpush.xpose.msra.mxu0 0.0
          %1062 = vmatpush.xpose.msra.mxu0 0.0
          %1063 = vmatpush.xpose.msra.mxu0 0.0
          %1064 = vmatpush.xpose.msra.mxu0 0.0
          %1065 = vmatpush.xpose.msra.mxu0 0.0
          %1066 = vmatpush.xpose.msra.mxu0 0.0
          %1067 = vmatpush.xpose.msra.mxu0 0.0
          %1068 = vmatpush.xpose.msra.mxu0 0.0
          %1069 = vmatpush.xpose.msra.mxu0 0.0
          %1070 = vmatpush.xpose.msra.mxu0 0.0
          %1071 = vmatpush.xpose.msra.mxu0 %v1054
          %1072 = vmatmul.f32.gmra.mxu0 %v1051
          %v1073 = vpop.f32.mrf.mxu0
          %v1074 = vadd.f32 0.0, %v1073
          %1075 = vdwg.mxu0
          %v1076 = vsel %vm852, %v900, 0
          %v1079 = vsel %vm852, %v866, 0
          %1081 = vmatpush.xpose.msra.mxu0 0.0
          %1082 = vmatpush.xpose.msra.mxu0 0.0
          %1083 = vmatpush.xpose.msra.mxu0 0.0
          %1084 = vmatpush.xpose.msra.mxu0 0.0
          %1085 = vmatpush.xpose.msra.mxu0 0.0
          %1086 = vmatpush.xpose.msra.mxu0 0.0
          %1087 = vmatpush.xpose.msra.mxu0 0.0
          %1088 = vmatpush.xpose.msra.mxu0 0.0
          %1089 = vmatpush.xpose.msra.mxu0 0.0
          %1090 = vmatpush.xpose.msra.mxu0 0.0
          %1091 = vmatpush.xpose.msra.mxu0 0.0
          %1092 = vmatpush.xpose.msra.mxu0 0.0
          %1093 = vmatpush.xpose.msra.mxu0 0.0
          %1094 = vmatpush.xpose.msra.mxu0 0.0
          %1095 = vmatpush.xpose.msra.mxu0 0.0
          %1096 = vmatpush.xpose.msra.mxu0 %v1079
          %1097 = vmatmul.f32.gmra.mxu0 %v1076
          %v1098 = vpop.f32.mrf.mxu0
          %v1099 = vadd.f32 0.0, %v1098
          %1100 = vdwg.mxu0
          %v1101 = vmul.f32 %v924, 1.442695
          %v1102 = vpow.pop %v1101
          %v1103 = vmul.f32 %v949, 1.442695
          %v1104 = vpow.pop %v1103
          %v1105 = vmul.f32 %v974, 1.442695
          %v1106 = vpow.pop %v1105
          %v1107 = vmul.f32 %v999, 1.442695
          %v1108 = vpow.pop %v1107
          %v1109 = vmul.f32 %v1024, 1.442695
          %v1110 = vpow.pop %v1109
          %v1111 = vmul.f32 %v1049, 1.442695
          %v1112 = vpow.pop %v1111
          %v1113 = vmul.f32 %v1074, 1.442695
          %v1114 = vpow.pop %v1113
          %v1115 = vmul.f32 %v1099, 1.442695
          %v1116 = vpow.pop %v1115
          %p1117 = scmp.eq.s32.totalorder %s764, 0
          %v1118 = vld [vmem:[%s6] sm:$0xff]
          %s1119 = scalar_select %p1117, 1, 0
          %v1120 = vstv %s1119
          %vm1121 = vcmp.eq.s32.totalorder %v1120, 1
          %v1122 = vsel %vm1121, 1.0, %v1118
          %v1124 = vrot.slane %v1122, 1
          %v1125 = vrot.slane %v1122, 2
          %v1126 = vrot.slane %v1122, 3
          %v1127 = vrot.slane %v1122, 4
          %v1128 = vrot.slane %v1122, 5
          %v1129 = vrot.slane %v1122, 6
          %v1130 = vrot.slane %v1122, 7
          %v1139 = vrcp.pop %v1122
          %v1140 = vmul.f32 %v1122, %v1139
          %v1141 = vsub.f32 1.0, %v1140
          %v1142 = vmul.f32 %v1139, %v1141
          %v1143 = vadd.f32 %v1139, %v1142
          %vm1144 = vweird.f32 %v1122
          %vm1145 = vweird.f32 %v1139
          %vm1146 = vmor %vm1144, %vm1145
          %v1147 = vsel %vm1146, %v1139, %v1143
          %v1148 = vand.u32 2147483647, %v1122
          %vm1149 = vcmp.eq.f32.partialorder %v1148, 8.507059e+37
          %v1150 = vand.u32 %v1122, 2147483648
          %v1151 = vor.u32 1.1754944e-38, %v1150
          %v1152 = vsel %vm1149, %v1151, %v1147
          %v1153 = vmul.f32 %v1102, %v1152
          %v1154 = vrcp.pop %v1124
          %v1155 = vmul.f32 %v1124, %v1154
          %v1156 = vsub.f32 1.0, %v1155
          %v1157 = vmul.f32 %v1154, %v1156
          %v1158 = vadd.f32 %v1154, %v1157
          %vm1159 = vweird.f32 %v1124
          %vm1160 = vweird.f32 %v1154
          %vm1161 = vmor %vm1159, %vm1160
          %v1162 = vsel %vm1161, %v1154, %v1158
          %v1163 = vand.u32 2147483647, %v1124
          %vm1164 = vcmp.eq.f32.partialorder %v1163, 8.507059e+37
          %v1165 = vand.u32 %v1124, 2147483648
          %v1166 = vor.u32 1.1754944e-38, %v1165
          %v1167 = vsel %vm1164, %v1166, %v1162
          %v1168 = vmul.f32 %v1104, %v1167
          %v1169 = vrcp.pop %v1125
          %v1170 = vmul.f32 %v1125, %v1169
          %v1171 = vsub.f32 1.0, %v1170
          %v1172 = vmul.f32 %v1169, %v1171
          %v1173 = vadd.f32 %v1169, %v1172
          %vm1174 = vweird.f32 %v1125
          %vm1175 = vweird.f32 %v1169
          %vm1176 = vmor %vm1174, %vm1175
          %v1177 = vsel %vm1176, %v1169, %v1173
          %v1178 = vand.u32 2147483647, %v1125
          %vm1179 = vcmp.eq.f32.partialorder %v1178, 8.507059e+37
          %v1180 = vand.u32 %v1125, 2147483648
          %v1181 = vor.u32 1.1754944e-38, %v1180
          %v1182 = vsel %vm1179, %v1181, %v1177
          %v1183 = vmul.f32 %v1106, %v1182
          %v1184 = vrcp.pop %v1126
          %v1185 = vmul.f32 %v1126, %v1184
          %v1186 = vsub.f32 1.0, %v1185
          %v1187 = vmul.f32 %v1184, %v1186
          %v1188 = vadd.f32 %v1184, %v1187
          %vm1189 = vweird.f32 %v1126
          %vm1190 = vweird.f32 %v1184
          %vm1191 = vmor %vm1189, %vm1190
          %v1192 = vsel %vm1191, %v1184, %v1188
          %v1193 = vand.u32 2147483647, %v1126
          %vm1194 = vcmp.eq.f32.partialorder %v1193, 8.507059e+37
          %v1195 = vand.u32 %v1126, 2147483648
          %v1196 = vor.u32 1.1754944e-38, %v1195
          %v1197 = vsel %vm1194, %v1196, %v1192
          %v1198 = vmul.f32 %v1108, %v1197
          %v1199 = vrcp.pop %v1127
          %v1200 = vmul.f32 %v1127, %v1199
          %v1201 = vsub.f32 1.0, %v1200
          %v1202 = vmul.f32 %v1199, %v1201
          %v1203 = vadd.f32 %v1199, %v1202
          %vm1204 = vweird.f32 %v1127
          %vm1205 = vweird.f32 %v1199
          %vm1206 = vmor %vm1204, %vm1205
          %v1207 = vsel %vm1206, %v1199, %v1203
          %v1208 = vand.u32 2147483647, %v1127
          %vm1209 = vcmp.eq.f32.partialorder %v1208, 8.507059e+37
          %v1210 = vand.u32 %v1127, 2147483648
          %v1211 = vor.u32 1.1754944e-38, %v1210
          %v1212 = vsel %vm1209, %v1211, %v1207
          %v1213 = vmul.f32 %v1110, %v1212
          %v1214 = vrcp.pop %v1128
          %v1215 = vmul.f32 %v1128, %v1214
          %v1216 = vsub.f32 1.0, %v1215
          %v1217 = vmul.f32 %v1214, %v1216
          %v1218 = vadd.f32 %v1214, %v1217
          %vm1219 = vweird.f32 %v1128
          %vm1220 = vweird.f32 %v1214
          %vm1221 = vmor %vm1219, %vm1220
          %v1222 = vsel %vm1221, %v1214, %v1218
          %v1223 = vand.u32 2147483647, %v1128
          %vm1224 = vcmp.eq.f32.partialorder %v1223, 8.507059e+37
          %v1225 = vand.u32 %v1128, 2147483648
          %v1226 = vor.u32 1.1754944e-38, %v1225
          %v1227 = vsel %vm1224, %v1226, %v1222
          %v1228 = vmul.f32 %v1112, %v1227
          %v1229 = vrcp.pop %v1129
          %v1230 = vmul.f32 %v1129, %v1229
          %v1231 = vsub.f32 1.0, %v1230
          %v1232 = vmul.f32 %v1229, %v1231
          %v1233 = vadd.f32 %v1229, %v1232
          %vm1234 = vweird.f32 %v1129
          %vm1235 = vweird.f32 %v1229
          %vm1236 = vmor %vm1234, %vm1235
          %v1237 = vsel %vm1236, %v1229, %v1233
          %v1238 = vand.u32 2147483647, %v1129
          %vm1239 = vcmp.eq.f32.partialorder %v1238, 8.507059e+37
          %v1240 = vand.u32 %v1129, 2147483648
          %v1241 = vor.u32 1.1754944e-38, %v1240
          %v1242 = vsel %vm1239, %v1241, %v1237
          %v1243 = vmul.f32 %v1114, %v1242
          %v1244 = vrcp.pop %v1130
          %v1245 = vmul.f32 %v1130, %v1244
          %v1246 = vsub.f32 1.0, %v1245
          %v1247 = vmul.f32 %v1244, %v1246
          %v1248 = vadd.f32 %v1244, %v1247
          %vm1249 = vweird.f32 %v1130
          %vm1250 = vweird.f32 %v1244
          %vm1251 = vmor %vm1249, %vm1250
          %v1252 = vsel %vm1251, %v1244, %v1248
          %v1253 = vand.u32 2147483647, %v1130
          %vm1254 = vcmp.eq.f32.partialorder %v1253, 8.507059e+37
          %v1255 = vand.u32 %v1130, 2147483648
          %v1256 = vor.u32 1.1754944e-38, %v1255
          %v1257 = vsel %vm1254, %v1256, %v1252
          %v1258 = vmul.f32 %v1116, %v1257
          %v1267 = vrot.slane %v1104, 7
          %vm1268 = vcmask 1041409
          %v1269 = vsel %vm1268, %v1267, %v1102
          %v1270 = vrot.slane %v1106, 6
          %vm1271 = vcmask 1042434
          %v1272 = vsel %vm1271, %v1270, %v1269
          %v1273 = vrot.slane %v1108, 5
          %vm1274 = vcmask 1043459
          %v1275 = vsel %vm1274, %v1273, %v1272
          %v1276 = vrot.slane %v1110, 4
          %vm1277 = vcmask 1044484
          %v1278 = vsel %vm1277, %v1276, %v1275
          %v1279 = vrot.slane %v1112, 3
          %vm1280 = vcmask 1045509
          %v1281 = vsel %vm1280, %v1279, %v1278
          %v1282 = vrot.slane %v1114, 2
          %vm1283 = vcmask 1046534
          %v1284 = vsel %vm1283, %v1282, %v1281
          %v1285 = vrot.slane %v1116, 1
          %vm1286 = vcmask 1047559
          %v1287 = vsel %vm1286, %v1285, %v1284
          %v1289 = vadd.f32 %v1118, %v1287
          %v1291 = vrot.slane %v1289, 1
          %v1292 = vrot.slane %v1289, 2
          %v1293 = vrot.slane %v1289, 3
          %v1294 = vrot.slane %v1289, 4
          %v1295 = vrot.slane %v1289, 5
          %v1296 = vrot.slane %v1289, 6
          %v1297 = vrot.slane %v1289, 7
          %v1306 = vsel %vm1121, %v1102, %v1289
          %v1307 = vsel %vm1121, %v1104, %v1291
          %v1308 = vsel %vm1121, %v1106, %v1292
          %v1309 = vsel %vm1121, %v1108, %v1293
          %v1310 = vsel %vm1121, %v1110, %v1294
          %v1311 = vsel %vm1121, %v1112, %v1295
          %v1312 = vsel %vm1121, %v1114, %v1296
          %v1313 = vsel %vm1121, %v1116, %v1297
          %v1322 = vrot.slane %v1307, 7
          %v1323 = vsel %vm1268, %v1322, %v1306
          %v1324 = vrot.slane %v1308, 6
          %v1325 = vsel %vm1271, %v1324, %v1323
          %v1326 = vrot.slane %v1309, 5
          %v1327 = vsel %vm1274, %v1326, %v1325
          %v1328 = vrot.slane %v1310, 4
          %v1329 = vsel %vm1277, %v1328, %v1327
          %v1330 = vrot.slane %v1311, 3
          %v1331 = vsel %vm1280, %v1330, %v1329
          %v1332 = vrot.slane %v1312, 2
          %v1333 = vsel %vm1283, %v1332, %v1331
          %v1334 = vrot.slane %v1313, 1
          %v1335 = vsel %vm1286, %v1334, %v1333
          %1337 = vst.msk [vmem:[%s20] sm:$0xff] %vm772, %v1335
          %v1338 = vld [vmem:[%s7] sm:$0xff]
          %v1340 = vrot.slane %v1338, 1
          %v1341 = vrot.slane %v1338, 2
          %v1342 = vrot.slane %v1338, 3
          %v1343 = vrot.slane %v1338, 4
          %v1344 = vrot.slane %v1338, 5
          %v1345 = vrot.slane %v1338, 6
          %v1346 = vrot.slane %v1338, 7
          %v1355 = vmul.f32 %v1153, %v1338
          %v1356 = vmul.f32 %v1168, %v1340
          %v1357 = vmul.f32 %v1183, %v1341
          %v1358 = vmul.f32 %v1198, %v1342
          %v1359 = vmul.f32 %v1213, %v1343
          %v1360 = vmul.f32 %v1228, %v1344
          %v1361 = vmul.f32 %v1243, %v1345
          %v1362 = vmul.f32 %v1258, %v1346
          %v1371 = vrot.slane %v1356, 7
          %v1372 = vsel %vm1268, %v1371, %v1355
          %v1373 = vrot.slane %v1357, 6
          %v1374 = vsel %vm1271, %v1373, %v1372
          %v1375 = vrot.slane %v1358, 5
          %v1376 = vsel %vm1274, %v1375, %v1374
          %v1377 = vrot.slane %v1359, 4
          %v1378 = vsel %vm1277, %v1377, %v1376
          %v1379 = vrot.slane %v1360, 3
          %v1380 = vsel %vm1280, %v1379, %v1378
          %v1381 = vrot.slane %v1361, 2
          %v1382 = vsel %vm1283, %v1381, %v1380
          %v1383 = vrot.slane %v1362, 1
          %v1384 = vsel %vm1286, %v1383, %v1382
          %v1386 = vsel %vm772, %v1384, 0.0
          %1387 = vadd.xlane.f32.xlu0 %v1386
          %v1388 = vpop.xlane.xlu0 %1387
          %v1390 = vrot.slane %v1388, 1
          %v1391 = vrot.slane %v1388, 2
          %v1392 = vrot.slane %v1388, 3
          %v1393 = vrot.slane %v1388, 4
          %v1394 = vrot.slane %v1388, 5
          %v1395 = vrot.slane %v1388, 6
          %v1396 = vrot.slane %v1388, 7
          %v1405 = vrcp.pop %v1388
          %v1406 = vmul.f32 %v1388, %v1405
          %v1407 = vsub.f32 1.0, %v1406
          %v1408 = vmul.f32 %v1405, %v1407
          %v1409 = vadd.f32 %v1405, %v1408
          %vm1410 = vweird.f32 %v1388
          %vm1411 = vweird.f32 %v1405
          %vm1412 = vmor %vm1410, %vm1411
          %v1413 = vsel %vm1412, %v1405, %v1409
          %v1414 = vand.u32 2147483647, %v1388
          %vm1415 = vcmp.eq.f32.partialorder %v1414, 8.507059e+37
          %v1416 = vand.u32 %v1388, 2147483648
          %v1417 = vor.u32 1.1754944e-38, %v1416
          %v1418 = vsel %vm1415, %v1417, %v1413
          %v1419 = vmul.f32 %v1355, %v1418
          %v1420 = vrcp.pop %v1390
          %v1421 = vmul.f32 %v1390, %v1420
          %v1422 = vsub.f32 1.0, %v1421
          %v1423 = vmul.f32 %v1420, %v1422
          %v1424 = vadd.f32 %v1420, %v1423
          %vm1425 = vweird.f32 %v1390
          %vm1426 = vweird.f32 %v1420
          %vm1427 = vmor %vm1425, %vm1426
          %v1428 = vsel %vm1427, %v1420, %v1424
          %v1429 = vand.u32 2147483647, %v1390
          %vm1430 = vcmp.eq.f32.partialorder %v1429, 8.507059e+37
          %v1431 = vand.u32 %v1390, 2147483648
          %v1432 = vor.u32 1.1754944e-38, %v1431
          %v1433 = vsel %vm1430, %v1432, %v1428
          %v1434 = vmul.f32 %v1356, %v1433
          %v1435 = vrcp.pop %v1391
          %v1436 = vmul.f32 %v1391, %v1435
          %v1437 = vsub.f32 1.0, %v1436
          %v1438 = vmul.f32 %v1435, %v1437
          %v1439 = vadd.f32 %v1435, %v1438
          %vm1440 = vweird.f32 %v1391
          %vm1441 = vweird.f32 %v1435
          %vm1442 = vmor %vm1440, %vm1441
          %v1443 = vsel %vm1442, %v1435, %v1439
          %v1444 = vand.u32 2147483647, %v1391
          %vm1445 = vcmp.eq.f32.partialorder %v1444, 8.507059e+37
          %v1446 = vand.u32 %v1391, 2147483648
          %v1447 = vor.u32 1.1754944e-38, %v1446
          %v1448 = vsel %vm1445, %v1447, %v1443
          %v1449 = vmul.f32 %v1357, %v1448
          %v1450 = vrcp.pop %v1392
          %v1451 = vmul.f32 %v1392, %v1450
          %v1452 = vsub.f32 1.0, %v1451
          %v1453 = vmul.f32 %v1450, %v1452
          %v1454 = vadd.f32 %v1450, %v1453
          %vm1455 = vweird.f32 %v1392
          %vm1456 = vweird.f32 %v1450
          %vm1457 = vmor %vm1455, %vm1456
          %v1458 = vsel %vm1457, %v1450, %v1454
          %v1459 = vand.u32 2147483647, %v1392
          %vm1460 = vcmp.eq.f32.partialorder %v1459, 8.507059e+37
          %v1461 = vand.u32 %v1392, 2147483648
          %v1462 = vor.u32 1.1754944e-38, %v1461
          %v1463 = vsel %vm1460, %v1462, %v1458
          %v1464 = vmul.f32 %v1358, %v1463
          %v1465 = vrcp.pop %v1393
          %v1466 = vmul.f32 %v1393, %v1465
          %v1467 = vsub.f32 1.0, %v1466
          %v1468 = vmul.f32 %v1465, %v1467
          %v1469 = vadd.f32 %v1465, %v1468
          %vm1470 = vweird.f32 %v1393
          %vm1471 = vweird.f32 %v1465
          %vm1472 = vmor %vm1470, %vm1471
          %v1473 = vsel %vm1472, %v1465, %v1469
          %v1474 = vand.u32 2147483647, %v1393
          %vm1475 = vcmp.eq.f32.partialorder %v1474, 8.507059e+37
          %v1476 = vand.u32 %v1393, 2147483648
          %v1477 = vor.u32 1.1754944e-38, %v1476
          %v1478 = vsel %vm1475, %v1477, %v1473
          %v1479 = vmul.f32 %v1359, %v1478
          %v1480 = vrcp.pop %v1394
          %v1481 = vmul.f32 %v1394, %v1480
          %v1482 = vsub.f32 1.0, %v1481
          %v1483 = vmul.f32 %v1480, %v1482
          %v1484 = vadd.f32 %v1480, %v1483
          %vm1485 = vweird.f32 %v1394
          %vm1486 = vweird.f32 %v1480
          %vm1487 = vmor %vm1485, %vm1486
          %v1488 = vsel %vm1487, %v1480, %v1484
          %v1489 = vand.u32 2147483647, %v1394
          %vm1490 = vcmp.eq.f32.partialorder %v1489, 8.507059e+37
          %v1491 = vand.u32 %v1394, 2147483648
          %v1492 = vor.u32 1.1754944e-38, %v1491
          %v1493 = vsel %vm1490, %v1492, %v1488
          %v1494 = vmul.f32 %v1360, %v1493
          %v1495 = vrcp.pop %v1395
          %v1496 = vmul.f32 %v1395, %v1495
          %v1497 = vsub.f32 1.0, %v1496
          %v1498 = vmul.f32 %v1495, %v1497
          %v1499 = vadd.f32 %v1495, %v1498
          %vm1500 = vweird.f32 %v1395
          %vm1501 = vweird.f32 %v1495
          %vm1502 = vmor %vm1500, %vm1501
          %v1503 = vsel %vm1502, %v1495, %v1499
          %v1504 = vand.u32 2147483647, %v1395
          %vm1505 = vcmp.eq.f32.partialorder %v1504, 8.507059e+37
          %v1506 = vand.u32 %v1395, 2147483648
          %v1507 = vor.u32 1.1754944e-38, %v1506
          %v1508 = vsel %vm1505, %v1507, %v1503
          %v1509 = vmul.f32 %v1361, %v1508
          %v1510 = vrcp.pop %v1396
          %v1511 = vmul.f32 %v1396, %v1510
          %v1512 = vsub.f32 1.0, %v1511
          %v1513 = vmul.f32 %v1510, %v1512
          %v1514 = vadd.f32 %v1510, %v1513
          %vm1515 = vweird.f32 %v1396
          %vm1516 = vweird.f32 %v1510
          %vm1517 = vmor %vm1515, %vm1516
          %v1518 = vsel %vm1517, %v1510, %v1514
          %v1519 = vand.u32 2147483647, %v1396
          %vm1520 = vcmp.eq.f32.partialorder %v1519, 8.507059e+37
          %v1521 = vand.u32 %v1396, 2147483648
          %v1522 = vor.u32 1.1754944e-38, %v1521
          %v1523 = vsel %vm1520, %v1522, %v1518
          %v1524 = vmul.f32 %v1362, %v1523
          %v1526 = vsel %vm772, %v1419, 0
          %1528 = vmatpush.msra.mxu0 0.0
          %1529 = vmatpush.msra.mxu0 0.0
          %1530 = vmatpush.msra.mxu0 0.0
          %1531 = vmatpush.msra.mxu0 0.0
          %1532 = vmatpush.msra.mxu0 0.0
          %1533 = vmatpush.msra.mxu0 0.0
          %1534 = vmatpush.msra.mxu0 0.0
          %1535 = vmatpush.msra.mxu0 0.0
          %1536 = vmatpush.msra.mxu0 0.0
          %1537 = vmatpush.msra.mxu0 0.0
          %1538 = vmatpush.msra.mxu0 0.0
          %1539 = vmatpush.msra.mxu0 0.0
          %1540 = vmatpush.msra.mxu0 0.0
          %1541 = vmatpush.msra.mxu0 0.0
          %1542 = vmatpush.msra.mxu0 0.0
          %1543 = vmatpush.msra.mxu0 %v859
          %1544 = vmatmul.f32.gmra.mxu0 %v1526
          %v1545 = vpop.f32.mrf.mxu0
          %v1546 = vadd.f32 0.0, %v1545
          %1547 = vdwg.mxu0
          %v1549 = vsel %vm772, %v1434, 0
          %1551 = vmatpush.msra.mxu0 0.0
          %1552 = vmatpush.msra.mxu0 0.0
          %1553 = vmatpush.msra.mxu0 0.0
          %1554 = vmatpush.msra.mxu0 0.0
          %1555 = vmatpush.msra.mxu0 0.0
          %1556 = vmatpush.msra.mxu0 0.0
          %1557 = vmatpush.msra.mxu0 0.0
          %1558 = vmatpush.msra.mxu0 0.0
          %1559 = vmatpush.msra.mxu0 0.0
          %1560 = vmatpush.msra.mxu0 0.0
          %1561 = vmatpush.msra.mxu0 0.0
          %1562 = vmatpush.msra.mxu0 0.0
          %1563 = vmatpush.msra.mxu0 0.0
          %1564 = vmatpush.msra.mxu0 0.0
          %1565 = vmatpush.msra.mxu0 0.0
          %1566 = vmatpush.msra.mxu0 %v860
          %1567 = vmatmul.f32.gmra.mxu0 %v1549
          %v1568 = vpop.f32.mrf.mxu0
          %v1569 = vadd.f32 0.0, %v1568
          %1570 = vdwg.mxu0
          %v1572 = vsel %vm772, %v1449, 0
          %1574 = vmatpush.msra.mxu0 0.0
          %1575 = vmatpush.msra.mxu0 0.0
          %1576 = vmatpush.msra.mxu0 0.0
          %1577 = vmatpush.msra.mxu0 0.0
          %1578 = vmatpush.msra.mxu0 0.0
          %1579 = vmatpush.msra.mxu0 0.0
          %1580 = vmatpush.msra.mxu0 0.0
          %1581 = vmatpush.msra.mxu0 0.0
          %1582 = vmatpush.msra.mxu0 0.0
          %1583 = vmatpush.msra.mxu0 0.0
          %1584 = vmatpush.msra.mxu0 0.0
          %1585 = vmatpush.msra.mxu0 0.0
          %1586 = vmatpush.msra.mxu0 0.0
          %1587 = vmatpush.msra.mxu0 0.0
          %1588 = vmatpush.msra.mxu0 0.0
          %1589 = vmatpush.msra.mxu0 %v861
          %1590 = vmatmul.f32.gmra.mxu0 %v1572
          %v1591 = vpop.f32.mrf.mxu0
          %v1592 = vadd.f32 0.0, %v1591
          %1593 = vdwg.mxu0
          %v1595 = vsel %vm772, %v1464, 0
          %1597 = vmatpush.msra.mxu0 0.0
          %1598 = vmatpush.msra.mxu0 0.0
          %1599 = vmatpush.msra.mxu0 0.0
          %1600 = vmatpush.msra.mxu0 0.0
          %1601 = vmatpush.msra.mxu0 0.0
          %1602 = vmatpush.msra.mxu0 0.0
          %1603 = vmatpush.msra.mxu0 0.0
          %1604 = vmatpush.msra.mxu0 0.0
          %1605 = vmatpush.msra.mxu0 0.0
          %1606 = vmatpush.msra.mxu0 0.0
          %1607 = vmatpush.msra.mxu0 0.0
          %1608 = vmatpush.msra.mxu0 0.0
          %1609 = vmatpush.msra.mxu0 0.0
          %1610 = vmatpush.msra.mxu0 0.0
          %1611 = vmatpush.msra.mxu0 0.0
          %1612 = vmatpush.msra.mxu0 %v862
          %1613 = vmatmul.f32.gmra.mxu0 %v1595
          %v1614 = vpop.f32.mrf.mxu0
          %v1615 = vadd.f32 0.0, %v1614
          %1616 = vdwg.mxu0
          %v1618 = vsel %vm772, %v1479, 0
          %1620 = vmatpush.msra.mxu0 0.0
          %1621 = vmatpush.msra.mxu0 0.0
          %1622 = vmatpush.msra.mxu0 0.0
          %1623 = vmatpush.msra.mxu0 0.0
          %1624 = vmatpush.msra.mxu0 0.0
          %1625 = vmatpush.msra.mxu0 0.0
          %1626 = vmatpush.msra.mxu0 0.0
          %1627 = vmatpush.msra.mxu0 0.0
          %1628 = vmatpush.msra.mxu0 0.0
          %1629 = vmatpush.msra.mxu0 0.0
          %1630 = vmatpush.msra.mxu0 0.0
          %1631 = vmatpush.msra.mxu0 0.0
          %1632 = vmatpush.msra.mxu0 0.0
          %1633 = vmatpush.msra.mxu0 0.0
          %1634 = vmatpush.msra.mxu0 0.0
          %1635 = vmatpush.msra.mxu0 %v863
          %1636 = vmatmul.f32.gmra.mxu0 %v1618
          %v1637 = vpop.f32.mrf.mxu0
          %v1638 = vadd.f32 0.0, %v1637
          %1639 = vdwg.mxu0
          %v1641 = vsel %vm772, %v1494, 0
          %1643 = vmatpush.msra.mxu0 0.0
          %1644 = vmatpush.msra.mxu0 0.0
          %1645 = vmatpush.msra.mxu0 0.0
          %1646 = vmatpush.msra.mxu0 0.0
          %1647 = vmatpush.msra.mxu0 0.0
          %1648 = vmatpush.msra.mxu0 0.0
          %1649 = vmatpush.msra.mxu0 0.0
          %1650 = vmatpush.msra.mxu0 0.0
          %1651 = vmatpush.msra.mxu0 0.0
          %1652 = vmatpush.msra.mxu0 0.0
          %1653 = vmatpush.msra.mxu0 0.0
          %1654 = vmatpush.msra.mxu0 0.0
          %1655 = vmatpush.msra.mxu0 0.0
          %1656 = vmatpush.msra.mxu0 0.0
          %1657 = vmatpush.msra.mxu0 0.0
          %1658 = vmatpush.msra.mxu0 %v864
          %1659 = vmatmul.f32.gmra.mxu0 %v1641
          %v1660 = vpop.f32.mrf.mxu0
          %v1661 = vadd.f32 0.0, %v1660
          %1662 = vdwg.mxu0
          %v1664 = vsel %vm772, %v1509, 0
          %1666 = vmatpush.msra.mxu0 0.0
          %1667 = vmatpush.msra.mxu0 0.0
          %1668 = vmatpush.msra.mxu0 0.0
          %1669 = vmatpush.msra.mxu0 0.0
          %1670 = vmatpush.msra.mxu0 0.0
          %1671 = vmatpush.msra.mxu0 0.0
          %1672 = vmatpush.msra.mxu0 0.0
          %1673 = vmatpush.msra.mxu0 0.0
          %1674 = vmatpush.msra.mxu0 0.0
          %1675 = vmatpush.msra.mxu0 0.0
          %1676 = vmatpush.msra.mxu0 0.0
          %1677 = vmatpush.msra.mxu0 0.0
          %1678 = vmatpush.msra.mxu0 0.0
          %1679 = vmatpush.msra.mxu0 0.0
          %1680 = vmatpush.msra.mxu0 0.0
          %1681 = vmatpush.msra.mxu0 %v865
          %1682 = vmatmul.f32.gmra.mxu0 %v1664
          %v1683 = vpop.f32.mrf.mxu0
          %v1684 = vadd.f32 0.0, %v1683
          %1685 = vdwg.mxu0
          %v1687 = vsel %vm772, %v1524, 0
          %1689 = vmatpush.msra.mxu0 0.0
          %1690 = vmatpush.msra.mxu0 0.0
          %1691 = vmatpush.msra.mxu0 0.0
          %1692 = vmatpush.msra.mxu0 0.0
          %1693 = vmatpush.msra.mxu0 0.0
          %1694 = vmatpush.msra.mxu0 0.0
          %1695 = vmatpush.msra.mxu0 0.0
          %1696 = vmatpush.msra.mxu0 0.0
          %1697 = vmatpush.msra.mxu0 0.0
          %1698 = vmatpush.msra.mxu0 0.0
          %1699 = vmatpush.msra.mxu0 0.0
          %1700 = vmatpush.msra.mxu0 0.0
          %1701 = vmatpush.msra.mxu0 0.0
          %1702 = vmatpush.msra.mxu0 0.0
          %1703 = vmatpush.msra.mxu0 0.0
          %1704 = vmatpush.msra.mxu0 %v866
          %1705 = vmatmul.f32.gmra.mxu0 %v1687
          %v1706 = vpop.f32.mrf.mxu0
          %v1707 = vadd.f32 0.0, %v1706
          %1708 = vdwg.mxu0
          %v1709 = vld [vmem:[%s5] sm:$0xf]
          %v1710 = vld [vmem:[%s5 + $0x4] sm:$0xf]
          %v1711 = vld [vmem:[%s5 + $0x8] sm:$0xf]
          %v1712 = vld [vmem:[%s5 + $0xc] sm:$0xf]
          %v1713 = vld [vmem:[%s5 + $0x10] sm:$0xf]
          %v1714 = vld [vmem:[%s5 + $0x14] sm:$0xf]
          %v1715 = vld [vmem:[%s5 + $0x18] sm:$0xf]
          %v1716 = vld [vmem:[%s5 + $0x1c] sm:$0xf]
          %v1717 = vld [vmem:[#allocation16] sm:$0xff]
          %v1718 = vld [vmem:[#allocation16 + $0x8] sm:$0xff]
          %v1719 = vld [vmem:[#allocation16 + $0x10] sm:$0xff]
          %v1720 = vld [vmem:[#allocation16 + $0x18] sm:$0xff]
          %1721 = vmatpush.msra.mxu0 0.0
          %1722 = vmatpush.msra.mxu0 0.0
          %1723 = vmatpush.msra.mxu0 0.0
          %1724 = vmatpush.msra.mxu0 0.0
          %1725 = vmatpush.msra.mxu0 0.0
          %1726 = vmatpush.msra.mxu0 0.0
          %1727 = vmatpush.msra.mxu0 0.0
          %1728 = vmatpush.msra.mxu0 0.0
          %1729 = vmatpush.msra.mxu0 0.0
          %1730 = vmatpush.msra.mxu0 0.0
          %1731 = vmatpush.msra.mxu0 0.0
          %1732 = vmatpush.msra.mxu0 0.0
          %1733 = vmatpush.msra.mxu0 %v1720
          %1734 = vmatpush.msra.mxu0 %v1719
          %1735 = vmatpush.msra.mxu0 %v1718
          %1736 = vmatpush.msra.mxu0 %v1717
          %1737 = vmatmul.f32.gmra.mxu0 %v871
          %v1738 = vpop.f32.mrf.mxu0
          %v1739 = vadd.f32 0.0, %v1738
          %1740 = vdwg.mxu0
          %v1742 = vrot.slane %v1739, 1
          %v1743 = vrot.slane %v1739, 2
          %v1744 = vrot.slane %v1739, 3
          %v1745 = vrot.slane %v1739, 4
          %v1746 = vrot.slane %v1739, 5
          %v1747 = vrot.slane %v1739, 6
          %v1748 = vrot.slane %v1739, 7
          %v1749 = vsel %vm852, %v1739, 0
          %v1752 = vsel %vm852, %v1709, 0
          %1754 = vmatpush.xpose.msra.mxu0 0.0
          %1755 = vmatpush.xpose.msra.mxu0 0.0
          %1756 = vmatpush.xpose.msra.mxu0 0.0
          %1757 = vmatpush.xpose.msra.mxu0 0.0
          %1758 = vmatpush.xpose.msra.mxu0 0.0
          %1759 = vmatpush.xpose.msra.mxu0 0.0
          %1760 = vmatpush.xpose.msra.mxu0 0.0
          %1761 = vmatpush.xpose.msra.mxu0 0.0
          %1762 = vmatpush.xpose.msra.mxu0 0.0
          %1763 = vmatpush.xpose.msra.mxu0 0.0
          %1764 = vmatpush.xpose.msra.mxu0 0.0
          %1765 = vmatpush.xpose.msra.mxu0 0.0
          %1766 = vmatpush.xpose.msra.mxu0 0.0
          %1767 = vmatpush.xpose.msra.mxu0 0.0
          %1768 = vmatpush.xpose.msra.mxu0 0.0
          %1769 = vmatpush.xpose.msra.mxu0 %v1752
          %1770 = vmatmul.f32.gmra.mxu0 %v1749
          %v1771 = vpop.f32.mrf.mxu0
          %v1772 = vadd.f32 0.0, %v1771
          %1773 = vdwg.mxu0
          %v1774 = vsel %vm852, %v1742, 0
          %v1777 = vsel %vm852, %v1710, 0
          %1779 = vmatpush.xpose.msra.mxu0 0.0
          %1780 = vmatpush.xpose.msra.mxu0 0.0
          %1781 = vmatpush.xpose.msra.mxu0 0.0
          %1782 = vmatpush.xpose.msra.mxu0 0.0
          %1783 = vmatpush.xpose.msra.mxu0 0.0
          %1784 = vmatpush.xpose.msra.mxu0 0.0
          %1785 = vmatpush.xpose.msra.mxu0 0.0
          %1786 = vmatpush.xpose.msra.mxu0 0.0
          %1787 = vmatpush.xpose.msra.mxu0 0.0
          %1788 = vmatpush.xpose.msra.mxu0 0.0
          %1789 = vmatpush.xpose.msra.mxu0 0.0
          %1790 = vmatpush.xpose.msra.mxu0 0.0
          %1791 = vmatpush.xpose.msra.mxu0 0.0
          %1792 = vmatpush.xpose.msra.mxu0 0.0
          %1793 = vmatpush.xpose.msra.mxu0 0.0
          %1794 = vmatpush.xpose.msra.mxu0 %v1777
          %1795 = vmatmul.f32.gmra.mxu0 %v1774
          %v1796 = vpop.f32.mrf.mxu0
          %v1797 = vadd.f32 0.0, %v1796
          %1798 = vdwg.mxu0
          %v1799 = vsel %vm852, %v1743, 0
          %v1802 = vsel %vm852, %v1711, 0
          %1804 = vmatpush.xpose.msra.mxu0 0.0
          %1805 = vmatpush.xpose.msra.mxu0 0.0
          %1806 = vmatpush.xpose.msra.mxu0 0.0
          %1807 = vmatpush.xpose.msra.mxu0 0.0
          %1808 = vmatpush.xpose.msra.mxu0 0.0
          %1809 = vmatpush.xpose.msra.mxu0 0.0
          %1810 = vmatpush.xpose.msra.mxu0 0.0
          %1811 = vmatpush.xpose.msra.mxu0 0.0
          %1812 = vmatpush.xpose.msra.mxu0 0.0
          %1813 = vmatpush.xpose.msra.mxu0 0.0
          %1814 = vmatpush.xpose.msra.mxu0 0.0
          %1815 = vmatpush.xpose.msra.mxu0 0.0
          %1816 = vmatpush.xpose.msra.mxu0 0.0
          %1817 = vmatpush.xpose.msra.mxu0 0.0
          %1818 = vmatpush.xpose.msra.mxu0 0.0
          %1819 = vmatpush.xpose.msra.mxu0 %v1802
          %1820 = vmatmul.f32.gmra.mxu0 %v1799
          %v1821 = vpop.f32.mrf.mxu0
          %v1822 = vadd.f32 0.0, %v1821
          %1823 = vdwg.mxu0
          %v1824 = vsel %vm852, %v1744, 0
          %v1827 = vsel %vm852, %v1712, 0
          %1829 = vmatpush.xpose.msra.mxu0 0.0
          %1830 = vmatpush.xpose.msra.mxu0 0.0
          %1831 = vmatpush.xpose.msra.mxu0 0.0
          %1832 = vmatpush.xpose.msra.mxu0 0.0
          %1833 = vmatpush.xpose.msra.mxu0 0.0
          %1834 = vmatpush.xpose.msra.mxu0 0.0
          %1835 = vmatpush.xpose.msra.mxu0 0.0
          %1836 = vmatpush.xpose.msra.mxu0 0.0
          %1837 = vmatpush.xpose.msra.mxu0 0.0
          %1838 = vmatpush.xpose.msra.mxu0 0.0
          %1839 = vmatpush.xpose.msra.mxu0 0.0
          %1840 = vmatpush.xpose.msra.mxu0 0.0
          %1841 = vmatpush.xpose.msra.mxu0 0.0
          %1842 = vmatpush.xpose.msra.mxu0 0.0
          %1843 = vmatpush.xpose.msra.mxu0 0.0
          %1844 = vmatpush.xpose.msra.mxu0 %v1827
          %1845 = vmatmul.f32.gmra.mxu0 %v1824
          %v1846 = vpop.f32.mrf.mxu0
          %v1847 = vadd.f32 0.0, %v1846
          %1848 = vdwg.mxu0
          %v1849 = vsel %vm852, %v1745, 0
          %v1852 = vsel %vm852, %v1713, 0
          %1854 = vmatpush.xpose.msra.mxu0 0.0
          %1855 = vmatpush.xpose.msra.mxu0 0.0
          %1856 = vmatpush.xpose.msra.mxu0 0.0
          %1857 = vmatpush.xpose.msra.mxu0 0.0
          %1858 = vmatpush.xpose.msra.mxu0 0.0
          %1859 = vmatpush.xpose.msra.mxu0 0.0
          %1860 = vmatpush.xpose.msra.mxu0 0.0
          %1861 = vmatpush.xpose.msra.mxu0 0.0
          %1862 = vmatpush.xpose.msra.mxu0 0.0
          %1863 = vmatpush.xpose.msra.mxu0 0.0
          %1864 = vmatpush.xpose.msra.mxu0 0.0
          %1865 = vmatpush.xpose.msra.mxu0 0.0
          %1866 = vmatpush.xpose.msra.mxu0 0.0
          %1867 = vmatpush.xpose.msra.mxu0 0.0
          %1868 = vmatpush.xpose.msra.mxu0 0.0
          %1869 = vmatpush.xpose.msra.mxu0 %v1852
          %1870 = vmatmul.f32.gmra.mxu0 %v1849
          %v1871 = vpop.f32.mrf.mxu0
          %v1872 = vadd.f32 0.0, %v1871
          %1873 = vdwg.mxu0
          %v1874 = vsel %vm852, %v1746, 0
          %v1877 = vsel %vm852, %v1714, 0
          %1879 = vmatpush.xpose.msra.mxu0 0.0
          %1880 = vmatpush.xpose.msra.mxu0 0.0
          %1881 = vmatpush.xpose.msra.mxu0 0.0
          %1882 = vmatpush.xpose.msra.mxu0 0.0
          %1883 = vmatpush.xpose.msra.mxu0 0.0
          %1884 = vmatpush.xpose.msra.mxu0 0.0
          %1885 = vmatpush.xpose.msra.mxu0 0.0
          %1886 = vmatpush.xpose.msra.mxu0 0.0
          %1887 = vmatpush.xpose.msra.mxu0 0.0
          %1888 = vmatpush.xpose.msra.mxu0 0.0
          %1889 = vmatpush.xpose.msra.mxu0 0.0
          %1890 = vmatpush.xpose.msra.mxu0 0.0
          %1891 = vmatpush.xpose.msra.mxu0 0.0
          %1892 = vmatpush.xpose.msra.mxu0 0.0
          %1893 = vmatpush.xpose.msra.mxu0 0.0
          %1894 = vmatpush.xpose.msra.mxu0 %v1877
          %1895 = vmatmul.f32.gmra.mxu0 %v1874
          %v1896 = vpop.f32.mrf.mxu0
          %v1897 = vadd.f32 0.0, %v1896
          %1898 = vdwg.mxu0
          %v1899 = vsel %vm852, %v1747, 0
          %v1902 = vsel %vm852, %v1715, 0
          %1904 = vmatpush.xpose.msra.mxu0 0.0
          %1905 = vmatpush.xpose.msra.mxu0 0.0
          %1906 = vmatpush.xpose.msra.mxu0 0.0
          %1907 = vmatpush.xpose.msra.mxu0 0.0
          %1908 = vmatpush.xpose.msra.mxu0 0.0
          %1909 = vmatpush.xpose.msra.mxu0 0.0
          %1910 = vmatpush.xpose.msra.mxu0 0.0
          %1911 = vmatpush.xpose.msra.mxu0 0.0
          %1912 = vmatpush.xpose.msra.mxu0 0.0
          %1913 = vmatpush.xpose.msra.mxu0 0.0
          %1914 = vmatpush.xpose.msra.mxu0 0.0
          %1915 = vmatpush.xpose.msra.mxu0 0.0
          %1916 = vmatpush.xpose.msra.mxu0 0.0
          %1917 = vmatpush.xpose.msra.mxu0 0.0
          %1918 = vmatpush.xpose.msra.mxu0 0.0
          %1919 = vmatpush.xpose.msra.mxu0 %v1902
          %1920 = vmatmul.f32.gmra.mxu0 %v1899
          %v1921 = vpop.f32.mrf.mxu0
          %v1922 = vadd.f32 0.0, %v1921
          %1923 = vdwg.mxu0
          %v1924 = vsel %vm852, %v1748, 0
          %v1927 = vsel %vm852, %v1716, 0
          %1929 = vmatpush.xpose.msra.mxu0 0.0
          %1930 = vmatpush.xpose.msra.mxu0 0.0
          %1931 = vmatpush.xpose.msra.mxu0 0.0
          %1932 = vmatpush.xpose.msra.mxu0 0.0
          %1933 = vmatpush.xpose.msra.mxu0 0.0
          %1934 = vmatpush.xpose.msra.mxu0 0.0
          %1935 = vmatpush.xpose.msra.mxu0 0.0
          %1936 = vmatpush.xpose.msra.mxu0 0.0
          %1937 = vmatpush.xpose.msra.mxu0 0.0
          %1938 = vmatpush.xpose.msra.mxu0 0.0
          %1939 = vmatpush.xpose.msra.mxu0 0.0
          %1940 = vmatpush.xpose.msra.mxu0 0.0
          %1941 = vmatpush.xpose.msra.mxu0 0.0
          %1942 = vmatpush.xpose.msra.mxu0 0.0
          %1943 = vmatpush.xpose.msra.mxu0 0.0
          %1944 = vmatpush.xpose.msra.mxu0 %v1927
          %1945 = vmatmul.f32.gmra.mxu0 %v1924
          %v1946 = vpop.f32.mrf.mxu0
          %v1947 = vadd.f32 0.0, %v1946
          %1948 = vdwg.mxu0
          %v1949 = vlaneseq
          %v1950 = vand.u32 %v1949, 127
          %v1951 = vstv %s764
          %vm1952 = vcmp.lt.s32.totalorder %v1950, %v1951
          %v1961 = vrot.slane %v1797, 7
          %v1962 = vsel %vm1268, %v1961, %v1772
          %v1963 = vrot.slane %v1822, 6
          %v1964 = vsel %vm1271, %v1963, %v1962
          %v1965 = vrot.slane %v1847, 5
          %v1966 = vsel %vm1274, %v1965, %v1964
          %v1967 = vrot.slane %v1872, 4
          %v1968 = vsel %vm1277, %v1967, %v1966
          %v1969 = vrot.slane %v1897, 3
          %v1970 = vsel %vm1280, %v1969, %v1968
          %v1971 = vrot.slane %v1922, 2
          %v1972 = vsel %vm1283, %v1971, %v1970
          %v1973 = vrot.slane %v1947, 1
          %v1974 = vsel %vm1286, %v1973, %v1972
          %v1976 = vsel %vm1952, %v1974, -1e+30
          %vm1977 = vcmask 31744
          %v1978 = vsel %vm1977, %v1976, -inf
          %1979 = vmax.xlane.f32.xlu0 %v1978
          %v1980 = vpop.xlane.xlu0 %1979
          %v1981 = vsub.f32 %v1976, %v1980
          %v1982 = vmul.f32 %v1981, 1.442695
          %v1983 = vpow.pop %v1982
          %v1984 = vsel %vm1952, 1, 0
          %v1985 = vcvt.s32.f32 %v1984
          %v1986 = vmul.f32 %v1983, %v1985
          %v1987 = vsel %vm1977, %v1986, 0.0
          %1988 = vadd.xlane.f32.xlu0 %v1987
          %v1989 = vpop.xlane.xlu0 %1988
          %vm1990 = vcmp.gt.f32.partialorder %v1989, 0.0
          %v1991 = vsel %vm1990, %v1989, 1.0
          %v1992 = vrcp.pop %v1991
          %v1993 = vmul.f32 %v1991, %v1992
          %v1994 = vsub.f32 1.0, %v1993
          %v1995 = vmul.f32 %v1992, %v1994
          %v1996 = vadd.f32 %v1992, %v1995
          %vm1997 = vweird.f32 %v1991
          %vm1998 = vweird.f32 %v1992
          %vm1999 = vmor %vm1997, %vm1998
          %v2000 = vsel %vm1999, %v1992, %v1996
          %v2001 = vand.u32 2147483647, %v1991
          %vm2002 = vcmp.eq.f32.partialorder %v2001, 8.507059e+37
          %v2003 = vand.u32 %v1991, 2147483648
          %v2004 = vor.u32 1.1754944e-38, %v2003
          %v2005 = vsel %vm2002, %v2004, %v2000
          %v2006 = vmul.f32 %v1986, %v2005
          %v2008 = vrot.slane %v2006, 1
          %v2009 = vrot.slane %v2006, 2
          %v2010 = vrot.slane %v2006, 3
          %v2011 = vrot.slane %v2006, 4
          %v2012 = vrot.slane %v2006, 5
          %v2013 = vrot.slane %v2006, 6
          %v2014 = vrot.slane %v2006, 7
          %v2015 = vsel %vm1977, %v2006, 0
          %vm2017 = vcmask 1043456
          %v2018 = vsel %vm2017, %v1709, 0
          %2020 = vmatpush.msra.mxu0 0.0
          %2021 = vmatpush.msra.mxu0 0.0
          %2022 = vmatpush.msra.mxu0 0.0
          %2023 = vmatpush.msra.mxu0 0.0
          %2024 = vmatpush.msra.mxu0 0.0
          %2025 = vmatpush.msra.mxu0 0.0
          %2026 = vmatpush.msra.mxu0 0.0
          %2027 = vmatpush.msra.mxu0 0.0
          %2028 = vmatpush.msra.mxu0 0.0
          %2029 = vmatpush.msra.mxu0 0.0
          %2030 = vmatpush.msra.mxu0 0.0
          %2031 = vmatpush.msra.mxu0 0.0
          %2032 = vmatpush.msra.mxu0 0.0
          %2033 = vmatpush.msra.mxu0 0.0
          %2034 = vmatpush.msra.mxu0 0.0
          %2035 = vmatpush.msra.mxu0 %v2018
          %2036 = vmatmul.f32.gmra.mxu0 %v2015
          %v2037 = vpop.f32.mrf.mxu0
          %v2038 = vadd.f32 0.0, %v2037
          %2039 = vdwg.mxu0
          %v2040 = vsel %vm1977, %v2008, 0
          %v2042 = vsel %vm2017, %v1710, 0
          %2044 = vmatpush.msra.mxu0 0.0
          %2045 = vmatpush.msra.mxu0 0.0
          %2046 = vmatpush.msra.mxu0 0.0
          %2047 = vmatpush.msra.mxu0 0.0
          %2048 = vmatpush.msra.mxu0 0.0
          %2049 = vmatpush.msra.mxu0 0.0
          %2050 = vmatpush.msra.mxu0 0.0
          %2051 = vmatpush.msra.mxu0 0.0
          %2052 = vmatpush.msra.mxu0 0.0
          %2053 = vmatpush.msra.mxu0 0.0
          %2054 = vmatpush.msra.mxu0 0.0
          %2055 = vmatpush.msra.mxu0 0.0
          %2056 = vmatpush.msra.mxu0 0.0
          %2057 = vmatpush.msra.mxu0 0.0
          %2058 = vmatpush.msra.mxu0 0.0
          %2059 = vmatpush.msra.mxu0 %v2042
          %2060 = vmatmul.f32.gmra.mxu0 %v2040
          %v2061 = vpop.f32.mrf.mxu0
          %v2062 = vadd.f32 0.0, %v2061
          %2063 = vdwg.mxu0
          %v2064 = vsel %vm1977, %v2009, 0
          %v2066 = vsel %vm2017, %v1711, 0
          %2068 = vmatpush.msra.mxu0 0.0
          %2069 = vmatpush.msra.mxu0 0.0
          %2070 = vmatpush.msra.mxu0 0.0
          %2071 = vmatpush.msra.mxu0 0.0
          %2072 = vmatpush.msra.mxu0 0.0
          %2073 = vmatpush.msra.mxu0 0.0
          %2074 = vmatpush.msra.mxu0 0.0
          %2075 = vmatpush.msra.mxu0 0.0
          %2076 = vmatpush.msra.mxu0 0.0
          %2077 = vmatpush.msra.mxu0 0.0
          %2078 = vmatpush.msra.mxu0 0.0
          %2079 = vmatpush.msra.mxu0 0.0
          %2080 = vmatpush.msra.mxu0 0.0
          %2081 = vmatpush.msra.mxu0 0.0
          %2082 = vmatpush.msra.mxu0 0.0
          %2083 = vmatpush.msra.mxu0 %v2066
          %2084 = vmatmul.f32.gmra.mxu0 %v2064
          %v2085 = vpop.f32.mrf.mxu0
          %v2086 = vadd.f32 0.0, %v2085
          %2087 = vdwg.mxu0
          %v2088 = vsel %vm1977, %v2010, 0
          %v2090 = vsel %vm2017, %v1712, 0
          %2092 = vmatpush.msra.mxu0 0.0
          %2093 = vmatpush.msra.mxu0 0.0
          %2094 = vmatpush.msra.mxu0 0.0
          %2095 = vmatpush.msra.mxu0 0.0
          %2096 = vmatpush.msra.mxu0 0.0
          %2097 = vmatpush.msra.mxu0 0.0
          %2098 = vmatpush.msra.mxu0 0.0
          %2099 = vmatpush.msra.mxu0 0.0
          %2100 = vmatpush.msra.mxu0 0.0
          %2101 = vmatpush.msra.mxu0 0.0
          %2102 = vmatpush.msra.mxu0 0.0
          %2103 = vmatpush.msra.mxu0 0.0
          %2104 = vmatpush.msra.mxu0 0.0
          %2105 = vmatpush.msra.mxu0 0.0
          %2106 = vmatpush.msra.mxu0 0.0
          %2107 = vmatpush.msra.mxu0 %v2090
          %2108 = vmatmul.f32.gmra.mxu0 %v2088
          %v2109 = vpop.f32.mrf.mxu0
          %v2110 = vadd.f32 0.0, %v2109
          %2111 = vdwg.mxu0
          %v2112 = vsel %vm1977, %v2011, 0
          %v2114 = vsel %vm2017, %v1713, 0
          %2116 = vmatpush.msra.mxu0 0.0
          %2117 = vmatpush.msra.mxu0 0.0
          %2118 = vmatpush.msra.mxu0 0.0
          %2119 = vmatpush.msra.mxu0 0.0
          %2120 = vmatpush.msra.mxu0 0.0
          %2121 = vmatpush.msra.mxu0 0.0
          %2122 = vmatpush.msra.mxu0 0.0
          %2123 = vmatpush.msra.mxu0 0.0
          %2124 = vmatpush.msra.mxu0 0.0
          %2125 = vmatpush.msra.mxu0 0.0
          %2126 = vmatpush.msra.mxu0 0.0
          %2127 = vmatpush.msra.mxu0 0.0
          %2128 = vmatpush.msra.mxu0 0.0
          %2129 = vmatpush.msra.mxu0 0.0
          %2130 = vmatpush.msra.mxu0 0.0
          %2131 = vmatpush.msra.mxu0 %v2114
          %2132 = vmatmul.f32.gmra.mxu0 %v2112
          %v2133 = vpop.f32.mrf.mxu0
          %v2134 = vadd.f32 0.0, %v2133
          %2135 = vdwg.mxu0
          %v2136 = vsel %vm1977, %v2012, 0
          %v2138 = vsel %vm2017, %v1714, 0
          %2140 = vmatpush.msra.mxu0 0.0
          %2141 = vmatpush.msra.mxu0 0.0
          %2142 = vmatpush.msra.mxu0 0.0
          %2143 = vmatpush.msra.mxu0 0.0
          %2144 = vmatpush.msra.mxu0 0.0
          %2145 = vmatpush.msra.mxu0 0.0
          %2146 = vmatpush.msra.mxu0 0.0
          %2147 = vmatpush.msra.mxu0 0.0
          %2148 = vmatpush.msra.mxu0 0.0
          %2149 = vmatpush.msra.mxu0 0.0
          %2150 = vmatpush.msra.mxu0 0.0
          %2151 = vmatpush.msra.mxu0 0.0
          %2152 = vmatpush.msra.mxu0 0.0
          %2153 = vmatpush.msra.mxu0 0.0
          %2154 = vmatpush.msra.mxu0 0.0
          %2155 = vmatpush.msra.mxu0 %v2138
          %2156 = vmatmul.f32.gmra.mxu0 %v2136
          %v2157 = vpop.f32.mrf.mxu0
          %v2158 = vadd.f32 0.0, %v2157
          %2159 = vdwg.mxu0
          %v2160 = vsel %vm1977, %v2013, 0
          %v2162 = vsel %vm2017, %v1715, 0
          %2164 = vmatpush.msra.mxu0 0.0
          %2165 = vmatpush.msra.mxu0 0.0
          %2166 = vmatpush.msra.mxu0 0.0
          %2167 = vmatpush.msra.mxu0 0.0
          %2168 = vmatpush.msra.mxu0 0.0
          %2169 = vmatpush.msra.mxu0 0.0
          %2170 = vmatpush.msra.mxu0 0.0
          %2171 = vmatpush.msra.mxu0 0.0
          %2172 = vmatpush.msra.mxu0 0.0
          %2173 = vmatpush.msra.mxu0 0.0
          %2174 = vmatpush.msra.mxu0 0.0
          %2175 = vmatpush.msra.mxu0 0.0
          %2176 = vmatpush.msra.mxu0 0.0
          %2177 = vmatpush.msra.mxu0 0.0
          %2178 = vmatpush.msra.mxu0 0.0
          %2179 = vmatpush.msra.mxu0 %v2162
          %2180 = vmatmul.f32.gmra.mxu0 %v2160
          %v2181 = vpop.f32.mrf.mxu0
          %v2182 = vadd.f32 0.0, %v2181
          %2183 = vdwg.mxu0
          %v2184 = vsel %vm1977, %v2014, 0
          %v2186 = vsel %vm2017, %v1716, 0
          %2188 = vmatpush.msra.mxu0 0.0
          %2189 = vmatpush.msra.mxu0 0.0
          %2190 = vmatpush.msra.mxu0 0.0
          %2191 = vmatpush.msra.mxu0 0.0
          %2192 = vmatpush.msra.mxu0 0.0
          %2193 = vmatpush.msra.mxu0 0.0
          %2194 = vmatpush.msra.mxu0 0.0
          %2195 = vmatpush.msra.mxu0 0.0
          %2196 = vmatpush.msra.mxu0 0.0
          %2197 = vmatpush.msra.mxu0 0.0
          %2198 = vmatpush.msra.mxu0 0.0
          %2199 = vmatpush.msra.mxu0 0.0
          %2200 = vmatpush.msra.mxu0 0.0
          %2201 = vmatpush.msra.mxu0 0.0
          %2202 = vmatpush.msra.mxu0 0.0
          %2203 = vmatpush.msra.mxu0 %v2186
          %2204 = vmatmul.f32.gmra.mxu0 %v2184
          %v2205 = vpop.f32.mrf.mxu0
          %v2206 = vadd.f32 0.0, %v2205
          %2207 = vdwg.mxu0
          %vm2208 = vcmask 257024
          %2209 = vst.msk [vmem:[%s21] sm:$0xf] %vm2208, %v1709
          %2210 = vst.msk [vmem:[%s21 + $0x4] sm:$0xf] %vm2208, %v1710
          %2211 = vst.msk [vmem:[%s21 + $0x8] sm:$0xf] %vm2208, %v1711
          %2212 = vst.msk [vmem:[%s21 + $0xc] sm:$0xf] %vm2208, %v1712
          %2213 = vst.msk [vmem:[%s21 + $0x10] sm:$0xf] %vm2208, %v1713
          %2214 = vst.msk [vmem:[%s21 + $0x14] sm:$0xf] %vm2208, %v1714
          %2215 = vst.msk [vmem:[%s21 + $0x18] sm:$0xf] %vm2208, %v1715
          %2216 = vst.msk [vmem:[%s21 + $0x1c] sm:$0xf] %vm2208, %v1716
          %v2217 = vrot.slane %v847, 1
          %v2218 = vrot.slane %v847, 2
          %v2219 = vrot.slane %v847, 3
          %v2220 = vrot.slane %v847, 4
          %v2221 = vrot.slane %v847, 5
          %v2222 = vrot.slane %v847, 6
          %v2223 = vrot.slane %v847, 7
          %v2224 = vperm.slane %v847, 0
          %v2225 = vperm.slane %v2217, 0
          %v2226 = vperm.slane %v2218, 0
          %v2227 = vperm.slane %v2219, 0
          %v2228 = vperm.slane %v2220, 0
          %v2229 = vperm.slane %v2221, 0
          %v2230 = vperm.slane %v2222, 0
          %v2231 = vperm.slane %v2223, 0
          %2232 = vrot.lane.b32.xlu0 %v2224, 32
          %v2233 = vpop.permute.xlu0 %2232
          %2234 = vrot.lane.b32.xlu0 %v2225, 32
          %v2235 = vpop.permute.xlu0 %2234
          %2236 = vrot.lane.b32.xlu0 %v2226, 32
          %v2237 = vpop.permute.xlu0 %2236
          %2238 = vrot.lane.b32.xlu0 %v2227, 32
          %v2239 = vpop.permute.xlu0 %2238
          %2240 = vrot.lane.b32.xlu0 %v2228, 32
          %v2241 = vpop.permute.xlu0 %2240
          %2242 = vrot.lane.b32.xlu0 %v2229, 32
          %v2243 = vpop.permute.xlu0 %2242
          %2244 = vrot.lane.b32.xlu0 %v2230, 32
          %v2245 = vpop.permute.xlu0 %2244
          %2246 = vrot.lane.b32.xlu0 %v2231, 32
          %v2247 = vpop.permute.xlu0 %2246
          %s2256 = scalar_lea.vmem %s21, %s764
          %vm2257 = vcmask 253952
          %2258 = vst.msk [vmem:[%s2256] sm:$0x1] %vm2257, %v2233
          %2259 = vst.msk [vmem:[%s2256 + $0x4] sm:$0x1] %vm2257, %v2235
          %2260 = vst.msk [vmem:[%s2256 + $0x8] sm:$0x1] %vm2257, %v2237
          %2261 = vst.msk [vmem:[%s2256 + $0xc] sm:$0x1] %vm2257, %v2239
          %2262 = vst.msk [vmem:[%s2256 + $0x10] sm:$0x1] %vm2257, %v2241
          %2263 = vst.msk [vmem:[%s2256 + $0x14] sm:$0x1] %vm2257, %v2243
          %2264 = vst.msk [vmem:[%s2256 + $0x18] sm:$0x1] %vm2257, %v2245
          %2265 = vst.msk [vmem:[%s2256 + $0x1c] sm:$0x1] %vm2257, %v2247
          %v2274 = vrot.slane %v1569, 7
          %v2275 = vsel %vm1268, %v2274, %v1546
          %v2276 = vrot.slane %v1592, 6
          %v2277 = vsel %vm1271, %v2276, %v2275
          %v2278 = vrot.slane %v1615, 5
          %v2279 = vsel %vm1274, %v2278, %v2277
          %v2280 = vrot.slane %v1638, 4
          %v2281 = vsel %vm1277, %v2280, %v2279
          %v2282 = vrot.slane %v1661, 3
          %v2283 = vsel %vm1280, %v2282, %v2281
          %v2284 = vrot.slane %v1684, 2
          %v2285 = vsel %vm1283, %v2284, %v2283
          %v2286 = vrot.slane %v1707, 1
          %v2287 = vsel %vm1286, %v2286, %v2285
          %2288 = vrot.lane.b32.xlu0 %v2287, 32
          %v2289 = vpop.permute.xlu0 %2288
          %v2299 = vrot.slane %v2062, 7
          %v2300 = vsel %vm1268, %v2299, %v2038
          %v2301 = vrot.slane %v2086, 6
          %v2302 = vsel %vm1271, %v2301, %v2300
          %v2303 = vrot.slane %v2110, 5
          %v2304 = vsel %vm1274, %v2303, %v2302
          %v2305 = vrot.slane %v2134, 4
          %v2306 = vsel %vm1277, %v2305, %v2304
          %v2307 = vrot.slane %v2158, 3
          %v2308 = vsel %vm1280, %v2307, %v2306
          %v2309 = vrot.slane %v2182, 2
          %v2310 = vsel %vm1283, %v2309, %v2308
          %v2311 = vrot.slane %v2206, 1
          %v2312 = vsel %vm1286, %v2311, %v2310
          %2313 = vrot.lane.b32.xlu0 %v2312, 64
          %v2314 = vpop.permute.xlu0 %2313
          %v2316 = vsel %vm852, %v850, %v2289
          %vm2317 = vcmask 523264
          %v2318 = vsel %vm2317, %v2316, %v2314
          %v2319 = vld [vmem:[%s15] sm:$0x1]
          %v2321 = vperm.slane %v2319, 0
          %v2323 = vmul.f32 %v2318, %v2321
          %vm2324 = vcmask 785408
          %v2325 = vsel %vm2324, %v2323, 0.0
          %2326 = vadd.xlane.f32.xlu0 %v2325
          %v2327 = vpop.xlane.xlu0 %2326
          %v2328 = vld [vmem:[#allocation11] sm:$0x1]
          %v2330 = vperm.slane %v2328, 0
          %v2332 = vadd.f32 %v2327, %v2330
          %v2333 = vsub.f32 0.0, %v2332
          %v2334 = vmul.f32 %v2333, 1.442695
          %v2335 = vpow.pop %v2334
          %v2336 = vadd.f32 %v2335, 1.0
          %v2337 = vrcp.pop %v2336
          %v2338 = vmul.f32 %v2336, %v2337
          %v2339 = vsub.f32 1.0, %v2338
          %v2340 = vmul.f32 %v2337, %v2339
          %v2341 = vadd.f32 %v2337, %v2340
          %vm2342 = vweird.f32 %v2336
          %vm2343 = vweird.f32 %v2337
          %vm2344 = vmor %vm2342, %vm2343
          %v2345 = vsel %vm2344, %v2337, %v2341
          %v2346 = vand.u32 2147483647, %v2336
          %vm2347 = vcmp.eq.f32.partialorder %v2346, 8.507059e+37
          %v2348 = vand.u32 %v2336, 2147483648
          %v2349 = vor.u32 1.1754944e-38, %v2348
          %v2350 = vsel %vm2347, %v2349, %v2345
          %v2351 = vmul.f32 1.0, %v2350
          %vm2352 = vcmask 7168
          %2353 = vst.msk [vmem:[#allocation4] sm:$0xff] %vm2352, %v2351
          %2355 = vset.pattern.permute.xlu0 0
          %2356 = vperm.xlu0 %2355, %v2351
          %v2357 = vpop.permute.xlu0 %2356
          %v2358 = vrot.slane %v2357, 1
          %v2359 = vrot.slane %v2357, 2
          %v2360 = vrot.slane %v2357, 3
          %v2361 = vrot.slane %v2357, 4
          %v2362 = vrot.slane %v2357, 5
          %v2363 = vrot.slane %v2357, 6
          %v2364 = vrot.slane %v2357, 7
          %v2373 = vmul.f32 %v1419, %v2357
          %v2374 = vmul.f32 %v1434, %v2358
          %v2375 = vmul.f32 %v1449, %v2359
          %v2376 = vmul.f32 %v1464, %v2360
          %v2377 = vmul.f32 %v1479, %v2361
          %v2378 = vmul.f32 %v1494, %v2362
          %v2379 = vmul.f32 %v1509, %v2363
          %v2380 = vmul.f32 %v1524, %v2364
          %v2389 = vrot.slane %v2374, 7
          %v2390 = vsel %vm1268, %v2389, %v2373
          %v2391 = vrot.slane %v2375, 6
          %v2392 = vsel %vm1271, %v2391, %v2390
          %v2393 = vrot.slane %v2376, 5
          %v2394 = vsel %vm1274, %v2393, %v2392
          %v2395 = vrot.slane %v2377, 4
          %v2396 = vsel %vm1277, %v2395, %v2394
          %v2397 = vrot.slane %v2378, 3
          %v2398 = vsel %vm1280, %v2397, %v2396
          %v2399 = vrot.slane %v2379, 2
          %v2400 = vsel %vm1283, %v2399, %v2398
          %v2401 = vrot.slane %v2380, 1
          %v2402 = vsel %vm1286, %v2401, %v2400
          %2404 = vst.msk [vmem:[#allocation3] sm:$0xff] %vm772, %v2402
          %v2405 = vpack.c.bf16 %v2318, %v2318
          %vm2406 = vcmask 781312
          %2407 = vst.msk [vmem:[#allocation2] sm:$0xf] %vm2406, %v2405
          %2408 = vst.msk [vmem:[#allocation5] sm:$0xff] %vm2352, -1e+30
          %2409 = vst.msk [vmem:[#allocation6] sm:$0xff] %vm2352, 0.0
        $region141: #{step.1} parent=120 // pred_fallthru
          _
        %v2410 = vld [vmem:[#allocation2] sm:$0xf]
        %v2411 = vld [vmem:[%s703] sm:$0xf]
        %v2412 = vld [vmem:[%s703 + $0x4] sm:$0xf]
        %v2413 = vld [vmem:[%s703 + $0x8] sm:$0xf]
        %v2414 = vld [vmem:[%s703 + $0xc] sm:$0xf]
        %v2415 = vld [vmem:[%s703 + $0x10] sm:$0xf]
        %v2416 = vld [vmem:[%s703 + $0x14] sm:$0xf]
        %v2417 = vld [vmem:[%s703 + $0x18] sm:$0xf]
        %v2418 = vld [vmem:[%s703 + $0x1c] sm:$0xf]
        %v2419 = vld [vmem:[%s703 + $0x20] sm:$0xf]
        %v2420 = vld [vmem:[%s703 + $0x24] sm:$0xf]
        %v2421 = vld [vmem:[%s703 + $0x28] sm:$0xf]
        %v2422 = vld [vmem:[%s703 + $0x2c] sm:$0xf]
        %v2423 = vld [vmem:[%s758] sm:$0x1]
        %v2425 = vperm.slane %v2423, 0
        %v2439 = vunpack.c.l.b16 %v2411
        %v2440 = vunpack.c.l.b16 %v2412
        %v2441 = vunpack.c.l.b16 %v2413
        %v2442 = vunpack.c.l.b16 %v2414
        %v2443 = vunpack.c.l.b16 %v2415
        %v2444 = vunpack.c.l.b16 %v2416
        %v2445 = vunpack.c.l.b16 %v2417
        %v2446 = vunpack.c.l.b16 %v2418
        %v2447 = vunpack.c.l.b16 %v2419
        %v2448 = vunpack.c.l.b16 %v2420
        %v2449 = vunpack.c.l.b16 %v2421
        %v2450 = vunpack.c.l.b16 %v2422
        %v2451 = vpack.c.b16 %v2440, %v2439
        %v2452 = vpack.c.b16 %v2442, %v2441
        %v2453 = vpack.c.b16 %v2444, %v2443
        %v2454 = vpack.c.b16 %v2446, %v2445
        %v2455 = vpack.c.b16 %v2448, %v2447
        %v2456 = vpack.c.b16 %v2450, %v2449
        %vm2463 = vcmask 785408
        %v2465 = vsel %vm2463, %v2410, 0
        %2467 = vmatpush.bf16.msra.mxu0 0
        %2468 = vmatpush.bf16.msra.mxu0 0
        %2469 = vmatpush.bf16.msra.mxu0 %v2456
        %2470 = vmatpush.bf16.msra.mxu0 %v2455
        %2471 = vmatpush.bf16.msra.mxu0 %v2454
        %2472 = vmatpush.bf16.msra.mxu0 %v2453
        %2473 = vmatpush.bf16.msra.mxu0 %v2452
        %2474 = vmatpush.bf16.msra.mxu0 %v2451
        %2475 = vmatmul.bf16.gmra.mxu0 %v2465
        %v2476 = vpop.f32.mrf.mxu0
        %v2477 = vadd.f32 %v2425, %v2476
        %v2478 = vpop.f32.mrf.mxu0
        %2479 = vdwg.mxu0
        %2480 = vmax.xlane.f32.xlu0 %v2477
        %v2481 = vpop.xlane.xlu0 %2480
        %v2482 = vsub.f32 %v2477, %v2481
        %v2483 = vmul.f32 %v2482, 1.442695
        %v2484 = vpow.pop %v2483
        %v2485 = vld [vmem:[#allocation5] sm:$0xff]
        %v2486 = vmax.f32 %v2485, %v2481
        %v2487 = vld [vmem:[#allocation6] sm:$0xff]
        %v2488 = vsub.f32 %v2485, %v2486
        %v2489 = vmul.f32 %v2488, 1.442695
        %v2490 = vpow.pop %v2489
        %v2491 = vmul.f32 %v2487, %v2490
        %2492 = vadd.xlane.f32.xlu0 %v2484
        %v2493 = vpop.xlane.xlu0 %2492
        %v2494 = vsub.f32 %v2481, %v2486
        %v2495 = vmul.f32 %v2494, 1.442695
        %v2496 = vpow.pop %v2495
        %v2497 = vmul.f32 %v2493, %v2496
        %v2498 = vadd.f32 %v2491, %v2497
        %vm2499 = vcmask 7168
        %2500 = vst.msk [vmem:[#allocation6] sm:$0xff] %vm2499, %v2498
        %2501 = vst.msk [vmem:[#allocation5] sm:$0xff] %vm2499, %v2486
        %s2502 = smul.u32 %s38, 8
        %s2503 = scalar_lea.vmem [#allocation7], %s2502
        %2504 = vst.msk [vmem:[%s2503] sm:$0xff] %vm2499, %v2481
        %s2505 = smul.u32 %s38, 128
        %s2506 = sshra.s32 %s2505, 7
        %s2507 = sand.u32 %s2505, 127
        %s2508 = smul.addr %s2506, 8
        %s2509 = scalar_lea.vmem %s17, %s2508
        %2510 = vst [vmem:[%s2509] sm:$0xff] %v2484
        %v2511 = vlaneseq
        %v2512 = vand.u32 %v2511, 127
        %v2513 = vstv %s2505
        %v2514 = vadd.s32 %v2512, %v2513
        %v2515 = vld [vmem:[%s8] sm:$0xff]
        %v2516 = vld [vmem:[#allocation3] sm:$0xff]
        %2517 = vset.pattern.permute.xlu0 0
        %2518 = vperm.xlu0 %2517, %v2515
        %v2519 = vpop.permute.xlu0 %2518
        %vm2520 = vcmp.eq.s32.totalorder %v2514, %v2519
        %2522 = vset.pattern.permute.xlu0 0
        %2523 = vperm.xlu0 %2522, %v2516
        %v2524 = vpop.permute.xlu0 %2523
        %v2526 = vsel %vm2520, %v2524, 0.0
        %v2527 = vadd.f32 %v2526, 0.0
        %2528 = vset.pattern.permute.xlu0 1
        %2529 = vperm.xlu0 %2528, %v2515
        %v2530 = vpop.permute.xlu0 %2529
        %vm2531 = vcmp.eq.s32.totalorder %v2514, %v2530
        %2532 = vset.pattern.permute.xlu0 1
        %2533 = vperm.xlu0 %2532, %v2516
        %v2534 = vpop.permute.xlu0 %2533
        %v2536 = vsel %vm2531, %v2534, 0.0
        %v2537 = vadd.f32 %v2527, %v2536
        %2538 = vset.pattern.permute.xlu0 2
        %2539 = vperm.xlu0 %2538, %v2515
        %v2540 = vpop.permute.xlu0 %2539
        %vm2541 = vcmp.eq.s32.totalorder %v2514, %v2540
        %2542 = vset.pattern.permute.xlu0 2
        %2543 = vperm.xlu0 %2542, %v2516
        %v2544 = vpop.permute.xlu0 %2543
        %v2546 = vsel %vm2541, %v2544, 0.0
        %v2547 = vadd.f32 %v2537, %v2546
        %2548 = vset.pattern.permute.xlu0 3
        %2549 = vperm.xlu0 %2548, %v2515
        %v2550 = vpop.permute.xlu0 %2549
        %vm2551 = vcmp.eq.s32.totalorder %v2514, %v2550
        %2552 = vset.pattern.permute.xlu0 3
        %2553 = vperm.xlu0 %2552, %v2516
        %v2554 = vpop.permute.xlu0 %2553
        %v2556 = vsel %vm2551, %v2554, 0.0
        %v2557 = vadd.f32 %v2547, %v2556
        %2558 = vset.pattern.permute.xlu0 4
        %2559 = vperm.xlu0 %2558, %v2515
        %v2560 = vpop.permute.xlu0 %2559
        %vm2561 = vcmp.eq.s32.totalorder %v2514, %v2560
        %2562 = vset.pattern.permute.xlu0 4
        %2563 = vperm.xlu0 %2562, %v2516
        %v2564 = vpop.permute.xlu0 %2563
        %v2566 = vsel %vm2561, %v2564, 0.0
        %v2567 = vadd.f32 %v2557, %v2566
        %2568 = vset.pattern.permute.xlu0 5
        %2569 = vperm.xlu0 %2568, %v2515
        %v2570 = vpop.permute.xlu0 %2569
        %vm2571 = vcmp.eq.s32.totalorder %v2514, %v2570
        %2572 = vset.pattern.permute.xlu0 5
        %2573 = vperm.xlu0 %2572, %v2516
        %v2574 = vpop.permute.xlu0 %2573
        %v2576 = vsel %vm2571, %v2574, 0.0
        %v2577 = vadd.f32 %v2567, %v2576
        %2578 = vset.pattern.permute.xlu0 6
        %2579 = vperm.xlu0 %2578, %v2515
        %v2580 = vpop.permute.xlu0 %2579
        %vm2581 = vcmp.eq.s32.totalorder %v2514, %v2580
        %2582 = vset.pattern.permute.xlu0 6
        %2583 = vperm.xlu0 %2582, %v2516
        %v2584 = vpop.permute.xlu0 %2583
        %v2586 = vsel %vm2581, %v2584, 0.0
        %v2587 = vadd.f32 %v2577, %v2586
        %2588 = vset.pattern.permute.xlu0 7
        %2589 = vperm.xlu0 %2588, %v2515
        %v2590 = vpop.permute.xlu0 %2589
        %vm2591 = vcmp.eq.s32.totalorder %v2514, %v2590
        %2592 = vset.pattern.permute.xlu0 7
        %2593 = vperm.xlu0 %2592, %v2516
        %v2594 = vpop.permute.xlu0 %2593
        %v2596 = vsel %vm2591, %v2594, 0.0
        %v2597 = vadd.f32 %v2587, %v2596
        %s2598 = scalar_lea.vmem [#allocation8], %s2502
        %2599 = vst [vmem:[%s2598] sm:$0xff] %v2597
        %p2600 = scmp.eq.s32.totalorder %s38, 1
        // Predicated region
        $region142: #{step.1} parent=120 // pred_check
          %p2601 = pneg %p2600
        $region143: #{step.1} parent=120 // pred_check_branch
          %2603 = sbr.rel (%p2601) target = $region145
        $region144: #{step.1} parent=120 // pred_region
          %v2604 = vld [vmem:[#allocation5] sm:$0xff]
          %v2605 = vld [vmem:[#allocation4] sm:$0xff]
          %v2606 = vsub.f32 1.0, %v2605
          %v2607 = vld [vmem:[#allocation6] sm:$0xff]
          %v2608 = vrcp.pop %v2607
          %v2609 = vmul.f32 %v2607, %v2608
          %v2610 = vsub.f32 1.0, %v2609
          %v2611 = vmul.f32 %v2608, %v2610
          %v2612 = vadd.f32 %v2608, %v2611
          %vm2613 = vweird.f32 %v2607
          %vm2614 = vweird.f32 %v2608
          %vm2615 = vmor %vm2613, %vm2614
          %v2616 = vsel %vm2615, %v2608, %v2612
          %v2617 = vand.u32 2147483647, %v2607
          %vm2618 = vcmp.eq.f32.partialorder %v2617, 8.507059e+37
          %v2619 = vand.u32 %v2607, 2147483648
          %v2620 = vor.u32 1.1754944e-38, %v2619
          %v2621 = vsel %vm2618, %v2620, %v2616
          %v2622 = vmul.f32 %v2606, %v2621
          %v2623 = vld [vmem:[#allocation7] sm:$0xff]
          %v2624 = vsub.f32 %v2623, %v2604
          %v2625 = vmul.f32 %v2624, 1.442695
          %v2626 = vpow.pop %v2625
          %v2627 = vmul.f32 %v2626, %v2622
          %v2628 = vld [vmem:[%s17] sm:$0xff]
          %2630 = vset.pattern.permute.xlu0 0
          %2631 = vperm.xlu0 %2630, %v2627
          %v2632 = vpop.permute.xlu0 %2631
          %v2634 = vmul.f32 %v2628, %v2632
          %v2635 = vld [vmem:[#allocation8] sm:$0xff]
          %v2636 = vadd.f32 %v2634, %v2635
          %2637 = vst [vmem:[%s17] sm:$0xff] %v2636
          %s2638 = scalar_lea.vmem [#allocation7], 8
          %v2639 = vld [vmem:[%s2638] sm:$0xff]
          %v2640 = vsub.f32 %v2639, %v2604
          %v2641 = vmul.f32 %v2640, 1.442695
          %v2642 = vpow.pop %v2641
          %v2643 = vmul.f32 %v2642, %v2622
          %v2644 = vld [vmem:[%s17 + $0x8] sm:$0xff]
          %2646 = vset.pattern.permute.xlu0 0
          %2647 = vperm.xlu0 %2646, %v2643
          %v2648 = vpop.permute.xlu0 %2647
          %v2650 = vmul.f32 %v2644, %v2648
          %s2651 = scalar_lea.vmem [#allocation8], 8
          %v2652 = vld [vmem:[%s2651] sm:$0xff]
          %v2653 = vadd.f32 %v2650, %v2652
          %2654 = vst [vmem:[%s17 + $0x8] sm:$0xff] %v2653
        $region145: #{step.1} parent=120 // pred_fallthru
          _
        // Predicated region
        $region146: #{step.1} parent=120 // pred_check
          %p2655 = pneg %p397
        $region147: #{step.1} parent=120 // pred_check_branch
          %2657 = sbr.rel (%p2655) target = $region149
        $region148: #{step.1} parent=120 // pred_region
          _
        $region149: #{step.1} parent=120 // pred_fallthru
          _
        // Predicated region
        $region150: #{step.1} parent=120 // pred_check
          %p2658 = pneg %p418
        $region151: #{step.1} parent=120 // pred_check_branch
          %2660 = sbr.rel (%p2658) target = $region153
        $region152: #{step.1} parent=120 // pred_region
          _
        $region153: #{step.1} parent=120 // pred_fallthru
          _
        // Predicated region
        $region154: #{step.1} parent=120 // pred_check
          %p2661 = pneg %p439
        $region155: #{step.1} parent=120 // pred_check_branch
          %2663 = sbr.rel (%p2661) target = $region157
        $region156: #{step.1} parent=120 // pred_region
          _
        $region157: #{step.1} parent=120 // pred_fallthru
          _
        // Predicated region
        $region158: #{step.1} parent=120 // pred_check
          %p2664 = pneg %p460
        $region159: #{step.1} parent=120 // pred_check_branch
          %2666 = sbr.rel (%p2664) target = $region161
        $region160: #{step.1} parent=120 // pred_region
          _
        $region161: #{step.1} parent=120 // pred_fallthru
          _
        // Predicated region
        $region162: #{step.1} parent=120 // pred_check
          %p2667 = pneg %p481
        $region163: #{step.1} parent=120 // pred_check_branch
          %2669 = sbr.rel (%p2667) target = $region165
        $region164: #{step.1} parent=120 // pred_region
          _
        $region165: #{step.1} parent=120 // pred_fallthru
          _
        // Predicated region
        $region166: #{step.1} parent=120 // pred_check
          %p2670 = pneg %p397
        $region167: #{step.1} parent=120 // pred_check_branch
          %2672 = sbr.rel (%p2670) target = $region169
        $region168: #{step.1} parent=120 // pred_region
          _
        $region169: #{step.1} parent=120 // pred_fallthru
          _
        // Predicated region
        $region170: #{step.1} parent=120 // pred_check
          %p2673 = pneg %p418
        $region171: #{step.1} parent=120 // pred_check_branch
          %2675 = sbr.rel (%p2673) target = $region173
        $region172: #{step.1} parent=120 // pred_region
          _
        $region173: #{step.1} parent=120 // pred_fallthru
          _
        // Predicated region
        $region174: #{step.1} parent=120 // pred_check
          %p2676 = pneg %p439
        $region175: #{step.1} parent=120 // pred_check_branch
          %2678 = sbr.rel (%p2676) target = $region177
        $region176: #{step.1} parent=120 // pred_region
          _
        $region177: #{step.1} parent=120 // pred_fallthru
          _
        // Predicated region
        $region178: #{step.1} parent=120 // pred_check
          %p2679 = pneg %p460
        $region179: #{step.1} parent=120 // pred_check_branch
          %2681 = sbr.rel (%p2679) target = $region181
        $region180: #{step.1} parent=120 // pred_region
          _
        $region181: #{step.1} parent=120 // pred_fallthru
          _
        // Predicated region
        $region182: #{step.1} parent=120 // pred_check
          %p2682 = pneg %p481
        $region183: #{step.1} parent=120 // pred_check_branch
          %2684 = sbr.rel (%p2682) target = $region185
        $region184: #{step.1} parent=120 // pred_region
          _
        $region185: #{step.1} parent=120 // pred_fallthru
          _
      $region121: #{step.1} parent=5 // pred_fallthru
        _
      %p2685 = scmp.le.s32.totalorder 2, %s33
      // Predicated region
      $region186: #{step.1} parent=5 // pred_check
        %p2686 = pneg %p2685
      $region187: #{step.1} parent=5 // pred_check_branch
        %2688 = sbr.rel (%p2686) target = $region189
      $region188: #{step.1} parent=5 // pred_region
        %s2689 = ssub.s32 %s33, 2
      $region189: #{step.1} parent=5 // pred_fallthru
        _
    $region6: #{step.1} parent=1 // loop_footer
      %s37 = sadd.s32 1, %s33
    $region7: #{step.1} parent=1 // loop_footer_branch
      %32 = sbr.rel target = $region3
    $region8: #{step.1} parent=1 // loop_exit
      _
    %2690 = vsyncpa [#allocation13], 1
    %s2691 = scalar_lea.sflag [#allocation13], 1
    %2692 = vsyncpa %s2691, 1
    %2693 = vsyncpa [#allocation15], 1

</llo_original>
